<compile_context>
chip_gen: v7x
topology: tpu7x:2x2x1
jax: 0.10.0
libtpu: 0.0.40
codegen_flags: <defaults>
</compile_context>

<pallas_src>
import numpy as np
import jax
import jax.numpy as jnp
from jax.experimental import pallas as pl
from jax.experimental.pallas import tpu as pltpu

# ---- model hyper-parameters (small, consistent with the module __init__) ----
B = 2             # batch
T = 8             # decoder length
S = 16            # encoder length
D_MODEL = 32      # d_model
N_HEAD = 4        # n_head
DIM_PER_HEAD = 8  # dim_per_head (N_HEAD * DIM_PER_HEAD == D_MODEL here)
HD = N_HEAD * DIM_PER_HEAD
D_INNER = 64      # d_inner_hid
LN_EPS = 1e-5
NEG_INF = -1e18
SCALE = 1.0 / float(np.sqrt(DIM_PER_HEAD))

# ---- lane-dense output slab layout (single (SLAB_ROWS, 128) f32 output) -----
ROWS_A = B * T                 # rows holding out / self-K / self-V / attn-w
ROWS_B = B * S                 # rows holding enc-K / enc-V
SLAB_ROWS = ROWS_A + ROWS_B    # 48
SLAB_LANES = 128
OUT_C0 = 0                     # cols [0, D)           : layer output
SK_C0 = D_MODEL                # cols [D, D+HD)        : self-attn K cache
SV_C0 = D_MODEL + HD           # cols [D+HD, D+2HD)    : self-attn V cache
AW_C0 = D_MODEL + 2 * HD       # cols [D+2HD, ..+S)    : head-0 cross-attn weights
EK_C0 = 0                      # row group B, cols [0, HD)    : enc-attn K cache
EV_C0 = HD                     # row group B, cols [HD, 2HD)  : enc-attn V cache
assert AW_C0 + S <= SLAB_LANES and 2 * HD <= SLAB_LANES


# ----------------------------- Pallas kernel --------------------------------
def decoder_layer_kernel(
    # data
    dec_ref, enc_ref, smask_ref, cmask_ref,
    # pre-packed parameters (packed ONCE at init, not per call)
    ln_ref,            # (6, D)      [ln1_g, ln1_b, ln2_g, ln2_b, ln3_g, ln3_b]
    attn_wqkv_ref,     # (2, D, 3HD) [self, ctx]
    attn_bqkv_ref,     # (2, 3HD)
    attn_wo_ref,       # (2, HD, D)
    attn_bo_ref,       # (2, D)
    f_w1_ref, f_b1_ref, f_w2_ref, f_b2_ref,
    # single lane-dense output slab
    out_ref,           # (SLAB_ROWS, 128) f32
):
    # zero the (small) unused pad regions of the slab, then overwrite.
    out_ref[...] = jnp.zeros((SLAB_ROWS, SLAB_LANES), jnp.float32)

    # token-flattened 2D views: MXU/VPU friendly
    x2 = dec_ref[...].reshape(B * T, D_MODEL)     # (B*T, D)
    c2 = enc_ref[...].reshape(B * S, D_MODEL)     # (B*S, D)

    # additive mask biases computed once, kept in f32 (1.0 == masked)
    sbias = jnp.where(smask_ref[...] > 0, NEG_INF, 0.0)   # (B, T, T)
    cbias = jnp.where(cmask_ref[...] > 0, NEG_INF, 0.0)   # (B, T, S)

    def layer_norm(h, g, b):
        mu = jnp.mean(h, axis=-1, keepdims=True)
        var = jnp.mean(jnp.square(h - mu), axis=-1, keepdims=True)
        return (h - mu) * jax.lax.rsqrt(var + LN_EPS) * g + b

    def mha(q2, k2, v2, bias, wo, bo, b, tq, tk):
        # q2: (b*tq, HD); k2/v2: (b*tk, HD); bias: (b, tq, tk) f32.
        # Static per-head loop: no head-split concats, no bias replication;
        # the output projection is accumulated per head from tile-aligned
        # 8-row slices of wo -> no merge-heads concat either.
        q3 = (q2 * SCALE).reshape(b, tq, HD)   # major-dim reshape: free
        k3 = k2.reshape(b, tk, HD)
        v3 = v2.reshape(b, tk, HD)
        acc = None
        attn0 = None
        for h in range(N_HEAD):
            lo, hi = h * DIM_PER_HEAD, (h + 1) * DIM_PER_HEAD
            qh = q3[:, :, lo:hi]               # (b, tq, Dh)
            kh = k3[:, :, lo:hi]               # (b, tk, Dh)
            vh = v3[:, :, lo:hi]
            s = jnp.einsum('bqd,bkd->bqk', qh, kh,
                           preferred_element_type=jnp.float32) + bias
            m = jnp.max(s, axis=-1, keepdims=True)
            e = jnp.exp(s - m)
            p = e * pl.reciprocal(jnp.sum(e, axis=-1, keepdims=True), approx=True)
            if h == 0:
                attn0 = p                      # head-0 attention weights
            ctx_h = jnp.einsum('bqk,bkd->bqd', p, vh,
                               preferred_element_type=jnp.float32)   # (b, tq, Dh)
            contrib = jnp.dot(ctx_h.reshape(b * tq, DIM_PER_HEAD), wo[lo:hi, :],
                              preferred_element_type=jnp.float32)    # (b*tq, D)
            acc = contrib if acc is None else acc + contrib
        return acc + bo, attn0

    # --- self-attention block: LN -> MHA -> residual (dropout = identity) ---
    h1 = layer_norm(x2, ln_ref[0], ln_ref[1])
    qkv = jnp.dot(h1, attn_wqkv_ref[0],
                  preferred_element_type=jnp.float32) + attn_bqkv_ref[0]
    q2, k2, v2 = qkv[:, :HD], qkv[:, HD:2 * HD], qkv[:, 2 * HD:]
    out_ref[0:ROWS_A, SK_C0:SK_C0 + HD] = k2     # lane-dense cache writeback
    out_ref[0:ROWS_A, SV_C0:SV_C0 + HD] = v2
    sa2, _ = mha(q2, k2, v2, sbias, attn_wo_ref[0], attn_bo_ref[0], B, T, T)
    query2 = x2 + sa2

    # --- encoder-attention block: LN(query) -> MHA(K=V=enc) -> residual ---
    h2 = layer_norm(query2, ln_ref[2], ln_ref[3])
    wqkv_c = attn_wqkv_ref[1]
    bqkv_c = attn_bqkv_ref[1]
    qc = jnp.dot(h2, wqkv_c[:, :HD],
                 preferred_element_type=jnp.float32) + bqkv_c[:HD]
    kvc = jnp.dot(c2, wqkv_c[:, HD:],
                  preferred_element_type=jnp.float32) + bqkv_c[HD:]
    kc, vc = kvc[:, :HD], kvc[:, HD:]
    out_ref[ROWS_A:ROWS_A + ROWS_B, EK_C0:EK_C0 + HD] = kc
    out_ref[ROWS_A:ROWS_A + ROWS_B, EV_C0:EV_C0 + HD] = vc
    ca2, attn0 = mha(qc, kc, vc, cbias, attn_wo_ref[1], attn_bo_ref[1], B, T, S)
    attn_values2 = query2 + ca2
    out_ref[0:ROWS_A, AW_C0:AW_C0 + S] = attn0.reshape(B * T, S)

    # --- position-wise FFN block: LN -> W1 -> ReLU -> W2 -> residual ---
    h3 = layer_norm(attn_values2, ln_ref[4], ln_ref[5])
    ff = jnp.dot(h3, f_w1_ref[...],
                 preferred_element_type=jnp.float32) + f_b1_ref[0]
    ff = jnp.maximum(ff, 0.0)
    ff = jnp.dot(ff, f_w2_ref[...],
                 preferred_element_type=jnp.float32) + f_b2_ref[0]
    out_ref[0:ROWS_A, OUT_C0:OUT_C0 + D_MODEL] = attn_values2 + ff


# --------------------------- one-time param packing --------------------------
def pack_params(params):
    """Pack 26 parameter tensors into 9 fused operands. Call ONCE at init."""
    (ln1_g, ln1_b,
     s_wq, s_bq, s_wk, s_bk, s_wv, s_bv, s_wo, s_bo,
     ln2_g, ln2_b,
     c_wq, c_bq, c_wk, c_bk, c_wv, c_bv, c_wo, c_bo,
     ln3_g, ln3_b,
     f_w1, f_b1, f_w2, f_b2) = params

    ln_gb = jnp.concatenate([ln1_g, ln1_b, ln2_g, ln2_b, ln3_g, ln3_b], axis=0)
    attn_wqkv = jnp.stack([jnp.concatenate([s_wq, s_wk, s_wv], axis=1),
                           jnp.concatenate([c_wq, c_wk, c_wv], axis=1)], axis=0)
    attn_bqkv = jnp.concatenate([jnp.concatenate([s_bq, s_bk, s_bv], axis=1),
                                 jnp.concatenate([c_bq, c_bk, c_bv], axis=1)],
                                axis=0)
    attn_wo = jnp.stack([s_wo, c_wo], axis=0)
    attn_bo = jnp.concatenate([s_bo, c_bo], axis=0)
    return (ln_gb, attn_wqkv, attn_bqkv, attn_wo, attn_bo,
            f_w1, f_b1, f_w2, f_b2)


# ------------------------------- wrapper -------------------------------------
def decoder_layer(dec_input, enc_output, slf_mask, ctx_mask, packed_params):
    """Forward pass. `packed_params` must come from pack_params (done at init)."""
    operands = (dec_input, enc_output, slf_mask, ctx_mask, *packed_params)

    slab = pl.pallas_call(
        decoder_layer_kernel,
        out_shape=jax.ShapeDtypeStruct((SLAB_ROWS, SLAB_LANES), jnp.float32),
        in_specs=[pl.BlockSpec(memory_space=pltpu.MemorySpace.VMEM)
                  for _ in operands],
        out_specs=pl.BlockSpec(memory_space=pltpu.MemorySpace.VMEM),
    )(*operands)

    # Split the lane-dense slab back into the module's outputs.  Cache
    # relayout to (B, H, len, dim_per_head) is one transpose per KV pair;
    # under jit these slices/reshapes/transposes fuse into the epilogue.
    out = slab[:ROWS_A, OUT_C0:OUT_C0 + D_MODEL].reshape(B, T, D_MODEL)
    attnw = slab[:ROWS_A, AW_C0:AW_C0 + S].reshape(B, T, S)

    skv = slab[:ROWS_A, SK_C0:SK_C0 + 2 * HD]
    skv = skv.reshape(B, T, 2, N_HEAD, DIM_PER_HEAD).transpose(2, 0, 3, 1, 4)
    ekv = slab[ROWS_A:ROWS_A + ROWS_B, EK_C0:EK_C0 + 2 * HD]
    ekv = ekv.reshape(B, S, 2, N_HEAD, DIM_PER_HEAD).transpose(2, 0, 3, 1, 4)

    return out, attnw, skv[0], skv[1], ekv[0], ekv[1]


# --------------------------- parameter init ----------------------------------
def init_params(key):
    def linear(k, din, dout):
        bound = 1.0 / np.sqrt(din)
        kw, kb = jax.random.split(k)
        w = jax.random.uniform(kw, (din, dout), jnp.float32, -bound, bound)
        b = jax.random.uniform(kb, (1, dout), jnp.float32, -bound, bound)
        return w, b

    keys = jax.random.split(key, 10)

    ln1_g = jnp.ones((1, D_MODEL), jnp.float32); ln1_b = jnp.zeros((1, D_MODEL), jnp.float32)
    s_wq, s_bq = linear(keys[0], D_MODEL, HD)
    s_wk, s_bk = linear(keys[1], D_MODEL, HD)
    s_wv, s_bv = linear(keys[2], D_MODEL, HD)
    s_wo, s_bo = linear(keys[3], HD, D_MODEL)

    ln2_g = jnp.ones((1, D_MODEL), jnp.float32); ln2_b = jnp.zeros((1, D_MODEL), jnp.float32)
    c_wq, c_bq = linear(keys[4], D_MODEL, HD)
    c_wk, c_bk = linear(keys[5], D_MODEL, HD)
    c_wv, c_bv = linear(keys[6], D_MODEL, HD)
    c_wo, c_bo = linear(keys[7], HD, D_MODEL)

    ln3_g = jnp.ones((1, D_MODEL), jnp.float32); ln3_b = jnp.zeros((1, D_MODEL), jnp.float32)
    f_w1, f_b1 = linear(keys[8], D_MODEL, D_INNER)
    f_w2, f_b2 = linear(keys[9], D_INNER, D_MODEL)

    return (ln1_g, ln1_b,
            s_wq, s_bq, s_wk, s_bk, s_wv, s_bv, s_wo, s_bo,
            ln2_g, ln2_b,
            c_wq, c_bq, c_wk, c_bk, c_wv, c_bv, c_wo, c_bo,
            ln3_g, ln3_b,
            f_w1, f_b1, f_w2, f_b2)


# --------------------------- pure-JAX reference -------------------------------
def reference(dec_input, enc_output, slf_mask, ctx_mask, params):
    (ln1_g, ln1_b,
     s_wq, s_bq, s_wk, s_bk, s_wv, s_bv, s_wo, s_bo,
     ln2_g, ln2_b,
     c_wq, c_bq, c_wk, c_bk, c_wv, c_bv, c_wo, c_bo,
     ln3_g, ln3_b,
     f_w1, f_b1, f_w2, f_b2) = params

    def ln(x, g, b):
        mu = x.mean(-1, keepdims=True)
        var = ((x - mu) ** 2).mean(-1, keepdims=True)
        return (x - mu) / jnp.sqrt(var + LN_EPS) * g[0] + b[0]

    def mha(q_in, kv_in, mask, wq, bq, wk, bk, wv, bv, wo, bo):
        Bq, Tq, _ = q_in.shape
        Tk = kv_in.shape[1]
        q = (q_in @ wq + bq[0]).reshape(Bq, Tq, N_HEAD, DIM_PER_HEAD).transpose(0, 2, 1, 3)
        k = (kv_in @ wk + bk[0]).reshape(Bq, Tk, N_HEAD, DIM_PER_HEAD).transpose(0, 2, 1, 3)
        v = (kv_in @ wv + bv[0]).reshape(Bq, Tk, N_HEAD, DIM_PER_HEAD).transpose(0, 2, 1, 3)
        scores = jnp.einsum('bhqd,bhkd->bhqk', q / np.sqrt(DIM_PER_HEAD), k)
        scores = jnp.where(mask[:, None] > 0, NEG_INF, scores)
        attn = jax.nn.softmax(scores, -1)
        ctxh = jnp.einsum('bhqk,bhkd->bhqd', attn, v)
        ctx_flat = ctxh.transpose(0, 2, 1, 3).reshape(Bq, Tq, N_HEAD * DIM_PER_HEAD)
        return ctx_flat @ wo + bo[0], attn[:, 0], k, v

    x = dec_input
    sa_out, _, sk, sv = mha(ln(x, ln1_g, ln1_b), ln(x, ln1_g, ln1_b), slf_mask,
                            s_wq, s_bq, s_wk, s_bk, s_wv, s_bv, s_wo, s_bo)
    query = x + sa_out
    ca_out, top_attn, ek, ev = mha(ln(query, ln2_g, ln2_b), enc_output, ctx_mask,
                                   c_wq, c_bq, c_wk, c_bk, c_wv, c_bv, c_wo, c_bo)
    attn_values = query + ca_out
    h3 = ln(attn_values, ln3_g, ln3_b)
    ff = jnp.maximum(h3 @ f_w1 + f_b1[0], 0.0) @ f_w2 + f_b2[0]
    return attn_values + ff, top_attn, sk, sv, ek, ev


# --------------------------------- main ---------------------------------------
if __name__ == "__main__":
    key = jax.random.PRNGKey(0)
    k_dec, k_enc, k_p = jax.random.split(key, 3)

    dec_input = jax.random.normal(k_dec, (B, T, D_MODEL), jnp.float32)
    enc_output = jax.random.normal(k_enc, (B, S, D_MODEL), jnp.float32)

    # causal self-attention mask (1.0 = masked)
    causal = (np.arange(T)[None, :] > np.arange(T)[:, None]).astype(np.float32)
    slf_attn_mask = jnp.broadcast_to(jnp.asarray(causal), (B, T, T))

    # cross-attention padding mask: batch 1 has 3 padded encoder positions
    cmask = np.zeros((B, T, S), np.float32)
    cmask[1, :, S - 3:] = 1.0
    dec_enc_attn_mask = jnp.asarray(cmask)

    params = init_params(k_p)
    packed = pack_params(params)          # hoisted: packed ONCE, outside forward

    fwd = jax.jit(decoder_layer)          # fuses slab split / cache relayout
    outs = fwd(dec_input, enc_output, slf_attn_mask, dec_enc_attn_mask, packed)
    outs = jax.block_until_ready(outs)

    refs = reference(dec_input, enc_output, slf_attn_mask,
                     dec_enc_attn_mask, params)
    # Kernel uses default MXU precision plus an approximate reciprocal in the
    # softmax -> 2e-2 tolerance against the f32 reference.
    for o, r in zip(outs, refs):
        np.testing.assert_allclose(np.asarray(o), np.asarray(r),
                                   rtol=2e-2, atol=2e-2)

    print("KERNEL_OK")
</pallas_src>

<mosaic_0001>
module attributes {stable_mosaic.version = 11 : i64} {
  func.func @decoder_layer_kernel(%arg0: memref<2x8x32xf32, #tpu.memory_space<vmem>>, %arg1: memref<2x16x32xf32, #tpu.memory_space<vmem>>, %arg2: memref<2x8x8xf32, #tpu.memory_space<vmem>>, %arg3: memref<2x8x16xf32, #tpu.memory_space<vmem>>, %arg4: memref<6x32xf32, #tpu.memory_space<vmem>>, %arg5: memref<2x32x96xf32, #tpu.memory_space<vmem>>, %arg6: memref<2x96xf32, #tpu.memory_space<vmem>>, %arg7: memref<2x32x32xf32, #tpu.memory_space<vmem>>, %arg8: memref<2x32xf32, #tpu.memory_space<vmem>>, %arg9: memref<32x64xf32, #tpu.memory_space<vmem>>, %arg10: memref<1x64xf32, #tpu.memory_space<vmem>>, %arg11: memref<64x32xf32, #tpu.memory_space<vmem>>, %arg12: memref<1x32xf32, #tpu.memory_space<vmem>>, %arg13: memref<48x128xf32, #tpu.memory_space<vmem>>) attributes {dimension_semantics = [], scalar_prefetch = 0 : i64, scratch_operands = 0 : i64, tpu.core_type = #tpu.core_type<tc>} {
    %cst = arith.constant 0.000000e+00 : f32
    %0 = vector.broadcast %cst : f32 to vector<48x128xf32>
    %c0 = arith.constant 0 : index
    %c0_0 = arith.constant 0 : index
    %1 = vector.load %arg13[%c0, %c0_0] : memref<48x128xf32, #tpu.memory_space<vmem>>, vector<48x128xf32>
    tpu.vector_store %arg13[%c0, %c0_0], %0 {strides = array<i32>} : memref<48x128xf32, #tpu.memory_space<vmem>>, vector<48x128xf32>,
    %c0_1 = arith.constant 0 : index
    %c0_2 = arith.constant 0 : index
    %c0_3 = arith.constant 0 : index
    %2 = vector.load %arg0[%c0_1, %c0_2, %c0_3] : memref<2x8x32xf32, #tpu.memory_space<vmem>>, vector<2x8x32xf32>
    %3 = vector.shape_cast %2 : vector<2x8x32xf32> to vector<16x32xf32>
    %c0_4 = arith.constant 0 : index
    %c0_5 = arith.constant 0 : index
    %c0_6 = arith.constant 0 : index
    %4 = vector.load %arg1[%c0_4, %c0_5, %c0_6] : memref<2x16x32xf32, #tpu.memory_space<vmem>>, vector<2x16x32xf32>
    %5 = vector.shape_cast %4 : vector<2x16x32xf32> to vector<32x32xf32>
    %c0_7 = arith.constant 0 : index
    %c0_8 = arith.constant 0 : index
    %c0_9 = arith.constant 0 : index
    %6 = vector.load %arg2[%c0_7, %c0_8, %c0_9] : memref<2x8x8xf32, #tpu.memory_space<vmem>>, vector<2x8x8xf32>
    %cst_10 = arith.constant 0.000000e+00 : f32
    %7 = vector.broadcast %cst_10 : f32 to vector<2x8x8xf32>
    %8 = arith.cmpf ogt, %6, %7 : vector<2x8x8xf32>
    %cst_11 = arith.constant -9.99999984E+17 : f32
    %cst_12 = arith.constant 0.000000e+00 : f32
    %9 = vector.broadcast %cst_11 : f32 to vector<2x8x8xf32>
    %10 = vector.broadcast %cst_12 : f32 to vector<2x8x8xf32>
    %11 = arith.select %8, %9, %10 : vector<2x8x8xi1>, vector<2x8x8xf32>
    %c0_13 = arith.constant 0 : index
    %c0_14 = arith.constant 0 : index
    %c0_15 = arith.constant 0 : index
    %12 = vector.load %arg3[%c0_13, %c0_14, %c0_15] : memref<2x8x16xf32, #tpu.memory_space<vmem>>, vector<2x8x16xf32>
    %cst_16 = arith.constant 0.000000e+00 : f32
    %13 = vector.broadcast %cst_16 : f32 to vector<2x8x16xf32>
    %14 = arith.cmpf ogt, %12, %13 : vector<2x8x16xf32>
    %cst_17 = arith.constant -9.99999984E+17 : f32
    %cst_18 = arith.constant 0.000000e+00 : f32
    %15 = vector.broadcast %cst_17 : f32 to vector<2x8x16xf32>
    %16 = vector.broadcast %cst_18 : f32 to vector<2x8x16xf32>
    %17 = arith.select %14, %15, %16 : vector<2x8x16xi1>, vector<2x8x16xf32>
    %c0_19 = arith.constant 0 : index
    %c0_20 = arith.constant 0 : index
    %18 = vector.load %arg4[%c0_19, %c0_20] : memref<6x32xf32, #tpu.memory_space<vmem>>, vector<1x32xf32>
    %19 = vector.shape_cast %18 : vector<1x32xf32> to vector<32xf32>
    %c1 = arith.constant 1 : index
    %c0_21 = arith.constant 0 : index
    %20 = vector.load %arg4[%c1, %c0_21] : memref<6x32xf32, #tpu.memory_space<vmem>>, vector<1x32xf32>
    %21 = vector.shape_cast %20 : vector<1x32xf32> to vector<32xf32>
    %cst_22 = arith.constant dense<0.000000e+00> : vector<16xf32>
    %22 = vector.multi_reduction <add>, %3, %cst_22 [1] : vector<16x32xf32> to vector<16xf32>
    %23 = vector.shape_cast %22 : vector<16xf32> to vector<16x1xf32>
    %cst_23 = arith.constant 3.200000e+01 : f32
    %24 = vector.broadcast %cst_23 : f32 to vector<16x1xf32>
    %25 = arith.divf %23, %24 : vector<16x1xf32>
    %26 = vector.broadcast %25 : vector<16x1xf32> to vector<16x32xf32>
    %27 = arith.subf %3, %26 : vector<16x32xf32>
    %28 = arith.mulf %27, %27 : vector<16x32xf32>
    %cst_24 = arith.constant dense<0.000000e+00> : vector<16xf32>
    %29 = vector.multi_reduction <add>, %28, %cst_24 [1] : vector<16x32xf32> to vector<16xf32>
    %30 = vector.shape_cast %29 : vector<16xf32> to vector<16x1xf32>
    %cst_25 = arith.constant 3.200000e+01 : f32
    %31 = vector.broadcast %cst_25 : f32 to vector<16x1xf32>
    %32 = arith.divf %30, %31 : vector<16x1xf32>
    %33 = vector.broadcast %25 : vector<16x1xf32> to vector<16x32xf32>
    %34 = arith.subf %3, %33 : vector<16x32xf32>
    %cst_26 = arith.constant 9.99999974E-6 : f32
    %35 = vector.broadcast %cst_26 : f32 to vector<16x1xf32>
    %36 = arith.addf %32, %35 : vector<16x1xf32>
    %37 = math.rsqrt %36 : vector<16x1xf32>
    %38 = vector.broadcast %37 : vector<16x1xf32> to vector<16x32xf32>
    %39 = arith.mulf %34, %38 : vector<16x32xf32>
    %40 = vector.shape_cast %19 : vector<32xf32> to vector<1x32xf32>
    %41 = vector.broadcast %40 : vector<1x32xf32> to vector<16x32xf32>
    %42 = arith.mulf %39, %41 : vector<16x32xf32>
    %43 = vector.shape_cast %21 : vector<32xf32> to vector<1x32xf32>
    %44 = vector.broadcast %43 : vector<1x32xf32> to vector<16x32xf32>
    %45 = arith.addf %42, %44 : vector<16x32xf32>
    %c0_27 = arith.constant 0 : index
    %c0_28 = arith.constant 0 : index
    %c0_29 = arith.constant 0 : index
    %46 = vector.load %arg5[%c0_27, %c0_28, %c0_29] : memref<2x32x96xf32, #tpu.memory_space<vmem>>, vector<1x32x96xf32>
    %47 = vector.shape_cast %46 : vector<1x32x96xf32> to vector<32x96xf32>
    %cst_30 = arith.constant dense<0.000000e+00> : vector<16x96xf32>
    %48 = tpu.matmul %45, %47, %cst_30 {dimension_numbers = #tpu.dot_dimension_numbers<[1], [0], [0], [1], [0, 0, 1, 1], [], []>} : vector<16x32xf32>, vector<32x96xf32>, vector<16x96xf32> -> vector<16x96xf32>
    %c0_31 = arith.constant 0 : index
    %c0_32 = arith.constant 0 : index
    %49 = vector.load %arg6[%c0_31, %c0_32] : memref<2x96xf32, #tpu.memory_space<vmem>>, vector<1x96xf32>
    %50 = vector.shape_cast %49 : vector<1x96xf32> to vector<96xf32>
    %51 = vector.shape_cast %50 : vector<96xf32> to vector<1x96xf32>
    %52 = vector.broadcast %51 : vector<1x96xf32> to vector<16x96xf32>
    %53 = arith.addf %48, %52 : vector<16x96xf32>
    %54 = vector.extract_strided_slice %53 {offsets = [0, 0], sizes = [16, 32], strides = [1, 1]} : vector<16x96xf32> to vector<16x32xf32>
    %55 = vector.extract_strided_slice %53 {offsets = [0, 32], sizes = [16, 32], strides = [1, 1]} : vector<16x96xf32> to vector<16x32xf32>
    %56 = vector.extract_strided_slice %53 {offsets = [0, 64], sizes = [16, 32], strides = [1, 1]} : vector<16x96xf32> to vector<16x32xf32>
    %c0_33 = arith.constant 0 : index
    %c32 = arith.constant 32 : index
    %57 = vector.load %arg13[%c0_33, %c32] : memref<48x128xf32, #tpu.memory_space<vmem>>, vector<16x32xf32>
    tpu.vector_store %arg13[%c0_33, %c32], %55 {strides = array<i32>} : memref<48x128xf32, #tpu.memory_space<vmem>>, vector<16x32xf32>,
    %c0_34 = arith.constant 0 : index
    %c64 = arith.constant 64 : index
    %58 = vector.load %arg13[%c0_34, %c64] : memref<48x128xf32, #tpu.memory_space<vmem>>, vector<16x32xf32>
    tpu.vector_store %arg13[%c0_34, %c64], %56 {strides = array<i32>} : memref<48x128xf32, #tpu.memory_space<vmem>>, vector<16x32xf32>,
    %c0_35 = arith.constant 0 : index
    %c0_36 = arith.constant 0 : index
    %c0_37 = arith.constant 0 : index
    %59 = vector.load %arg7[%c0_35, %c0_36, %c0_37] : memref<2x32x32xf32, #tpu.memory_space<vmem>>, vector<1x32x32xf32>
    %60 = vector.shape_cast %59 : vector<1x32x32xf32> to vector<32x32xf32>
    %c0_38 = arith.constant 0 : index
    %c0_39 = arith.constant 0 : index
    %61 = vector.load %arg8[%c0_38, %c0_39] : memref<2x32xf32, #tpu.memory_space<vmem>>, vector<1x32xf32>
    %62 = vector.shape_cast %61 : vector<1x32xf32> to vector<32xf32>
    %cst_40 = arith.constant 0.353553385 : f32
    %63 = vector.broadcast %cst_40 : f32 to vector<16x32xf32>
    %64 = arith.mulf %54, %63 : vector<16x32xf32>
    %65 = vector.shape_cast %64 : vector<16x32xf32> to vector<2x8x32xf32>
    %66 = vector.shape_cast %55 : vector<16x32xf32> to vector<2x8x32xf32>
    %67 = vector.shape_cast %56 : vector<16x32xf32> to vector<2x8x32xf32>
    %68 = vector.extract_strided_slice %65 {offsets = [0, 0, 0], sizes = [2, 8, 8], strides = [1, 1, 1]} : vector<2x8x32xf32> to vector<2x8x8xf32>
    %69 = vector.extract_strided_slice %66 {offsets = [0, 0, 0], sizes = [2, 8, 8], strides = [1, 1, 1]} : vector<2x8x32xf32> to vector<2x8x8xf32>
    %70 = vector.extract_strided_slice %67 {offsets = [0, 0, 0], sizes = [2, 8, 8], strides = [1, 1, 1]} : vector<2x8x32xf32> to vector<2x8x8xf32>
    "tpu.trace_start"() <{level = 10 : i32, message = "bqd,bkd->bqk"}> : () -> ()
    %cst_41 = arith.constant dense<0.000000e+00> : vector<2x8x8xf32>
    %71 = tpu.matmul %68, %69, %cst_41 {dimension_numbers = #tpu.dot_dimension_numbers<[2], [2], [1], [1], [0, 0, 0, 1, 1, 1], [0], [0]>} : vector<2x8x8xf32>, vector<2x8x8xf32>, vector<2x8x8xf32> -> vector<2x8x8xf32>
    "tpu.trace_stop"() : () -> ()
    %72 = arith.addf %71, %11 : vector<2x8x8xf32>
    %cst_42 = arith.constant dense<0xFF800000> : vector<2x8xf32>
    %73 = vector.multi_reduction <maximumf>, %72, %cst_42 [2] : vector<2x8x8xf32> to vector<2x8xf32>
    %74 = vector.shape_cast %73 : vector<2x8xf32> to vector<2x8x1xf32>
    %75 = vector.broadcast %74 : vector<2x8x1xf32> to vector<2x8x8xf32>
    %76 = arith.subf %72, %75 : vector<2x8x8xf32>
    %77 = math.exp %76 : vector<2x8x8xf32>
    %cst_43 = arith.constant dense<0.000000e+00> : vector<2x8xf32>
    %78 = vector.multi_reduction <add>, %77, %cst_43 [2] : vector<2x8x8xf32> to vector<2x8xf32>
    %79 = vector.shape_cast %78 : vector<2x8xf32> to vector<2x8x1xf32>
    %80 = tpu.reciprocal %79 {approx = true} : vector<2x8x1xf32> -> vector<2x8x1xf32>
    %81 = vector.broadcast %80 : vector<2x8x1xf32> to vector<2x8x8xf32>
    %82 = arith.mulf %77, %81 : vector<2x8x8xf32>
    "tpu.trace_start"() <{level = 10 : i32, message = "bqk,bkd->bqd"}> : () -> ()
    %cst_44 = arith.constant dense<0.000000e+00> : vector<2x8x8xf32>
    %83 = tpu.matmul %82, %70, %cst_44 {dimension_numbers = #tpu.dot_dimension_numbers<[2], [1], [1], [2], [0, 0, 0, 1, 1, 2], [0], [0]>} : vector<2x8x8xf32>, vector<2x8x8xf32>, vector<2x8x8xf32> -> vector<2x8x8xf32>
    "tpu.trace_stop"() : () -> ()
    %84 = vector.shape_cast %83 : vector<2x8x8xf32> to vector<16x8xf32>
    %85 = vector.extract_strided_slice %60 {offsets = [0, 0], sizes = [8, 32], strides = [1, 1]} : vector<32x32xf32> to vector<8x32xf32>
    %cst_45 = arith.constant dense<0.000000e+00> : vector<16x32xf32>
    %86 = tpu.matmul %84, %85, %cst_45 {dimension_numbers = #tpu.dot_dimension_numbers<[1], [0], [0], [1], [0, 0, 1, 1], [], []>} : vector<16x8xf32>, vector<8x32xf32>, vector<16x32xf32> -> vector<16x32xf32>
    %87 = vector.extract_strided_slice %65 {offsets = [0, 0, 8], sizes = [2, 8, 8], strides = [1, 1, 1]} : vector<2x8x32xf32> to vector<2x8x8xf32>
    %88 = vector.extract_strided_slice %66 {offsets = [0, 0, 8], sizes = [2, 8, 8], strides = [1, 1, 1]} : vector<2x8x32xf32> to vector<2x8x8xf32>
    %89 = vector.extract_strided_slice %67 {offsets = [0, 0, 8], sizes = [2, 8, 8], strides = [1, 1, 1]} : vector<2x8x32xf32> to vector<2x8x8xf32>
    "tpu.trace_start"() <{level = 10 : i32, message = "bqd,bkd->bqk"}> : () -> ()
    %cst_46 = arith.constant dense<0.000000e+00> : vector<2x8x8xf32>
    %90 = tpu.matmul %87, %88, %cst_46 {dimension_numbers = #tpu.dot_dimension_numbers<[2], [2], [1], [1], [0, 0, 0, 1, 1, 1], [0], [0]>} : vector<2x8x8xf32>, vector<2x8x8xf32>, vector<2x8x8xf32> -> vector<2x8x8xf32>
    "tpu.trace_stop"() : () -> ()
    %91 = arith.addf %90, %11 : vector<2x8x8xf32>
    %cst_47 = arith.constant dense<0xFF800000> : vector<2x8xf32>
    %92 = vector.multi_reduction <maximumf>, %91, %cst_47 [2] : vector<2x8x8xf32> to vector<2x8xf32>
    %93 = vector.shape_cast %92 : vector<2x8xf32> to vector<2x8x1xf32>
    %94 = vector.broadcast %93 : vector<2x8x1xf32> to vector<2x8x8xf32>
    %95 = arith.subf %91, %94 : vector<2x8x8xf32>
    %96 = math.exp %95 : vector<2x8x8xf32>
    %cst_48 = arith.constant dense<0.000000e+00> : vector<2x8xf32>
    %97 = vector.multi_reduction <add>, %96, %cst_48 [2] : vector<2x8x8xf32> to vector<2x8xf32>
    %98 = vector.shape_cast %97 : vector<2x8xf32> to vector<2x8x1xf32>
    %99 = tpu.reciprocal %98 {approx = true} : vector<2x8x1xf32> -> vector<2x8x1xf32>
    %100 = vector.broadcast %99 : vector<2x8x1xf32> to vector<2x8x8xf32>
    %101 = arith.mulf %96, %100 : vector<2x8x8xf32>
    "tpu.trace_start"() <{level = 10 : i32, message = "bqk,bkd->bqd"}> : () -> ()
    %cst_49 = arith.constant dense<0.000000e+00> : vector<2x8x8xf32>
    %102 = tpu.matmul %101, %89, %cst_49 {dimension_numbers = #tpu.dot_dimension_numbers<[2], [1], [1], [2], [0, 0, 0, 1, 1, 2], [0], [0]>} : vector<2x8x8xf32>, vector<2x8x8xf32>, vector<2x8x8xf32> -> vector<2x8x8xf32>
    "tpu.trace_stop"() : () -> ()
    %103 = vector.shape_cast %102 : vector<2x8x8xf32> to vector<16x8xf32>
    %104 = vector.extract_strided_slice %60 {offsets = [8, 0], sizes = [8, 32], strides = [1, 1]} : vector<32x32xf32> to vector<8x32xf32>
    %cst_50 = arith.constant dense<0.000000e+00> : vector<16x32xf32>
    %105 = tpu.matmul %103, %104, %cst_50 {dimension_numbers = #tpu.dot_dimension_numbers<[1], [0], [0], [1], [0, 0, 1, 1], [], []>} : vector<16x8xf32>, vector<8x32xf32>, vector<16x32xf32> -> vector<16x32xf32>
    %106 = arith.addf %86, %105 : vector<16x32xf32>
    %107 = vector.extract_strided_slice %65 {offsets = [0, 0, 16], sizes = [2, 8, 8], strides = [1, 1, 1]} : vector<2x8x32xf32> to vector<2x8x8xf32>
    %108 = vector.extract_strided_slice %66 {offsets = [0, 0, 16], sizes = [2, 8, 8], strides = [1, 1, 1]} : vector<2x8x32xf32> to vector<2x8x8xf32>
    %109 = vector.extract_strided_slice %67 {offsets = [0, 0, 16], sizes = [2, 8, 8], strides = [1, 1, 1]} : vector<2x8x32xf32> to vector<2x8x8xf32>
    "tpu.trace_start"() <{level = 10 : i32, message = "bqd,bkd->bqk"}> : () -> ()
    %cst_51 = arith.constant dense<0.000000e+00> : vector<2x8x8xf32>
    %110 = tpu.matmul %107, %108, %cst_51 {dimension_numbers = #tpu.dot_dimension_numbers<[2], [2], [1], [1], [0, 0, 0, 1, 1, 1], [0], [0]>} : vector<2x8x8xf32>, vector<2x8x8xf32>, vector<2x8x8xf32> -> vector<2x8x8xf32>
    "tpu.trace_stop"() : () -> ()
    %111 = arith.addf %110, %11 : vector<2x8x8xf32>
    %cst_52 = arith.constant dense<0xFF800000> : vector<2x8xf32>
    %112 = vector.multi_reduction <maximumf>, %111, %cst_52 [2] : vector<2x8x8xf32> to vector<2x8xf32>
    %113 = vector.shape_cast %112 : vector<2x8xf32> to vector<2x8x1xf32>
    %114 = vector.broadcast %113 : vector<2x8x1xf32> to vector<2x8x8xf32>
    %115 = arith.subf %111, %114 : vector<2x8x8xf32>
    %116 = math.exp %115 : vector<2x8x8xf32>
    %cst_53 = arith.constant dense<0.000000e+00> : vector<2x8xf32>
    %117 = vector.multi_reduction <add>, %116, %cst_53 [2] : vector<2x8x8xf32> to vector<2x8xf32>
    %118 = vector.shape_cast %117 : vector<2x8xf32> to vector<2x8x1xf32>
    %119 = tpu.reciprocal %118 {approx = true} : vector<2x8x1xf32> -> vector<2x8x1xf32>
    %120 = vector.broadcast %119 : vector<2x8x1xf32> to vector<2x8x8xf32>
    %121 = arith.mulf %116, %120 : vector<2x8x8xf32>
    "tpu.trace_start"() <{level = 10 : i32, message = "bqk,bkd->bqd"}> : () -> ()
    %cst_54 = arith.constant dense<0.000000e+00> : vector<2x8x8xf32>
    %122 = tpu.matmul %121, %109, %cst_54 {dimension_numbers = #tpu.dot_dimension_numbers<[2], [1], [1], [2], [0, 0, 0, 1, 1, 2], [0], [0]>} : vector<2x8x8xf32>, vector<2x8x8xf32>, vector<2x8x8xf32> -> vector<2x8x8xf32>
    "tpu.trace_stop"() : () -> ()
    %123 = vector.shape_cast %122 : vector<2x8x8xf32> to vector<16x8xf32>
    %124 = vector.extract_strided_slice %60 {offsets = [16, 0], sizes = [8, 32], strides = [1, 1]} : vector<32x32xf32> to vector<8x32xf32>
    %cst_55 = arith.constant dense<0.000000e+00> : vector<16x32xf32>
    %125 = tpu.matmul %123, %124, %cst_55 {dimension_numbers = #tpu.dot_dimension_numbers<[1], [0], [0], [1], [0, 0, 1, 1], [], []>} : vector<16x8xf32>, vector<8x32xf32>, vector<16x32xf32> -> vector<16x32xf32>
    %126 = arith.addf %106, %125 : vector<16x32xf32>
    %127 = vector.extract_strided_slice %65 {offsets = [0, 0, 24], sizes = [2, 8, 8], strides = [1, 1, 1]} : vector<2x8x32xf32> to vector<2x8x8xf32>
    %128 = vector.extract_strided_slice %66 {offsets = [0, 0, 24], sizes = [2, 8, 8], strides = [1, 1, 1]} : vector<2x8x32xf32> to vector<2x8x8xf32>
    %129 = vector.extract_strided_slice %67 {offsets = [0, 0, 24], sizes = [2, 8, 8], strides = [1, 1, 1]} : vector<2x8x32xf32> to vector<2x8x8xf32>
    "tpu.trace_start"() <{level = 10 : i32, message = "bqd,bkd->bqk"}> : () -> ()
    %cst_56 = arith.constant dense<0.000000e+00> : vector<2x8x8xf32>
    %130 = tpu.matmul %127, %128, %cst_56 {dimension_numbers = #tpu.dot_dimension_numbers<[2], [2], [1], [1], [0, 0, 0, 1, 1, 1], [0], [0]>} : vector<2x8x8xf32>, vector<2x8x8xf32>, vector<2x8x8xf32> -> vector<2x8x8xf32>
    "tpu.trace_stop"() : () -> ()
    %131 = arith.addf %130, %11 : vector<2x8x8xf32>
    %cst_57 = arith.constant dense<0xFF800000> : vector<2x8xf32>
    %132 = vector.multi_reduction <maximumf>, %131, %cst_57 [2] : vector<2x8x8xf32> to vector<2x8xf32>
    %133 = vector.shape_cast %132 : vector<2x8xf32> to vector<2x8x1xf32>
    %134 = vector.broadcast %133 : vector<2x8x1xf32> to vector<2x8x8xf32>
    %135 = arith.subf %131, %134 : vector<2x8x8xf32>
    %136 = math.exp %135 : vector<2x8x8xf32>
    %cst_58 = arith.constant dense<0.000000e+00> : vector<2x8xf32>
    %137 = vector.multi_reduction <add>, %136, %cst_58 [2] : vector<2x8x8xf32> to vector<2x8xf32>
    %138 = vector.shape_cast %137 : vector<2x8xf32> to vector<2x8x1xf32>
    %139 = tpu.reciprocal %138 {approx = true} : vector<2x8x1xf32> -> vector<2x8x1xf32>
    %140 = vector.broadcast %139 : vector<2x8x1xf32> to vector<2x8x8xf32>
    %141 = arith.mulf %136, %140 : vector<2x8x8xf32>
    "tpu.trace_start"() <{level = 10 : i32, message = "bqk,bkd->bqd"}> : () -> ()
    %cst_59 = arith.constant dense<0.000000e+00> : vector<2x8x8xf32>
    %142 = tpu.matmul %141, %129, %cst_59 {dimension_numbers = #tpu.dot_dimension_numbers<[2], [1], [1], [2], [0, 0, 0, 1, 1, 2], [0], [0]>} : vector<2x8x8xf32>, vector<2x8x8xf32>, vector<2x8x8xf32> -> vector<2x8x8xf32>
    "tpu.trace_stop"() : () -> ()
    %143 = vector.shape_cast %142 : vector<2x8x8xf32> to vector<16x8xf32>
    %144 = vector.extract_strided_slice %60 {offsets = [24, 0], sizes = [8, 32], strides = [1, 1]} : vector<32x32xf32> to vector<8x32xf32>
    %cst_60 = arith.constant dense<0.000000e+00> : vector<16x32xf32>
    %145 = tpu.matmul %143, %144, %cst_60 {dimension_numbers = #tpu.dot_dimension_numbers<[1], [0], [0], [1], [0, 0, 1, 1], [], []>} : vector<16x8xf32>, vector<8x32xf32>, vector<16x32xf32> -> vector<16x32xf32>
    %146 = arith.addf %126, %145 : vector<16x32xf32>
    %147 = vector.shape_cast %62 : vector<32xf32> to vector<1x32xf32>
    %148 = vector.broadcast %147 : vector<1x32xf32> to vector<16x32xf32>
    %149 = arith.addf %146, %148 : vector<16x32xf32>
    %150 = arith.addf %3, %149 : vector<16x32xf32>
    %c2 = arith.constant 2 : index
    %c0_61 = arith.constant 0 : index
    %151 = vector.load %arg4[%c2, %c0_61] : memref<6x32xf32, #tpu.memory_space<vmem>>, vector<1x32xf32>
    %152 = vector.shape_cast %151 : vector<1x32xf32> to vector<32xf32>
    %c3 = arith.constant 3 : index
    %c0_62 = arith.constant 0 : index
    %153 = vector.load %arg4[%c3, %c0_62] : memref<6x32xf32, #tpu.memory_space<vmem>>, vector<1x32xf32>
    %154 = vector.shape_cast %153 : vector<1x32xf32> to vector<32xf32>
    %cst_63 = arith.constant dense<0.000000e+00> : vector<16xf32>
    %155 = vector.multi_reduction <add>, %150, %cst_63 [1] : vector<16x32xf32> to vector<16xf32>
    %156 = vector.shape_cast %155 : vector<16xf32> to vector<16x1xf32>
    %cst_64 = arith.constant 3.200000e+01 : f32
    %157 = vector.broadcast %cst_64 : f32 to vector<16x1xf32>
    %158 = arith.divf %156, %157 : vector<16x1xf32>
    %159 = vector.broadcast %158 : vector<16x1xf32> to vector<16x32xf32>
    %160 = arith.subf %150, %159 : vector<16x32xf32>
    %161 = arith.mulf %160, %160 : vector<16x32xf32>
    %cst_65 = arith.constant dense<0.000000e+00> : vector<16xf32>
    %162 = vector.multi_reduction <add>, %161, %cst_65 [1] : vector<16x32xf32> to vector<16xf32>
    %163 = vector.shape_cast %162 : vector<16xf32> to vector<16x1xf32>
    %cst_66 = arith.constant 3.200000e+01 : f32
    %164 = vector.broadcast %cst_66 : f32 to vector<16x1xf32>
    %165 = arith.divf %163, %164 : vector<16x1xf32>
    %166 = vector.broadcast %158 : vector<16x1xf32> to vector<16x32xf32>
    %167 = arith.subf %150, %166 : vector<16x32xf32>
    %cst_67 = arith.constant 9.99999974E-6 : f32
    %168 = vector.broadcast %cst_67 : f32 to vector<16x1xf32>
    %169 = arith.addf %165, %168 : vector<16x1xf32>
    %170 = math.rsqrt %169 : vector<16x1xf32>
    %171 = vector.broadcast %170 : vector<16x1xf32> to vector<16x32xf32>
    %172 = arith.mulf %167, %171 : vector<16x32xf32>
    %173 = vector.shape_cast %152 : vector<32xf32> to vector<1x32xf32>
    %174 = vector.broadcast %173 : vector<1x32xf32> to vector<16x32xf32>
    %175 = arith.mulf %172, %174 : vector<16x32xf32>
    %176 = vector.shape_cast %154 : vector<32xf32> to vector<1x32xf32>
    %177 = vector.broadcast %176 : vector<1x32xf32> to vector<16x32xf32>
    %178 = arith.addf %175, %177 : vector<16x32xf32>
    %c1_68 = arith.constant 1 : index
    %c0_69 = arith.constant 0 : index
    %c0_70 = arith.constant 0 : index
    %179 = vector.load %arg5[%c1_68, %c0_69, %c0_70] : memref<2x32x96xf32, #tpu.memory_space<vmem>>, vector<1x32x96xf32>
    %180 = vector.shape_cast %179 : vector<1x32x96xf32> to vector<32x96xf32>
    %c1_71 = arith.constant 1 : index
    %c0_72 = arith.constant 0 : index
    %181 = vector.load %arg6[%c1_71, %c0_72] : memref<2x96xf32, #tpu.memory_space<vmem>>, vector<1x96xf32>
    %182 = vector.shape_cast %181 : vector<1x96xf32> to vector<96xf32>
    %183 = vector.extract_strided_slice %180 {offsets = [0, 0], sizes = [32, 32], strides = [1, 1]} : vector<32x96xf32> to vector<32x32xf32>
    %cst_73 = arith.constant dense<0.000000e+00> : vector<16x32xf32>
    %184 = tpu.matmul %178, %183, %cst_73 {dimension_numbers = #tpu.dot_dimension_numbers<[1], [0], [0], [1], [0, 0, 1, 1], [], []>} : vector<16x32xf32>, vector<32x32xf32>, vector<16x32xf32> -> vector<16x32xf32>
    %185 = vector.extract_strided_slice %182 {offsets = [0], sizes = [32], strides = [1]} : vector<96xf32> to vector<32xf32>
    %186 = vector.shape_cast %185 : vector<32xf32> to vector<1x32xf32>
    %187 = vector.broadcast %186 : vector<1x32xf32> to vector<16x32xf32>
    %188 = arith.addf %184, %187 : vector<16x32xf32>
    %189 = vector.extract_strided_slice %180 {offsets = [0, 32], sizes = [32, 64], strides = [1, 1]} : vector<32x96xf32> to vector<32x64xf32>
    %cst_74 = arith.constant dense<0.000000e+00> : vector<32x64xf32>
    %190 = tpu.matmul %5, %189, %cst_74 {dimension_numbers = #tpu.dot_dimension_numbers<[1], [0], [0], [1], [0, 0, 1, 1], [], []>} : vector<32x32xf32>, vector<32x64xf32>, vector<32x64xf32> -> vector<32x64xf32>
    %191 = vector.extract_strided_slice %182 {offsets = [32], sizes = [64], strides = [1]} : vector<96xf32> to vector<64xf32>
    %192 = vector.shape_cast %191 : vector<64xf32> to vector<1x64xf32>
    %193 = vector.broadcast %192 : vector<1x64xf32> to vector<32x64xf32>
    %194 = arith.addf %190, %193 : vector<32x64xf32>
    %195 = vector.extract_strided_slice %194 {offsets = [0, 0], sizes = [32, 32], strides = [1, 1]} : vector<32x64xf32> to vector<32x32xf32>
    %196 = vector.extract_strided_slice %194 {offsets = [0, 32], sizes = [32, 32], strides = [1, 1]} : vector<32x64xf32> to vector<32x32xf32>
    %c16 = arith.constant 16 : index
    %c0_75 = arith.constant 0 : index
    %197 = vector.load %arg13[%c16, %c0_75] : memref<48x128xf32, #tpu.memory_space<vmem>>, vector<32x32xf32>
    tpu.vector_store %arg13[%c16, %c0_75], %195 {strides = array<i32>} : memref<48x128xf32, #tpu.memory_space<vmem>>, vector<32x32xf32>,
    %c16_76 = arith.constant 16 : index
    %c32_77 = arith.constant 32 : index
    %198 = vector.load %arg13[%c16_76, %c32_77] : memref<48x128xf32, #tpu.memory_space<vmem>>, vector<32x32xf32>
    tpu.vector_store %arg13[%c16_76, %c32_77], %196 {strides = array<i32>} : memref<48x128xf32, #tpu.memory_space<vmem>>, vector<32x32xf32>,
    %c1_78 = arith.constant 1 : index
    %c0_79 = arith.constant 0 : index
    %c0_80 = arith.constant 0 : index
    %199 = vector.load %arg7[%c1_78, %c0_79, %c0_80] : memref<2x32x32xf32, #tpu.memory_space<vmem>>, vector<1x32x32xf32>
    %200 = vector.shape_cast %199 : vector<1x32x32xf32> to vector<32x32xf32>
    %c1_81 = arith.constant 1 : index
    %c0_82 = arith.constant 0 : index
    %201 = vector.load %arg8[%c1_81, %c0_82] : memref<2x32xf32, #tpu.memory_space<vmem>>, vector<1x32xf32>
    %202 = vector.shape_cast %201 : vector<1x32xf32> to vector<32xf32>
    %cst_83 = arith.constant 0.353553385 : f32
    %203 = vector.broadcast %cst_83 : f32 to vector<16x32xf32>
    %204 = arith.mulf %188, %203 : vector<16x32xf32>
    %205 = vector.shape_cast %204 : vector<16x32xf32> to vector<2x8x32xf32>
    %206 = vector.shape_cast %195 : vector<32x32xf32> to vector<2x16x32xf32>
    %207 = vector.shape_cast %196 : vector<32x32xf32> to vector<2x16x32xf32>
    %208 = vector.extract_strided_slice %205 {offsets = [0, 0, 0], sizes = [2, 8, 8], strides = [1, 1, 1]} : vector<2x8x32xf32> to vector<2x8x8xf32>
    %209 = vector.extract_strided_slice %206 {offsets = [0, 0, 0], sizes = [2, 16, 8], strides = [1, 1, 1]} : vector<2x16x32xf32> to vector<2x16x8xf32>
    %210 = vector.extract_strided_slice %207 {offsets = [0, 0, 0], sizes = [2, 16, 8], strides = [1, 1, 1]} : vector<2x16x32xf32> to vector<2x16x8xf32>
    "tpu.trace_start"() <{level = 10 : i32, message = "bqd,bkd->bqk"}> : () -> ()
    %cst_84 = arith.constant dense<0.000000e+00> : vector<2x8x16xf32>
    %211 = tpu.matmul %208, %209, %cst_84 {dimension_numbers = #tpu.dot_dimension_numbers<[2], [2], [1], [1], [0, 0, 0, 1, 1, 1], [0], [0]>} : vector<2x8x8xf32>, vector<2x16x8xf32>, vector<2x8x16xf32> -> vector<2x8x16xf32>
    "tpu.trace_stop"() : () -> ()
    %212 = arith.addf %211, %17 : vector<2x8x16xf32>
    %cst_85 = arith.constant dense<0xFF800000> : vector<2x8xf32>
    %213 = vector.multi_reduction <maximumf>, %212, %cst_85 [2] : vector<2x8x16xf32> to vector<2x8xf32>
    %214 = vector.shape_cast %213 : vector<2x8xf32> to vector<2x8x1xf32>
    %215 = vector.broadcast %214 : vector<2x8x1xf32> to vector<2x8x16xf32>
    %216 = arith.subf %212, %215 : vector<2x8x16xf32>
    %217 = math.exp %216 : vector<2x8x16xf32>
    %cst_86 = arith.constant dense<0.000000e+00> : vector<2x8xf32>
    %218 = vector.multi_reduction <add>, %217, %cst_86 [2] : vector<2x8x16xf32> to vector<2x8xf32>
    %219 = vector.shape_cast %218 : vector<2x8xf32> to vector<2x8x1xf32>
    %220 = tpu.reciprocal %219 {approx = true} : vector<2x8x1xf32> -> vector<2x8x1xf32>
    %221 = vector.broadcast %220 : vector<2x8x1xf32> to vector<2x8x16xf32>
    %222 = arith.mulf %217, %221 : vector<2x8x16xf32>
    "tpu.trace_start"() <{level = 10 : i32, message = "bqk,bkd->bqd"}> : () -> ()
    %cst_87 = arith.constant dense<0.000000e+00> : vector<2x8x8xf32>
    %223 = tpu.matmul %222, %210, %cst_87 {dimension_numbers = #tpu.dot_dimension_numbers<[2], [1], [1], [2], [0, 0, 0, 1, 1, 2], [0], [0]>} : vector<2x8x16xf32>, vector<2x16x8xf32>, vector<2x8x8xf32> -> vector<2x8x8xf32>
    "tpu.trace_stop"() : () -> ()
    %224 = vector.shape_cast %223 : vector<2x8x8xf32> to vector<16x8xf32>
    %225 = vector.extract_strided_slice %200 {offsets = [0, 0], sizes = [8, 32], strides = [1, 1]} : vector<32x32xf32> to vector<8x32xf32>
    %cst_88 = arith.constant dense<0.000000e+00> : vector<16x32xf32>
    %226 = tpu.matmul %224, %225, %cst_88 {dimension_numbers = #tpu.dot_dimension_numbers<[1], [0], [0], [1], [0, 0, 1, 1], [], []>} : vector<16x8xf32>, vector<8x32xf32>, vector<16x32xf32> -> vector<16x32xf32>
    %227 = vector.extract_strided_slice %205 {offsets = [0, 0, 8], sizes = [2, 8, 8], strides = [1, 1, 1]} : vector<2x8x32xf32> to vector<2x8x8xf32>
    %228 = vector.extract_strided_slice %206 {offsets = [0, 0, 8], sizes = [2, 16, 8], strides = [1, 1, 1]} : vector<2x16x32xf32> to vector<2x16x8xf32>
    %229 = vector.extract_strided_slice %207 {offsets = [0, 0, 8], sizes = [2, 16, 8], strides = [1, 1, 1]} : vector<2x16x32xf32> to vector<2x16x8xf32>
    "tpu.trace_start"() <{level = 10 : i32, message = "bqd,bkd->bqk"}> : () -> ()
    %cst_89 = arith.constant dense<0.000000e+00> : vector<2x8x16xf32>
    %230 = tpu.matmul %227, %228, %cst_89 {dimension_numbers = #tpu.dot_dimension_numbers<[2], [2], [1], [1], [0, 0, 0, 1, 1, 1], [0], [0]>} : vector<2x8x8xf32>, vector<2x16x8xf32>, vector<2x8x16xf32> -> vector<2x8x16xf32>
    "tpu.trace_stop"() : () -> ()
    %231 = arith.addf %230, %17 : vector<2x8x16xf32>
    %cst_90 = arith.constant dense<0xFF800000> : vector<2x8xf32>
    %232 = vector.multi_reduction <maximumf>, %231, %cst_90 [2] : vector<2x8x16xf32> to vector<2x8xf32>
    %233 = vector.shape_cast %232 : vector<2x8xf32> to vector<2x8x1xf32>
    %234 = vector.broadcast %233 : vector<2x8x1xf32> to vector<2x8x16xf32>
    %235 = arith.subf %231, %234 : vector<2x8x16xf32>
    %236 = math.exp %235 : vector<2x8x16xf32>
    %cst_91 = arith.constant dense<0.000000e+00> : vector<2x8xf32>
    %237 = vector.multi_reduction <add>, %236, %cst_91 [2] : vector<2x8x16xf32> to vector<2x8xf32>
    %238 = vector.shape_cast %237 : vector<2x8xf32> to vector<2x8x1xf32>
    %239 = tpu.reciprocal %238 {approx = true} : vector<2x8x1xf32> -> vector<2x8x1xf32>
    %240 = vector.broadcast %239 : vector<2x8x1xf32> to vector<2x8x16xf32>
    %241 = arith.mulf %236, %240 : vector<2x8x16xf32>
    "tpu.trace_start"() <{level = 10 : i32, message = "bqk,bkd->bqd"}> : () -> ()
    %cst_92 = arith.constant dense<0.000000e+00> : vector<2x8x8xf32>
    %242 = tpu.matmul %241, %229, %cst_92 {dimension_numbers = #tpu.dot_dimension_numbers<[2], [1], [1], [2], [0, 0, 0, 1, 1, 2], [0], [0]>} : vector<2x8x16xf32>, vector<2x16x8xf32>, vector<2x8x8xf32> -> vector<2x8x8xf32>
    "tpu.trace_stop"() : () -> ()
    %243 = vector.shape_cast %242 : vector<2x8x8xf32> to vector<16x8xf32>
    %244 = vector.extract_strided_slice %200 {offsets = [8, 0], sizes = [8, 32], strides = [1, 1]} : vector<32x32xf32> to vector<8x32xf32>
    %cst_93 = arith.constant dense<0.000000e+00> : vector<16x32xf32>
    %245 = tpu.matmul %243, %244, %cst_93 {dimension_numbers = #tpu.dot_dimension_numbers<[1], [0], [0], [1], [0, 0, 1, 1], [], []>} : vector<16x8xf32>, vector<8x32xf32>, vector<16x32xf32> -> vector<16x32xf32>
    %246 = arith.addf %226, %245 : vector<16x32xf32>
    %247 = vector.extract_strided_slice %205 {offsets = [0, 0, 16], sizes = [2, 8, 8], strides = [1, 1, 1]} : vector<2x8x32xf32> to vector<2x8x8xf32>
    %248 = vector.extract_strided_slice %206 {offsets = [0, 0, 16], sizes = [2, 16, 8], strides = [1, 1, 1]} : vector<2x16x32xf32> to vector<2x16x8xf32>
    %249 = vector.extract_strided_slice %207 {offsets = [0, 0, 16], sizes = [2, 16, 8], strides = [1, 1, 1]} : vector<2x16x32xf32> to vector<2x16x8xf32>
    "tpu.trace_start"() <{level = 10 : i32, message = "bqd,bkd->bqk"}> : () -> ()
    %cst_94 = arith.constant dense<0.000000e+00> : vector<2x8x16xf32>
    %250 = tpu.matmul %247, %248, %cst_94 {dimension_numbers = #tpu.dot_dimension_numbers<[2], [2], [1], [1], [0, 0, 0, 1, 1, 1], [0], [0]>} : vector<2x8x8xf32>, vector<2x16x8xf32>, vector<2x8x16xf32> -> vector<2x8x16xf32>
    "tpu.trace_stop"() : () -> ()
    %251 = arith.addf %250, %17 : vector<2x8x16xf32>
    %cst_95 = arith.constant dense<0xFF800000> : vector<2x8xf32>
    %252 = vector.multi_reduction <maximumf>, %251, %cst_95 [2] : vector<2x8x16xf32> to vector<2x8xf32>
    %253 = vector.shape_cast %252 : vector<2x8xf32> to vector<2x8x1xf32>
    %254 = vector.broadcast %253 : vector<2x8x1xf32> to vector<2x8x16xf32>
    %255 = arith.subf %251, %254 : vector<2x8x16xf32>
    %256 = math.exp %255 : vector<2x8x16xf32>
    %cst_96 = arith.constant dense<0.000000e+00> : vector<2x8xf32>
    %257 = vector.multi_reduction <add>, %256, %cst_96 [2] : vector<2x8x16xf32> to vector<2x8xf32>
    %258 = vector.shape_cast %257 : vector<2x8xf32> to vector<2x8x1xf32>
    %259 = tpu.reciprocal %258 {approx = true} : vector<2x8x1xf32> -> vector<2x8x1xf32>
    %260 = vector.broadcast %259 : vector<2x8x1xf32> to vector<2x8x16xf32>
    %261 = arith.mulf %256, %260 : vector<2x8x16xf32>
    "tpu.trace_start"() <{level = 10 : i32, message = "bqk,bkd->bqd"}> : () -> ()
    %cst_97 = arith.constant dense<0.000000e+00> : vector<2x8x8xf32>
    %262 = tpu.matmul %261, %249, %cst_97 {dimension_numbers = #tpu.dot_dimension_numbers<[2], [1], [1], [2], [0, 0, 0, 1, 1, 2], [0], [0]>} : vector<2x8x16xf32>, vector<2x16x8xf32>, vector<2x8x8xf32> -> vector<2x8x8xf32>
    "tpu.trace_stop"() : () -> ()
    %263 = vector.shape_cast %262 : vector<2x8x8xf32> to vector<16x8xf32>
    %264 = vector.extract_strided_slice %200 {offsets = [16, 0], sizes = [8, 32], strides = [1, 1]} : vector<32x32xf32> to vector<8x32xf32>
    %cst_98 = arith.constant dense<0.000000e+00> : vector<16x32xf32>
    %265 = tpu.matmul %263, %264, %cst_98 {dimension_numbers = #tpu.dot_dimension_numbers<[1], [0], [0], [1], [0, 0, 1, 1], [], []>} : vector<16x8xf32>, vector<8x32xf32>, vector<16x32xf32> -> vector<16x32xf32>
    %266 = arith.addf %246, %265 : vector<16x32xf32>
    %267 = vector.extract_strided_slice %205 {offsets = [0, 0, 24], sizes = [2, 8, 8], strides = [1, 1, 1]} : vector<2x8x32xf32> to vector<2x8x8xf32>
    %268 = vector.extract_strided_slice %206 {offsets = [0, 0, 24], sizes = [2, 16, 8], strides = [1, 1, 1]} : vector<2x16x32xf32> to vector<2x16x8xf32>
    %269 = vector.extract_strided_slice %207 {offsets = [0, 0, 24], sizes = [2, 16, 8], strides = [1, 1, 1]} : vector<2x16x32xf32> to vector<2x16x8xf32>
    "tpu.trace_start"() <{level = 10 : i32, message = "bqd,bkd->bqk"}> : () -> ()
    %cst_99 = arith.constant dense<0.000000e+00> : vector<2x8x16xf32>
    %270 = tpu.matmul %267, %268, %cst_99 {dimension_numbers = #tpu.dot_dimension_numbers<[2], [2], [1], [1], [0, 0, 0, 1, 1, 1], [0], [0]>} : vector<2x8x8xf32>, vector<2x16x8xf32>, vector<2x8x16xf32> -> vector<2x8x16xf32>
    "tpu.trace_stop"() : () -> ()
    %271 = arith.addf %270, %17 : vector<2x8x16xf32>
    %cst_100 = arith.constant dense<0xFF800000> : vector<2x8xf32>
    %272 = vector.multi_reduction <maximumf>, %271, %cst_100 [2] : vector<2x8x16xf32> to vector<2x8xf32>
    %273 = vector.shape_cast %272 : vector<2x8xf32> to vector<2x8x1xf32>
    %274 = vector.broadcast %273 : vector<2x8x1xf32> to vector<2x8x16xf32>
    %275 = arith.subf %271, %274 : vector<2x8x16xf32>
    %276 = math.exp %275 : vector<2x8x16xf32>
    %cst_101 = arith.constant dense<0.000000e+00> : vector<2x8xf32>
    %277 = vector.multi_reduction <add>, %276, %cst_101 [2] : vector<2x8x16xf32> to vector<2x8xf32>
    %278 = vector.shape_cast %277 : vector<2x8xf32> to vector<2x8x1xf32>
    %279 = tpu.reciprocal %278 {approx = true} : vector<2x8x1xf32> -> vector<2x8x1xf32>
    %280 = vector.broadcast %279 : vector<2x8x1xf32> to vector<2x8x16xf32>
    %281 = arith.mulf %276, %280 : vector<2x8x16xf32>
    "tpu.trace_start"() <{level = 10 : i32, message = "bqk,bkd->bqd"}> : () -> ()
    %cst_102 = arith.constant dense<0.000000e+00> : vector<2x8x8xf32>
    %282 = tpu.matmul %281, %269, %cst_102 {dimension_numbers = #tpu.dot_dimension_numbers<[2], [1], [1], [2], [0, 0, 0, 1, 1, 2], [0], [0]>} : vector<2x8x16xf32>, vector<2x16x8xf32>, vector<2x8x8xf32> -> vector<2x8x8xf32>
    "tpu.trace_stop"() : () -> ()
    %283 = vector.shape_cast %282 : vector<2x8x8xf32> to vector<16x8xf32>
    %284 = vector.extract_strided_slice %200 {offsets = [24, 0], sizes = [8, 32], strides = [1, 1]} : vector<32x32xf32> to vector<8x32xf32>
    %cst_103 = arith.constant dense<0.000000e+00> : vector<16x32xf32>
    %285 = tpu.matmul %283, %284, %cst_103 {dimension_numbers = #tpu.dot_dimension_numbers<[1], [0], [0], [1], [0, 0, 1, 1], [], []>} : vector<16x8xf32>, vector<8x32xf32>, vector<16x32xf32> -> vector<16x32xf32>
    %286 = arith.addf %266, %285 : vector<16x32xf32>
    %287 = vector.shape_cast %202 : vector<32xf32> to vector<1x32xf32>
    %288 = vector.broadcast %287 : vector<1x32xf32> to vector<16x32xf32>
    %289 = arith.addf %286, %288 : vector<16x32xf32>
    %290 = arith.addf %150, %289 : vector<16x32xf32>
    %291 = vector.shape_cast %222 : vector<2x8x16xf32> to vector<16x16xf32>
    %c0_104 = arith.constant 0 : index
    %c96 = arith.constant 96 : index
    %292 = vector.load %arg13[%c0_104, %c96] : memref<48x128xf32, #tpu.memory_space<vmem>>, vector<16x16xf32>
    tpu.vector_store %arg13[%c0_104, %c96], %291 {strides = array<i32>} : memref<48x128xf32, #tpu.memory_space<vmem>>, vector<16x16xf32>,
    %c4 = arith.constant 4 : index
    %c0_105 = arith.constant 0 : index
    %293 = vector.load %arg4[%c4, %c0_105] : memref<6x32xf32, #tpu.memory_space<vmem>>, vector<1x32xf32>
    %294 = vector.shape_cast %293 : vector<1x32xf32> to vector<32xf32>
    %c5 = arith.constant 5 : index
    %c0_106 = arith.constant 0 : index
    %295 = vector.load %arg4[%c5, %c0_106] : memref<6x32xf32, #tpu.memory_space<vmem>>, vector<1x32xf32>
    %296 = vector.shape_cast %295 : vector<1x32xf32> to vector<32xf32>
    %cst_107 = arith.constant dense<0.000000e+00> : vector<16xf32>
    %297 = vector.multi_reduction <add>, %290, %cst_107 [1] : vector<16x32xf32> to vector<16xf32>
    %298 = vector.shape_cast %297 : vector<16xf32> to vector<16x1xf32>
    %cst_108 = arith.constant 3.200000e+01 : f32
    %299 = vector.broadcast %cst_108 : f32 to vector<16x1xf32>
    %300 = arith.divf %298, %299 : vector<16x1xf32>
    %301 = vector.broadcast %300 : vector<16x1xf32> to vector<16x32xf32>
    %302 = arith.subf %290, %301 : vector<16x32xf32>
    %303 = arith.mulf %302, %302 : vector<16x32xf32>
    %cst_109 = arith.constant dense<0.000000e+00> : vector<16xf32>
    %304 = vector.multi_reduction <add>, %303, %cst_109 [1] : vector<16x32xf32> to vector<16xf32>
    %305 = vector.shape_cast %304 : vector<16xf32> to vector<16x1xf32>
    %cst_110 = arith.constant 3.200000e+01 : f32
    %306 = vector.broadcast %cst_110 : f32 to vector<16x1xf32>
    %307 = arith.divf %305, %306 : vector<16x1xf32>
    %308 = vector.broadcast %300 : vector<16x1xf32> to vector<16x32xf32>
    %309 = arith.subf %290, %308 : vector<16x32xf32>
    %cst_111 = arith.constant 9.99999974E-6 : f32
    %310 = vector.broadcast %cst_111 : f32 to vector<16x1xf32>
    %311 = arith.addf %307, %310 : vector<16x1xf32>
    %312 = math.rsqrt %311 : vector<16x1xf32>
    %313 = vector.broadcast %312 : vector<16x1xf32> to vector<16x32xf32>
    %314 = arith.mulf %309, %313 : vector<16x32xf32>
    %315 = vector.shape_cast %294 : vector<32xf32> to vector<1x32xf32>
    %316 = vector.broadcast %315 : vector<1x32xf32> to vector<16x32xf32>
    %317 = arith.mulf %314, %316 : vector<16x32xf32>
    %318 = vector.shape_cast %296 : vector<32xf32> to vector<1x32xf32>
    %319 = vector.broadcast %318 : vector<1x32xf32> to vector<16x32xf32>
    %320 = arith.addf %317, %319 : vector<16x32xf32>
    %c0_112 = arith.constant 0 : index
    %c0_113 = arith.constant 0 : index
    %321 = vector.load %arg9[%c0_112, %c0_113] : memref<32x64xf32, #tpu.memory_space<vmem>>, vector<32x64xf32>
    %cst_114 = arith.constant dense<0.000000e+00> : vector<16x64xf32>
    %322 = tpu.matmul %320, %321, %cst_114 {dimension_numbers = #tpu.dot_dimension_numbers<[1], [0], [0], [1], [0, 0, 1, 1], [], []>} : vector<16x32xf32>, vector<32x64xf32>, vector<16x64xf32> -> vector<16x64xf32>
    %c0_115 = arith.constant 0 : index
    %c0_116 = arith.constant 0 : index
    %323 = vector.load %arg10[%c0_115, %c0_116] : memref<1x64xf32, #tpu.memory_space<vmem>>, vector<1x64xf32>
    %324 = vector.shape_cast %323 : vector<1x64xf32> to vector<64xf32>
    %325 = vector.shape_cast %324 : vector<64xf32> to vector<1x64xf32>
    %326 = vector.broadcast %325 : vector<1x64xf32> to vector<16x64xf32>
    %327 = arith.addf %322, %326 : vector<16x64xf32>
    %cst_117 = arith.constant 0.000000e+00 : f32
    %328 = vector.broadcast %cst_117 : f32 to vector<16x64xf32>
    %329 = arith.maximumf %327, %328 : vector<16x64xf32>
    %c0_118 = arith.constant 0 : index
    %c0_119 = arith.constant 0 : index
    %330 = vector.load %arg11[%c0_118, %c0_119] : memref<64x32xf32, #tpu.memory_space<vmem>>, vector<64x32xf32>
    %cst_120 = arith.constant dense<0.000000e+00> : vector<16x32xf32>
    %331 = tpu.matmul %329, %330, %cst_120 {dimension_numbers = #tpu.dot_dimension_numbers<[1], [0], [0], [1], [0, 0, 1, 1], [], []>} : vector<16x64xf32>, vector<64x32xf32>, vector<16x32xf32> -> vector<16x32xf32>
    %c0_121 = arith.constant 0 : index
    %c0_122 = arith.constant 0 : index
    %332 = vector.load %arg12[%c0_121, %c0_122] : memref<1x32xf32, #tpu.memory_space<vmem>>, vector<1x32xf32>
    %333 = vector.shape_cast %332 : vector<1x32xf32> to vector<32xf32>
    %334 = vector.shape_cast %333 : vector<32xf32> to vector<1x32xf32>
    %335 = vector.broadcast %334 : vector<1x32xf32> to vector<16x32xf32>
    %336 = arith.addf %331, %335 : vector<16x32xf32>
    %337 = arith.addf %290, %336 : vector<16x32xf32>
    %c0_123 = arith.constant 0 : index
    %c0_124 = arith.constant 0 : index
    %338 = vector.load %arg13[%c0_123, %c0_124] : memref<48x128xf32, #tpu.memory_space<vmem>>, vector<16x32xf32>
    tpu.vector_store %arg13[%c0_123, %c0_124], %337 {strides = array<i32>} : memref<48x128xf32, #tpu.memory_space<vmem>>, vector<16x32xf32>,
    return
  }
}

</mosaic_0001>

<llo_original>
// kernel: decoder_layer.1
$region0: #{decoder_layer.1}
  #allocation0 [shape = 'u32[]', space=smem, size = 0x4, offset = 0x4, fixed_abs, tag = 'smem constant byte address 0x4 - core index']
  #allocation1 [shape = 'u32[144,128]{1,0:T(1,128)}', space=vmem, size = 0x12000, scoped, tag = 'internal scratch']
  %s0 = inlined_call_operand.hbm [shape: f32[2,8,32], index: 0, kind: input, shape index: {}]
  %s1 = inlined_call_operand.vmem [shape: f32[2,16,32], index: 1, kind: input, shape index: {}]
  %s2 = inlined_call_operand.hbm [shape: f32[2,8,8], index: 2, kind: input, shape index: {}]
  %s3 = inlined_call_operand.hbm [shape: f32[2,8,16], index: 3, kind: input, shape index: {}]
  %s4 = inlined_call_operand.vmem [shape: f32[6,32], index: 4, kind: input, shape index: {}]
  %s5 = inlined_call_operand.vmem [shape: f32[2,32,96], index: 5, kind: input, shape index: {}]
  %s6 = inlined_call_operand.hbm [shape: f32[2,96], index: 6, kind: input, shape index: {}]
  %s7 = inlined_call_operand.hbm [shape: f32[2,32,32], index: 7, kind: input, shape index: {}]
  %s8 = inlined_call_operand.hbm [shape: f32[2,32], index: 8, kind: input, shape index: {}]
  %s9 = inlined_call_operand.hbm [shape: f32[32,64], index: 9, kind: input, shape index: {}]
  %s10 = inlined_call_operand.vmem [shape: f32[1,64], index: 10, kind: input, shape index: {}]
  %s11 = inlined_call_operand.vmem [shape: f32[64,32], index: 11, kind: input, shape index: {}]
  %s12 = inlined_call_operand.vmem [shape: f32[1,32], index: 12, kind: input, shape index: {}]
  %s13 = inlined_call_operand.vmem [shape: f32[48,128], index: 13, kind: output, shape index: {}]
  %s14 = sld [smem:[#allocation0]]
  $region90: #{decoder_layer.1} parent=0
    _
  %s16 = ssub.s32 1, %s14
  %s17 = scalar_select 0, %s16, %s14
  $region1: #{decoder_layer.1} parent=0
    #allocation2 [shape = 'u8[8192]{0}', space=vmem, size = 0x2000, scoped, tag = 'input window, operand 0, single buffered']
    #allocation3 [shape = 's32[1]{0}', space=sflag, size = 0x4, scoped, tag = 'scoped memory for decoder_layer.1']
    #allocation4 [shape = 'u8[8192]{0}', space=vmem, size = 0x2000, scoped, tag = 'input window, operand 2, single buffered']
    #allocation5 [shape = 's32[1]{0}', space=sflag, size = 0x4, scoped, tag = 'scoped memory for decoder_layer.1']
    #allocation6 [shape = 'u8[8192]{0}', space=vmem, size = 0x2000, scoped, tag = 'input window, operand 3, single buffered']
    #allocation7 [shape = 'u8[1024]{0}', space=vmem, size = 0x400, scoped, tag = 'input window, operand 6, single buffered']
    #allocation8 [shape = 's32[1]{0}', space=sflag, size = 0x4, scoped, tag = 'scoped memory for decoder_layer.1']
    #allocation9 [shape = 'u8[32768]{0}', space=vmem, size = 0x8000, scoped, tag = 'input window, operand 7, single buffered']
    #allocation10 [shape = 'u8[1024]{0}', space=vmem, size = 0x400, scoped, tag = 'input window, operand 8, single buffered']
    #allocation11 [shape = 's32[1]{0}', space=sflag, size = 0x4, scoped, tag = 'scoped memory for decoder_layer.1']
    #allocation12 [shape = 'u8[16384]{0}', space=vmem, size = 0x4000, scoped, tag = 'input window, operand 9, single buffered']
    %18 = vsyncpa [#allocation3], 0
    %19 = vsyncpa [#allocation5], 0
    %20 = vsyncpa [#allocation8], 0
    %21 = vsyncpa [#allocation11], 0
    // Predicated region
    $region2: #{decoder_layer.1} parent=1 // pred_check
      _
    $region3: #{decoder_layer.1} parent=1 // pred_check_branch
      %23 = sbr.rel (0) target = $region5
    $region4: #{decoder_layer.1} parent=1 // pred_region
      %s25 = ssub.s32 256, 256
      %26 = vsyncadd [#allocation3], %s25
      %s27 = sshll.u32 [#allocation2], 4
      %s28 = int_to_ptr.vmem [resolvable:$true] %s27
      %33 = dma.hbm_to_vmem [thread:$0]  %s0, 256, %s28, [#allocation3], 128, 128, 8
    $region5: #{decoder_layer.1} parent=1 // pred_fallthru
      _
    // Predicated region
    $region6: #{decoder_layer.1} parent=1 // pred_check
      _
    $region7: #{decoder_layer.1} parent=1 // pred_check_branch
      %35 = sbr.rel (0) target = $region9
    $region8: #{decoder_layer.1} parent=1 // pred_region
      _
    $region9: #{decoder_layer.1} parent=1 // pred_fallthru
      _
    // Predicated region
    $region10: #{decoder_layer.1} parent=1 // pred_check
      _
    $region11: #{decoder_layer.1} parent=1 // pred_check_branch
      %37 = sbr.rel (0) target = $region13
    $region12: #{decoder_layer.1} parent=1 // pred_region
      %s39 = ssub.s32 256, 256
      %40 = vsyncadd [#allocation5], %s39
      %s41 = sshll.u32 [#allocation4], 4
      %s42 = int_to_ptr.vmem [resolvable:$true] %s41
      %47 = dma.hbm_to_vmem [thread:$0]  %s2, 256, %s42, [#allocation5], 128, 128, 8
    $region13: #{decoder_layer.1} parent=1 // pred_fallthru
      _
    // Predicated region
    $region14: #{decoder_layer.1} parent=1 // pred_check
      _
    $region15: #{decoder_layer.1} parent=1 // pred_check_branch
      %49 = sbr.rel (0) target = $region17
    $region16: #{decoder_layer.1} parent=1 // pred_region
      %s51 = ssub.s32 256, 256
      %52 = vsyncadd [#allocation5], %s51
      %s53 = sshll.u32 [#allocation6], 4
      %s54 = int_to_ptr.vmem [resolvable:$true] %s53
      %59 = dma.hbm_to_vmem [thread:$0]  %s3, 256, %s54, [#allocation5], 128, 128, 8
    $region17: #{decoder_layer.1} parent=1 // pred_fallthru
      _
    // Predicated region
    $region18: #{decoder_layer.1} parent=1 // pred_check
      _
    $region19: #{decoder_layer.1} parent=1 // pred_check_branch
      %61 = sbr.rel (0) target = $region21
    $region20: #{decoder_layer.1} parent=1 // pred_region
      _
    $region21: #{decoder_layer.1} parent=1 // pred_fallthru
      _
    // Predicated region
    $region22: #{decoder_layer.1} parent=1 // pred_check
      _
    $region23: #{decoder_layer.1} parent=1 // pred_check_branch
      %63 = sbr.rel (0) target = $region25
    $region24: #{decoder_layer.1} parent=1 // pred_region
      _
    $region25: #{decoder_layer.1} parent=1 // pred_fallthru
      _
    // Predicated region
    $region26: #{decoder_layer.1} parent=1 // pred_check
      _
    $region27: #{decoder_layer.1} parent=1 // pred_check_branch
      %65 = sbr.rel (0) target = $region29
    $region28: #{decoder_layer.1} parent=1 // pred_region
      %s67 = ssub.s32 32, 32
      %68 = vsyncadd [#allocation8], %s67
      %s70 = sshll.u32 [#allocation7], 4
      %s71 = int_to_ptr.vmem [resolvable:$true] %s70
      %73 = dma.hbm_to_vmem [thread:$0]  %s6, 32, %s71, [#allocation8]
    $region29: #{decoder_layer.1} parent=1 // pred_fallthru
      _
    // Predicated region
    $region30: #{decoder_layer.1} parent=1 // pred_check
      _
    $region31: #{decoder_layer.1} parent=1 // pred_check_branch
      %75 = sbr.rel (0) target = $region33
    $region32: #{decoder_layer.1} parent=1 // pred_region
      %s77 = ssub.s32 1024, 1024
      %78 = vsyncadd [#allocation8], %s77
      %s79 = sshll.u32 [#allocation9], 4
      %s80 = int_to_ptr.vmem [resolvable:$true] %s79
      %85 = dma.hbm_to_vmem [thread:$0]  %s7, 1024, %s80, [#allocation8], 128, 128, 8
    $region33: #{decoder_layer.1} parent=1 // pred_fallthru
      _
    // Predicated region
    $region34: #{decoder_layer.1} parent=1 // pred_check
      _
    $region35: #{decoder_layer.1} parent=1 // pred_check_branch
      %87 = sbr.rel (0) target = $region37
    $region36: #{decoder_layer.1} parent=1 // pred_region
      %s89 = ssub.s32 32, 32
      %90 = vsyncadd [#allocation11], %s89
      %s92 = sshll.u32 [#allocation10], 4
      %s93 = int_to_ptr.vmem [resolvable:$true] %s92
      %95 = dma.hbm_to_vmem [thread:$0]  %s8, 32, %s93, [#allocation11]
    $region37: #{decoder_layer.1} parent=1 // pred_fallthru
      _
    // Predicated region
    $region38: #{decoder_layer.1} parent=1 // pred_check
      _
    $region39: #{decoder_layer.1} parent=1 // pred_check_branch
      %97 = sbr.rel (0) target = $region41
    $region40: #{decoder_layer.1} parent=1 // pred_region
      %s99 = ssub.s32 512, 512
      %100 = vsyncadd [#allocation11], %s99
      %s101 = sshll.u32 [#allocation12], 4
      %s102 = int_to_ptr.vmem [resolvable:$true] %s101
      %107 = dma.hbm_to_vmem [thread:$0]  %s9, 512, %s102, [#allocation11], 128, 128, 8
    $region41: #{decoder_layer.1} parent=1 // pred_fallthru
      _
    // Predicated region
    $region42: #{decoder_layer.1} parent=1 // pred_check
      _
    $region43: #{decoder_layer.1} parent=1 // pred_check_branch
      %109 = sbr.rel (0) target = $region45
    $region44: #{decoder_layer.1} parent=1 // pred_region
      _
    $region45: #{decoder_layer.1} parent=1 // pred_fallthru
      _
    // Predicated region
    $region46: #{decoder_layer.1} parent=1 // pred_check
      _
    $region47: #{decoder_layer.1} parent=1 // pred_check_branch
      %111 = sbr.rel (0) target = $region49
    $region48: #{decoder_layer.1} parent=1 // pred_region
      _
    $region49: #{decoder_layer.1} parent=1 // pred_fallthru
      _
    // Predicated region
    $region50: #{decoder_layer.1} parent=1 // pred_check
      _
    $region51: #{decoder_layer.1} parent=1 // pred_check_branch
      %113 = sbr.rel (0) target = $region53
    $region52: #{decoder_layer.1} parent=1 // pred_region
      _
    $region53: #{decoder_layer.1} parent=1 // pred_fallthru
      _
    // Predicated region
    $region54: #{decoder_layer.1} parent=1 // pred_check
      _
    $region55: #{decoder_layer.1} parent=1 // pred_check_branch
      %115 = sbr.rel (0) target = $region57
    $region56: #{decoder_layer.1} parent=1 // pred_region
      %116 = dma.done [#allocation3], 256
    $region57: #{decoder_layer.1} parent=1 // pred_fallthru
      _
    // Predicated region
    $region58: #{decoder_layer.1} parent=1 // pred_check
      _
    $region59: #{decoder_layer.1} parent=1 // pred_check_branch
      %118 = sbr.rel (0) target = $region61
    $region60: #{decoder_layer.1} parent=1 // pred_region
      %119 = dma.done [#allocation5], 256
    $region61: #{decoder_layer.1} parent=1 // pred_fallthru
      _
    // Predicated region
    $region62: #{decoder_layer.1} parent=1 // pred_check
      _
    $region63: #{decoder_layer.1} parent=1 // pred_check_branch
      %121 = sbr.rel (0) target = $region65
    $region64: #{decoder_layer.1} parent=1 // pred_region
      %122 = dma.done [#allocation5], 256
    $region65: #{decoder_layer.1} parent=1 // pred_fallthru
      _
    // Predicated region
    $region66: #{decoder_layer.1} parent=1 // pred_check
      _
    $region67: #{decoder_layer.1} parent=1 // pred_check_branch
      %124 = sbr.rel (0) target = $region69
    $region68: #{decoder_layer.1} parent=1 // pred_region
      %125 = dma.done [#allocation8], 32
    $region69: #{decoder_layer.1} parent=1 // pred_fallthru
      _
    // Predicated region
    $region70: #{decoder_layer.1} parent=1 // pred_check
      _
    $region71: #{decoder_layer.1} parent=1 // pred_check_branch
      %127 = sbr.rel (0) target = $region73
    $region72: #{decoder_layer.1} parent=1 // pred_region
      %128 = dma.done [#allocation8], 1024
    $region73: #{decoder_layer.1} parent=1 // pred_fallthru
      _
    // Predicated region
    $region74: #{decoder_layer.1} parent=1 // pred_check
      _
    $region75: #{decoder_layer.1} parent=1 // pred_check_branch
      %130 = sbr.rel (0) target = $region77
    $region76: #{decoder_layer.1} parent=1 // pred_region
      %131 = dma.done [#allocation11], 32
    $region77: #{decoder_layer.1} parent=1 // pred_fallthru
      _
    // Predicated region
    $region78: #{decoder_layer.1} parent=1 // pred_check
      _
    $region79: #{decoder_layer.1} parent=1 // pred_check_branch
      %133 = sbr.rel (0) target = $region81
    $region80: #{decoder_layer.1} parent=1 // pred_region
      %134 = dma.done [#allocation11], 512
    $region81: #{decoder_layer.1} parent=1 // pred_fallthru
      _
    %135 = vst [vmem:[%s13] sm:$0xff] 0.0
    %136 = vst [vmem:[%s13 + $0x8] sm:$0xff] 0.0
    %137 = vst [vmem:[%s13 + $0x10] sm:$0xff] 0.0
    %138 = vst [vmem:[%s13 + $0x18] sm:$0xff] 0.0
    %139 = vst [vmem:[%s13 + $0x20] sm:$0xff] 0.0
    %140 = vst [vmem:[%s13 + $0x28] sm:$0xff] 0.0
    %v141 = vld [vmem:[#allocation2] sm:$0xff]
    %v142 = vld [vmem:[#allocation2 + $0x8] sm:$0xff]
    %v143 = vld [vmem:[%s1] sm:$0xff]
    %v144 = vld [vmem:[%s1 + $0x8] sm:$0xff]
    %v145 = vld [vmem:[%s1 + $0x10] sm:$0xff]
    %v146 = vld [vmem:[%s1 + $0x18] sm:$0xff]
    %v147 = vld [vmem:[#allocation4] sm:$0xff]
    %v148 = vld [vmem:[#allocation4 + $0x8] sm:$0xff]
    %vm149 = vcmp.gt.f32.partialorder %v147, 0.0
    %vm150 = vcmp.gt.f32.partialorder %v148, 0.0
    %v151 = vsel %vm149, -1e+18, 0.0
    %v152 = vsel %vm150, -1e+18, 0.0
    %v153 = vld [vmem:[#allocation6] sm:$0xff]
    %v154 = vld [vmem:[#allocation6 + $0x8] sm:$0xff]
    %vm155 = vcmp.gt.f32.partialorder %v153, 0.0
    %vm156 = vcmp.gt.f32.partialorder %v154, 0.0
    %v157 = vsel %vm155, -1e+18, 0.0
    %v158 = vsel %vm156, -1e+18, 0.0
    %v159 = vld [vmem:[%s4] sm:$0x1]
    %v160 = vld [vmem:[%s4 + $0x1] sm:$0x1]
    %vm161 = vcmask 261120
    %v162 = vsel %vm161, %v141, 0.0
    %163 = vadd.xlane.f32.xlu0 %v162
    %v164 = vpop.xlane.xlu0 %163
    %v165 = vsel %vm161, %v142, 0.0
    %166 = vadd.xlane.f32.xlu0 %v165
    %v167 = vpop.xlane.xlu0 %166
    %v168 = vrcp.pop 32.0
    %v169 = vmul.f32 %v164, %v168
    %v170 = vmul.f32 %v167, %v168
    %v171 = vsub.f32 %v141, %v169
    %v172 = vsub.f32 %v142, %v170
    %v173 = vmul.f32 %v171, %v171
    %v174 = vmul.f32 %v172, %v172
    %v175 = vsel %vm161, %v173, 0.0
    %176 = vadd.xlane.f32.xlu0 %v175
    %v177 = vpop.xlane.xlu0 %176
    %v178 = vsel %vm161, %v174, 0.0
    %179 = vadd.xlane.f32.xlu0 %v178
    %v180 = vpop.xlane.xlu0 %179
    %v181 = vmul.f32 %v177, %v168
    %v182 = vmul.f32 %v180, %v168
    %v183 = vadd.f32 %v181, 1e-05
    %v184 = vadd.f32 %v182, 1e-05
    %v185 = vrsqrt.pop %v183
    %v186 = vrsqrt.pop %v184
    %v187 = vmul.f32 %v171, %v185
    %v188 = vmul.f32 %v172, %v186
    %v189 = vlaneseq
    %v190 = vshrl.u32 %v189, 7
    %v191 = vsub.s32 0, %v190
    %v192 = vrot.slane %v159, %v191
    %v193 = vmul.f32 %v187, %v192
    %v194 = vmul.f32 %v188, %v192
    %v195 = vlaneseq
    %v196 = vshrl.u32 %v195, 7
    %v197 = vsub.s32 0, %v196
    %v198 = vrot.slane %v160, %v197
    %v199 = vadd.f32 %v193, %v198
    %v200 = vadd.f32 %v194, %v198
    %v201 = vld [vmem:[%s5] sm:$0xff]
    %v202 = vld [vmem:[%s5 + $0x8] sm:$0xff]
    %v203 = vld [vmem:[%s5 + $0x10] sm:$0xff]
    %v204 = vld [vmem:[%s5 + $0x18] sm:$0xff]
    %v205 = vld [vmem:[#allocation7] sm:$0x1]
    %v206 = vlaneseq
    %v207 = vshrl.u32 %v206, 7
    %v208 = vsub.s32 0, %v207
    %v209 = vrot.slane %v205, %v208
    %v211 = vsel %vm161, %v199, 0
    %v214 = vsel %vm161, %v200, 0
    %216 = vmatprep.subr.mxu0 0.0
    %217 = vmatpush1.msra.mxu0 %v201
    %218 = vmatprep.subr.mxu0 0.0
    %219 = vmatpush1.msra.mxu0 %v202
    %220 = vmatprep.subr.mxu0 0.0
    %221 = vmatpush1.msra.mxu0 %v203
    %222 = vmatprep.subr.mxu0 0.0
    %223 = vmatpush1.msra.mxu0 %v204
    %224 = vmatprep.subr.mxu0 0.0
    %225 = vmatpush1.msra.mxu0 0.0
    %226 = vmatprep.subr.mxu0 0.0
    %227 = vmatpush1.msra.mxu0 0.0
    %228 = vmatprep.subr.mxu0 0.0
    %229 = vmatpush1.msra.mxu0 0.0
    %230 = vmatprep.subr.mxu0 0.0
    %231 = vmatpush1.msra.mxu0 0.0
    %232 = vmatprep.subr.mxu0 0.0
    %233 = vmatpush1.msra.mxu0 0.0
    %234 = vmatprep.subr.mxu0 0.0
    %235 = vmatpush1.msra.mxu0 0.0
    %236 = vmatprep.subr.mxu0 0.0
    %237 = vmatpush1.msra.mxu0 0.0
    %238 = vmatprep.subr.mxu0 0.0
    %239 = vmatpush1.msra.mxu0 0.0
    %240 = vmatprep.subr.mxu0 0.0
    %241 = vmatpush1.msra.mxu0 0.0
    %242 = vmatprep.subr.mxu0 0.0
    %243 = vmatpush1.msra.mxu0 0.0
    %244 = vmatprep.subr.mxu0 0.0
    %245 = vmatpush1.msra.mxu0 0.0
    %246 = vmatprep.subr.mxu0 0.0
    %247 = vmatpush1.msra.mxu0 0.0
    %248 = vmatprep.subr.mxu0 0.0
    %249 = vmatpush1.msra.mxu0 0.0
    %250 = vmatprep.subr.mxu0 0.0
    %251 = vmatpush1.msra.mxu0 0.0
    %252 = vmatprep.subr.mxu0 0.0
    %253 = vmatpush1.msra.mxu0 0.0
    %254 = vmatprep.subr.mxu0 0.0
    %255 = vmatpush1.msra.mxu0 0.0
    %256 = vmatprep.subr.mxu0 0.0
    %257 = vmatpush1.msra.mxu0 0.0
    %258 = vmatprep.subr.mxu0 0.0
    %259 = vmatpush1.msra.mxu0 0.0
    %260 = vmatprep.subr.mxu0 0.0
    %261 = vmatpush1.msra.mxu0 0.0
    %262 = vmatprep.subr.mxu0 0.0
    %263 = vmatpush1.msra.mxu0 0.0
    %264 = vmatprep.subr.mxu0 0.0
    %265 = vmatpush1.msra.mxu0 0.0
    %266 = vmatprep.subr.mxu0 0.0
    %267 = vmatpush1.msra.mxu0 0.0
    %268 = vmatprep.subr.mxu0 0.0
    %269 = vmatpush1.msra.mxu0 0.0
    %270 = vmatprep.subr.mxu0 0.0
    %271 = vmatpush1.msra.mxu0 0.0
    %272 = vmatprep.subr.mxu0 0.0
    %273 = vmatpush1.msra.mxu0 0.0
    %274 = vmatprep.subr.mxu0 0.0
    %275 = vmatpush1.msra.mxu0 0.0
    %276 = vmatprep.subr.mxu0 0.0
    %277 = vmatpush1.msra.mxu0 0.0
    %278 = vmatprep.subr.mxu0 0.0
    %279 = vmatpush1.msra.mxu0 0.0
    %280 = vmatprep.mubr.f32.mxu0 0.0
    %281 = vmatmul.mubr.f32.gmra.mrb[0].mxu0 %v211
    %v282 = vpop.f32.mrb[0].mxu0
    %v283 = vadd.f32 %v209, %v282
    %v284 = vpop.f32.mrb[0].mxu0
    %285 = vmatprep.mubr.f32.mxu0 0.0
    %286 = vmatmul.mubr.f32.gmra.mrb[0].mxu0 %v214
    %v287 = vpop.f32.mrb[0].mxu0
    %v288 = vadd.f32 %v209, %v287
    %v289 = vpop.f32.mrb[0].mxu0
    %290 = vdwg.mxu0
    %vm291 = vcmask 523520
    %292 = vst.msk [vmem:[%s13] sm:$0xff] %vm291, %v283
    %293 = vst.msk [vmem:[%s13 + $0x8] sm:$0xff] %vm291, %v288
    %vm294 = vcmask 785920
    %295 = vst.msk [vmem:[%s13] sm:$0xff] %vm294, %v283
    %296 = vst.msk [vmem:[%s13 + $0x8] sm:$0xff] %vm294, %v288
    %v297 = vld [vmem:[#allocation9] sm:$0xff]
    %v298 = vld [vmem:[#allocation9 + $0x8] sm:$0xff]
    %v299 = vld [vmem:[#allocation9 + $0x10] sm:$0xff]
    %v300 = vld [vmem:[#allocation9 + $0x18] sm:$0xff]
    %v301 = vld [vmem:[#allocation10] sm:$0x1]
    %v302 = vmul.f32 %v283, 0.35355338
    %v303 = vmul.f32 %v288, 0.35355338
    %305 = vrot.lane.b32.xlu0 %v283, 96
    %v306 = vpop.permute.xlu0 %305
    %vm307 = vcmask 64512
    %v309 = vsel %vm307, %v302, 0
    %v311 = vsel %vm307, %v306, 0
    %313 = vmatprep.subr.mxu0 0.0
    %314 = vmatpush1.xpose.msra.mxu0 %v311
    %315 = vmatprep.subr.mxu0 0.0
    %316 = vmatpush1.xpose.msra.mxu0 0.0
    %317 = vmatprep.subr.mxu0 0.0
    %318 = vmatpush1.xpose.msra.mxu0 0.0
    %319 = vmatprep.subr.mxu0 0.0
    %320 = vmatpush1.xpose.msra.mxu0 0.0
    %321 = vmatprep.subr.mxu0 0.0
    %322 = vmatpush1.xpose.msra.mxu0 0.0
    %323 = vmatprep.subr.mxu0 0.0
    %324 = vmatpush1.xpose.msra.mxu0 0.0
    %325 = vmatprep.subr.mxu0 0.0
    %326 = vmatpush1.xpose.msra.mxu0 0.0
    %327 = vmatprep.subr.mxu0 0.0
    %328 = vmatpush1.xpose.msra.mxu0 0.0
    %329 = vmatprep.subr.mxu0 0.0
    %330 = vmatpush1.xpose.msra.mxu0 0.0
    %331 = vmatprep.subr.mxu0 0.0
    %332 = vmatpush1.xpose.msra.mxu0 0.0
    %333 = vmatprep.subr.mxu0 0.0
    %334 = vmatpush1.xpose.msra.mxu0 0.0
    %335 = vmatprep.subr.mxu0 0.0
    %336 = vmatpush1.xpose.msra.mxu0 0.0
    %337 = vmatprep.subr.mxu0 0.0
    %338 = vmatpush1.xpose.msra.mxu0 0.0
    %339 = vmatprep.subr.mxu0 0.0
    %340 = vmatpush1.xpose.msra.mxu0 0.0
    %341 = vmatprep.subr.mxu0 0.0
    %342 = vmatpush1.xpose.msra.mxu0 0.0
    %343 = vmatprep.subr.mxu0 0.0
    %344 = vmatpush1.xpose.msra.mxu0 0.0
    %345 = vmatprep.subr.mxu0 0.0
    %346 = vmatpush1.xpose.msra.mxu0 0.0
    %347 = vmatprep.subr.mxu0 0.0
    %348 = vmatpush1.xpose.msra.mxu0 0.0
    %349 = vmatprep.subr.mxu0 0.0
    %350 = vmatpush1.xpose.msra.mxu0 0.0
    %351 = vmatprep.subr.mxu0 0.0
    %352 = vmatpush1.xpose.msra.mxu0 0.0
    %353 = vmatprep.subr.mxu0 0.0
    %354 = vmatpush1.xpose.msra.mxu0 0.0
    %355 = vmatprep.subr.mxu0 0.0
    %356 = vmatpush1.xpose.msra.mxu0 0.0
    %357 = vmatprep.subr.mxu0 0.0
    %358 = vmatpush1.xpose.msra.mxu0 0.0
    %359 = vmatprep.subr.mxu0 0.0
    %360 = vmatpush1.xpose.msra.mxu0 0.0
    %361 = vmatprep.subr.mxu0 0.0
    %362 = vmatpush1.xpose.msra.mxu0 0.0
    %363 = vmatprep.subr.mxu0 0.0
    %364 = vmatpush1.xpose.msra.mxu0 0.0
    %365 = vmatprep.subr.mxu0 0.0
    %366 = vmatpush1.xpose.msra.mxu0 0.0
    %367 = vmatprep.subr.mxu0 0.0
    %368 = vmatpush1.xpose.msra.mxu0 0.0
    %369 = vmatprep.subr.mxu0 0.0
    %370 = vmatpush1.xpose.msra.mxu0 0.0
    %371 = vmatprep.subr.mxu0 0.0
    %372 = vmatpush1.xpose.msra.mxu0 0.0
    %373 = vmatprep.subr.mxu0 0.0
    %374 = vmatpush1.xpose.msra.mxu0 0.0
    %375 = vmatprep.subr.mxu0 0.0
    %376 = vmatpush1.xpose.msra.mxu0 0.0
    %377 = vmatprep.mubr.f32.mxu0 0.0
    %378 = vmatmul.mubr.f32.gmra.mrb[0].mxu0 %v309
    %v379 = vpop.f32.mrb[0].mxu0
    %v380 = vadd.f32 %v151, %v379
    %v381 = vpop.f32.mrb[0].mxu0
    %382 = vdwg.mxu0
    %384 = vrot.lane.b32.xlu0 %v288, 96
    %v385 = vpop.permute.xlu0 %384
    %v387 = vsel %vm307, %v303, 0
    %v389 = vsel %vm307, %v385, 0
    %391 = vmatprep.subr.mxu0 0.0
    %392 = vmatpush1.xpose.msra.mxu0 %v389
    %393 = vmatprep.subr.mxu0 0.0
    %394 = vmatpush1.xpose.msra.mxu0 0.0
    %395 = vmatprep.subr.mxu0 0.0
    %396 = vmatpush1.xpose.msra.mxu0 0.0
    %397 = vmatprep.subr.mxu0 0.0
    %398 = vmatpush1.xpose.msra.mxu0 0.0
    %399 = vmatprep.subr.mxu0 0.0
    %400 = vmatpush1.xpose.msra.mxu0 0.0
    %401 = vmatprep.subr.mxu0 0.0
    %402 = vmatpush1.xpose.msra.mxu0 0.0
    %403 = vmatprep.subr.mxu0 0.0
    %404 = vmatpush1.xpose.msra.mxu0 0.0
    %405 = vmatprep.subr.mxu0 0.0
    %406 = vmatpush1.xpose.msra.mxu0 0.0
    %407 = vmatprep.subr.mxu0 0.0
    %408 = vmatpush1.xpose.msra.mxu0 0.0
    %409 = vmatprep.subr.mxu0 0.0
    %410 = vmatpush1.xpose.msra.mxu0 0.0
    %411 = vmatprep.subr.mxu0 0.0
    %412 = vmatpush1.xpose.msra.mxu0 0.0
    %413 = vmatprep.subr.mxu0 0.0
    %414 = vmatpush1.xpose.msra.mxu0 0.0
    %415 = vmatprep.subr.mxu0 0.0
    %416 = vmatpush1.xpose.msra.mxu0 0.0
    %417 = vmatprep.subr.mxu0 0.0
    %418 = vmatpush1.xpose.msra.mxu0 0.0
    %419 = vmatprep.subr.mxu0 0.0
    %420 = vmatpush1.xpose.msra.mxu0 0.0
    %421 = vmatprep.subr.mxu0 0.0
    %422 = vmatpush1.xpose.msra.mxu0 0.0
    %423 = vmatprep.subr.mxu0 0.0
    %424 = vmatpush1.xpose.msra.mxu0 0.0
    %425 = vmatprep.subr.mxu0 0.0
    %426 = vmatpush1.xpose.msra.mxu0 0.0
    %427 = vmatprep.subr.mxu0 0.0
    %428 = vmatpush1.xpose.msra.mxu0 0.0
    %429 = vmatprep.subr.mxu0 0.0
    %430 = vmatpush1.xpose.msra.mxu0 0.0
    %431 = vmatprep.subr.mxu0 0.0
    %432 = vmatpush1.xpose.msra.mxu0 0.0
    %433 = vmatprep.subr.mxu0 0.0
    %434 = vmatpush1.xpose.msra.mxu0 0.0
    %435 = vmatprep.subr.mxu0 0.0
    %436 = vmatpush1.xpose.msra.mxu0 0.0
    %437 = vmatprep.subr.mxu0 0.0
    %438 = vmatpush1.xpose.msra.mxu0 0.0
    %439 = vmatprep.subr.mxu0 0.0
    %440 = vmatpush1.xpose.msra.mxu0 0.0
    %441 = vmatprep.subr.mxu0 0.0
    %442 = vmatpush1.xpose.msra.mxu0 0.0
    %443 = vmatprep.subr.mxu0 0.0
    %444 = vmatpush1.xpose.msra.mxu0 0.0
    %445 = vmatprep.subr.mxu0 0.0
    %446 = vmatpush1.xpose.msra.mxu0 0.0
    %447 = vmatprep.subr.mxu0 0.0
    %448 = vmatpush1.xpose.msra.mxu0 0.0
    %449 = vmatprep.subr.mxu0 0.0
    %450 = vmatpush1.xpose.msra.mxu0 0.0
    %451 = vmatprep.subr.mxu0 0.0
    %452 = vmatpush1.xpose.msra.mxu0 0.0
    %453 = vmatprep.subr.mxu0 0.0
    %454 = vmatpush1.xpose.msra.mxu0 0.0
    %455 = vmatprep.mubr.f32.mxu0 0.0
    %456 = vmatmul.mubr.f32.gmra.mrb[0].mxu0 %v387
    %v457 = vpop.f32.mrb[0].mxu0
    %v458 = vadd.f32 %v152, %v457
    %v459 = vpop.f32.mrb[0].mxu0
    %460 = vdwg.mxu0
    %v461 = vsel %vm307, %v380, -inf
    %462 = vmax.xlane.f32.xlu0 %v461
    %v463 = vpop.xlane.xlu0 %462
    %v464 = vsel %vm307, %v458, -inf
    %465 = vmax.xlane.f32.xlu0 %v464
    %v466 = vpop.xlane.xlu0 %465
    %v467 = vsub.f32 %v380, %v463
    %v468 = vsub.f32 %v458, %v466
    %v469 = vmul.f32 %v467, 1.442695
    %v470 = vpow.pop %v469
    %v471 = vmul.f32 %v468, 1.442695
    %v472 = vpow.pop %v471
    %v473 = vsel %vm307, %v470, 0.0
    %474 = vadd.xlane.f32.xlu0 %v473
    %v475 = vpop.xlane.xlu0 %474
    %v476 = vsel %vm307, %v472, 0.0
    %477 = vadd.xlane.f32.xlu0 %v476
    %v478 = vpop.xlane.xlu0 %477
    %v479 = vrcp.pop %v475
    %v480 = vrcp.pop %v478
    %v481 = vmul.f32 %v470, %v479
    %v482 = vmul.f32 %v472, %v480
    %483 = vrot.lane.b32.xlu0 %v283, 64
    %v484 = vpop.permute.xlu0 %483
    %v487 = vsel %vm307, %v481, 0
    %489 = vmatprep.subr.mxu0 0.0
    %490 = vmatpush1.msra.mxu0 %v484
    %491 = vmatprep.subr.mxu0 0.0
    %492 = vmatpush1.msra.mxu0 0.0
    %493 = vmatprep.subr.mxu0 0.0
    %494 = vmatpush1.msra.mxu0 0.0
    %495 = vmatprep.subr.mxu0 0.0
    %496 = vmatpush1.msra.mxu0 0.0
    %497 = vmatprep.subr.mxu0 0.0
    %498 = vmatpush1.msra.mxu0 0.0
    %499 = vmatprep.subr.mxu0 0.0
    %500 = vmatpush1.msra.mxu0 0.0
    %501 = vmatprep.subr.mxu0 0.0
    %502 = vmatpush1.msra.mxu0 0.0
    %503 = vmatprep.subr.mxu0 0.0
    %504 = vmatpush1.msra.mxu0 0.0
    %505 = vmatprep.subr.mxu0 0.0
    %506 = vmatpush1.msra.mxu0 0.0
    %507 = vmatprep.subr.mxu0 0.0
    %508 = vmatpush1.msra.mxu0 0.0
    %509 = vmatprep.subr.mxu0 0.0
    %510 = vmatpush1.msra.mxu0 0.0
    %511 = vmatprep.subr.mxu0 0.0
    %512 = vmatpush1.msra.mxu0 0.0
    %513 = vmatprep.subr.mxu0 0.0
    %514 = vmatpush1.msra.mxu0 0.0
    %515 = vmatprep.subr.mxu0 0.0
    %516 = vmatpush1.msra.mxu0 0.0
    %517 = vmatprep.subr.mxu0 0.0
    %518 = vmatpush1.msra.mxu0 0.0
    %519 = vmatprep.subr.mxu0 0.0
    %520 = vmatpush1.msra.mxu0 0.0
    %521 = vmatprep.subr.mxu0 0.0
    %522 = vmatpush1.msra.mxu0 0.0
    %523 = vmatprep.subr.mxu0 0.0
    %524 = vmatpush1.msra.mxu0 0.0
    %525 = vmatprep.subr.mxu0 0.0
    %526 = vmatpush1.msra.mxu0 0.0
    %527 = vmatprep.subr.mxu0 0.0
    %528 = vmatpush1.msra.mxu0 0.0
    %529 = vmatprep.subr.mxu0 0.0
    %530 = vmatpush1.msra.mxu0 0.0
    %531 = vmatprep.subr.mxu0 0.0
    %532 = vmatpush1.msra.mxu0 0.0
    %533 = vmatprep.subr.mxu0 0.0
    %534 = vmatpush1.msra.mxu0 0.0
    %535 = vmatprep.subr.mxu0 0.0
    %536 = vmatpush1.msra.mxu0 0.0
    %537 = vmatprep.subr.mxu0 0.0
    %538 = vmatpush1.msra.mxu0 0.0
    %539 = vmatprep.subr.mxu0 0.0
    %540 = vmatpush1.msra.mxu0 0.0
    %541 = vmatprep.subr.mxu0 0.0
    %542 = vmatpush1.msra.mxu0 0.0
    %543 = vmatprep.subr.mxu0 0.0
    %544 = vmatpush1.msra.mxu0 0.0
    %545 = vmatprep.subr.mxu0 0.0
    %546 = vmatpush1.msra.mxu0 0.0
    %547 = vmatprep.subr.mxu0 0.0
    %548 = vmatpush1.msra.mxu0 0.0
    %549 = vmatprep.subr.mxu0 0.0
    %550 = vmatpush1.msra.mxu0 0.0
    %551 = vmatprep.subr.mxu0 0.0
    %552 = vmatpush1.msra.mxu0 0.0
    %553 = vmatprep.mubr.f32.mxu0 0.0
    %554 = vmatmul.mubr.f32.gmra.mrb[0].mxu0 %v487
    %v555 = vpop.f32.mrb[0].mxu0
    %v556 = vadd.f32 0.0, %v555
    %v557 = vpop.f32.mrb[0].mxu0
    %558 = vdwg.mxu0
    %559 = vrot.lane.b32.xlu0 %v288, 64
    %v560 = vpop.permute.xlu0 %559
    %v563 = vsel %vm307, %v482, 0
    %565 = vmatprep.subr.mxu0 0.0
    %566 = vmatpush1.msra.mxu0 %v560
    %567 = vmatprep.subr.mxu0 0.0
    %568 = vmatpush1.msra.mxu0 0.0
    %569 = vmatprep.subr.mxu0 0.0
    %570 = vmatpush1.msra.mxu0 0.0
    %571 = vmatprep.subr.mxu0 0.0
    %572 = vmatpush1.msra.mxu0 0.0
    %573 = vmatprep.subr.mxu0 0.0
    %574 = vmatpush1.msra.mxu0 0.0
    %575 = vmatprep.subr.mxu0 0.0
    %576 = vmatpush1.msra.mxu0 0.0
    %577 = vmatprep.subr.mxu0 0.0
    %578 = vmatpush1.msra.mxu0 0.0
    %579 = vmatprep.subr.mxu0 0.0
    %580 = vmatpush1.msra.mxu0 0.0
    %581 = vmatprep.subr.mxu0 0.0
    %582 = vmatpush1.msra.mxu0 0.0
    %583 = vmatprep.subr.mxu0 0.0
    %584 = vmatpush1.msra.mxu0 0.0
    %585 = vmatprep.subr.mxu0 0.0
    %586 = vmatpush1.msra.mxu0 0.0
    %587 = vmatprep.subr.mxu0 0.0
    %588 = vmatpush1.msra.mxu0 0.0
    %589 = vmatprep.subr.mxu0 0.0
    %590 = vmatpush1.msra.mxu0 0.0
    %591 = vmatprep.subr.mxu0 0.0
    %592 = vmatpush1.msra.mxu0 0.0
    %593 = vmatprep.subr.mxu0 0.0
    %594 = vmatpush1.msra.mxu0 0.0
    %595 = vmatprep.subr.mxu0 0.0
    %596 = vmatpush1.msra.mxu0 0.0
    %597 = vmatprep.subr.mxu0 0.0
    %598 = vmatpush1.msra.mxu0 0.0
    %599 = vmatprep.subr.mxu0 0.0
    %600 = vmatpush1.msra.mxu0 0.0
    %601 = vmatprep.subr.mxu0 0.0
    %602 = vmatpush1.msra.mxu0 0.0
    %603 = vmatprep.subr.mxu0 0.0
    %604 = vmatpush1.msra.mxu0 0.0
    %605 = vmatprep.subr.mxu0 0.0
    %606 = vmatpush1.msra.mxu0 0.0
    %607 = vmatprep.subr.mxu0 0.0
    %608 = vmatpush1.msra.mxu0 0.0
    %609 = vmatprep.subr.mxu0 0.0
    %610 = vmatpush1.msra.mxu0 0.0
    %611 = vmatprep.subr.mxu0 0.0
    %612 = vmatpush1.msra.mxu0 0.0
    %613 = vmatprep.subr.mxu0 0.0
    %614 = vmatpush1.msra.mxu0 0.0
    %615 = vmatprep.subr.mxu0 0.0
    %616 = vmatpush1.msra.mxu0 0.0
    %617 = vmatprep.subr.mxu0 0.0
    %618 = vmatpush1.msra.mxu0 0.0
    %619 = vmatprep.subr.mxu0 0.0
    %620 = vmatpush1.msra.mxu0 0.0
    %621 = vmatprep.subr.mxu0 0.0
    %622 = vmatpush1.msra.mxu0 0.0
    %623 = vmatprep.subr.mxu0 0.0
    %624 = vmatpush1.msra.mxu0 0.0
    %625 = vmatprep.subr.mxu0 0.0
    %626 = vmatpush1.msra.mxu0 0.0
    %627 = vmatprep.subr.mxu0 0.0
    %628 = vmatpush1.msra.mxu0 0.0
    %629 = vmatprep.mubr.f32.mxu0 0.0
    %630 = vmatmul.mubr.f32.gmra.mrb[0].mxu0 %v563
    %v631 = vpop.f32.mrb[0].mxu0
    %v632 = vadd.f32 0.0, %v631
    %v633 = vpop.f32.mrb[0].mxu0
    %634 = vdwg.mxu0
    %635 = vrot.lane.b32.xlu0 %v302, 120
    %v636 = vpop.permute.xlu0 %635
    %637 = vrot.lane.b32.xlu0 %v283, 88
    %v638 = vpop.permute.xlu0 %637
    %v639 = vsel %vm307, %v636, 0
    %v641 = vsel %vm307, %v638, 0
    %643 = vmatprep.subr.mxu0 0.0
    %644 = vmatpush1.xpose.msra.mxu0 %v641
    %645 = vmatprep.subr.mxu0 0.0
    %646 = vmatpush1.xpose.msra.mxu0 0.0
    %647 = vmatprep.subr.mxu0 0.0
    %648 = vmatpush1.xpose.msra.mxu0 0.0
    %649 = vmatprep.subr.mxu0 0.0
    %650 = vmatpush1.xpose.msra.mxu0 0.0
    %651 = vmatprep.subr.mxu0 0.0
    %652 = vmatpush1.xpose.msra.mxu0 0.0
    %653 = vmatprep.subr.mxu0 0.0
    %654 = vmatpush1.xpose.msra.mxu0 0.0
    %655 = vmatprep.subr.mxu0 0.0
    %656 = vmatpush1.xpose.msra.mxu0 0.0
    %657 = vmatprep.subr.mxu0 0.0
    %658 = vmatpush1.xpose.msra.mxu0 0.0
    %659 = vmatprep.subr.mxu0 0.0
    %660 = vmatpush1.xpose.msra.mxu0 0.0
    %661 = vmatprep.subr.mxu0 0.0
    %662 = vmatpush1.xpose.msra.mxu0 0.0
    %663 = vmatprep.subr.mxu0 0.0
    %664 = vmatpush1.xpose.msra.mxu0 0.0
    %665 = vmatprep.subr.mxu0 0.0
    %666 = vmatpush1.xpose.msra.mxu0 0.0
    %667 = vmatprep.subr.mxu0 0.0
    %668 = vmatpush1.xpose.msra.mxu0 0.0
    %669 = vmatprep.subr.mxu0 0.0
    %670 = vmatpush1.xpose.msra.mxu0 0.0
    %671 = vmatprep.subr.mxu0 0.0
    %672 = vmatpush1.xpose.msra.mxu0 0.0
    %673 = vmatprep.subr.mxu0 0.0
    %674 = vmatpush1.xpose.msra.mxu0 0.0
    %675 = vmatprep.subr.mxu0 0.0
    %676 = vmatpush1.xpose.msra.mxu0 0.0
    %677 = vmatprep.subr.mxu0 0.0
    %678 = vmatpush1.xpose.msra.mxu0 0.0
    %679 = vmatprep.subr.mxu0 0.0
    %680 = vmatpush1.xpose.msra.mxu0 0.0
    %681 = vmatprep.subr.mxu0 0.0
    %682 = vmatpush1.xpose.msra.mxu0 0.0
    %683 = vmatprep.subr.mxu0 0.0
    %684 = vmatpush1.xpose.msra.mxu0 0.0
    %685 = vmatprep.subr.mxu0 0.0
    %686 = vmatpush1.xpose.msra.mxu0 0.0
    %687 = vmatprep.subr.mxu0 0.0
    %688 = vmatpush1.xpose.msra.mxu0 0.0
    %689 = vmatprep.subr.mxu0 0.0
    %690 = vmatpush1.xpose.msra.mxu0 0.0
    %691 = vmatprep.subr.mxu0 0.0
    %692 = vmatpush1.xpose.msra.mxu0 0.0
    %693 = vmatprep.subr.mxu0 0.0
    %694 = vmatpush1.xpose.msra.mxu0 0.0
    %695 = vmatprep.subr.mxu0 0.0
    %696 = vmatpush1.xpose.msra.mxu0 0.0
    %697 = vmatprep.subr.mxu0 0.0
    %698 = vmatpush1.xpose.msra.mxu0 0.0
    %699 = vmatprep.subr.mxu0 0.0
    %700 = vmatpush1.xpose.msra.mxu0 0.0
    %701 = vmatprep.subr.mxu0 0.0
    %702 = vmatpush1.xpose.msra.mxu0 0.0
    %703 = vmatprep.subr.mxu0 0.0
    %704 = vmatpush1.xpose.msra.mxu0 0.0
    %705 = vmatprep.subr.mxu0 0.0
    %706 = vmatpush1.xpose.msra.mxu0 0.0
    %707 = vmatprep.mubr.f32.mxu0 0.0
    %708 = vmatmul.mubr.f32.gmra.mrb[0].mxu0 %v639
    %v709 = vpop.f32.mrb[0].mxu0
    %v710 = vadd.f32 %v151, %v709
    %v711 = vpop.f32.mrb[0].mxu0
    %712 = vdwg.mxu0
    %713 = vrot.lane.b32.xlu0 %v303, 120
    %v714 = vpop.permute.xlu0 %713
    %715 = vrot.lane.b32.xlu0 %v288, 88
    %v716 = vpop.permute.xlu0 %715
    %v717 = vsel %vm307, %v714, 0
    %v719 = vsel %vm307, %v716, 0
    %721 = vmatprep.subr.mxu0 0.0
    %722 = vmatpush1.xpose.msra.mxu0 %v719
    %723 = vmatprep.subr.mxu0 0.0
    %724 = vmatpush1.xpose.msra.mxu0 0.0
    %725 = vmatprep.subr.mxu0 0.0
    %726 = vmatpush1.xpose.msra.mxu0 0.0
    %727 = vmatprep.subr.mxu0 0.0
    %728 = vmatpush1.xpose.msra.mxu0 0.0
    %729 = vmatprep.subr.mxu0 0.0
    %730 = vmatpush1.xpose.msra.mxu0 0.0
    %731 = vmatprep.subr.mxu0 0.0
    %732 = vmatpush1.xpose.msra.mxu0 0.0
    %733 = vmatprep.subr.mxu0 0.0
    %734 = vmatpush1.xpose.msra.mxu0 0.0
    %735 = vmatprep.subr.mxu0 0.0
    %736 = vmatpush1.xpose.msra.mxu0 0.0
    %737 = vmatprep.subr.mxu0 0.0
    %738 = vmatpush1.xpose.msra.mxu0 0.0
    %739 = vmatprep.subr.mxu0 0.0
    %740 = vmatpush1.xpose.msra.mxu0 0.0
    %741 = vmatprep.subr.mxu0 0.0
    %742 = vmatpush1.xpose.msra.mxu0 0.0
    %743 = vmatprep.subr.mxu0 0.0
    %744 = vmatpush1.xpose.msra.mxu0 0.0
    %745 = vmatprep.subr.mxu0 0.0
    %746 = vmatpush1.xpose.msra.mxu0 0.0
    %747 = vmatprep.subr.mxu0 0.0
    %748 = vmatpush1.xpose.msra.mxu0 0.0
    %749 = vmatprep.subr.mxu0 0.0
    %750 = vmatpush1.xpose.msra.mxu0 0.0
    %751 = vmatprep.subr.mxu0 0.0
    %752 = vmatpush1.xpose.msra.mxu0 0.0
    %753 = vmatprep.subr.mxu0 0.0
    %754 = vmatpush1.xpose.msra.mxu0 0.0
    %755 = vmatprep.subr.mxu0 0.0
    %756 = vmatpush1.xpose.msra.mxu0 0.0
    %757 = vmatprep.subr.mxu0 0.0
    %758 = vmatpush1.xpose.msra.mxu0 0.0
    %759 = vmatprep.subr.mxu0 0.0
    %760 = vmatpush1.xpose.msra.mxu0 0.0
    %761 = vmatprep.subr.mxu0 0.0
    %762 = vmatpush1.xpose.msra.mxu0 0.0
    %763 = vmatprep.subr.mxu0 0.0
    %764 = vmatpush1.xpose.msra.mxu0 0.0
    %765 = vmatprep.subr.mxu0 0.0
    %766 = vmatpush1.xpose.msra.mxu0 0.0
    %767 = vmatprep.subr.mxu0 0.0
    %768 = vmatpush1.xpose.msra.mxu0 0.0
    %769 = vmatprep.subr.mxu0 0.0
    %770 = vmatpush1.xpose.msra.mxu0 0.0
    %771 = vmatprep.subr.mxu0 0.0
    %772 = vmatpush1.xpose.msra.mxu0 0.0
    %773 = vmatprep.subr.mxu0 0.0
    %774 = vmatpush1.xpose.msra.mxu0 0.0
    %775 = vmatprep.subr.mxu0 0.0
    %776 = vmatpush1.xpose.msra.mxu0 0.0
    %777 = vmatprep.subr.mxu0 0.0
    %778 = vmatpush1.xpose.msra.mxu0 0.0
    %779 = vmatprep.subr.mxu0 0.0
    %780 = vmatpush1.xpose.msra.mxu0 0.0
    %781 = vmatprep.subr.mxu0 0.0
    %782 = vmatpush1.xpose.msra.mxu0 0.0
    %783 = vmatprep.subr.mxu0 0.0
    %784 = vmatpush1.xpose.msra.mxu0 0.0
    %785 = vmatprep.mubr.f32.mxu0 0.0
    %786 = vmatmul.mubr.f32.gmra.mrb[0].mxu0 %v717
    %v787 = vpop.f32.mrb[0].mxu0
    %v788 = vadd.f32 %v152, %v787
    %v789 = vpop.f32.mrb[0].mxu0
    %790 = vdwg.mxu0
    %v791 = vsel %vm307, %v710, -inf
    %792 = vmax.xlane.f32.xlu0 %v791
    %v793 = vpop.xlane.xlu0 %792
    %v794 = vsel %vm307, %v788, -inf
    %795 = vmax.xlane.f32.xlu0 %v794
    %v796 = vpop.xlane.xlu0 %795
    %v797 = vsub.f32 %v710, %v793
    %v798 = vsub.f32 %v788, %v796
    %v799 = vmul.f32 %v797, 1.442695
    %v800 = vpow.pop %v799
    %v801 = vmul.f32 %v798, 1.442695
    %v802 = vpow.pop %v801
    %v803 = vsel %vm307, %v800, 0.0
    %804 = vadd.xlane.f32.xlu0 %v803
    %v805 = vpop.xlane.xlu0 %804
    %v806 = vsel %vm307, %v802, 0.0
    %807 = vadd.xlane.f32.xlu0 %v806
    %v808 = vpop.xlane.xlu0 %807
    %v809 = vrcp.pop %v805
    %v810 = vrcp.pop %v808
    %v811 = vmul.f32 %v800, %v809
    %v812 = vmul.f32 %v802, %v810
    %813 = vrot.lane.b32.xlu0 %v283, 56
    %v814 = vpop.permute.xlu0 %813
    %v817 = vsel %vm307, %v811, 0
    %819 = vmatprep.subr.mxu0 0.0
    %820 = vmatpush1.msra.mxu0 %v814
    %821 = vmatprep.subr.mxu0 0.0
    %822 = vmatpush1.msra.mxu0 0.0
    %823 = vmatprep.subr.mxu0 0.0
    %824 = vmatpush1.msra.mxu0 0.0
    %825 = vmatprep.subr.mxu0 0.0
    %826 = vmatpush1.msra.mxu0 0.0
    %827 = vmatprep.subr.mxu0 0.0
    %828 = vmatpush1.msra.mxu0 0.0
    %829 = vmatprep.subr.mxu0 0.0
    %830 = vmatpush1.msra.mxu0 0.0
    %831 = vmatprep.subr.mxu0 0.0
    %832 = vmatpush1.msra.mxu0 0.0
    %833 = vmatprep.subr.mxu0 0.0
    %834 = vmatpush1.msra.mxu0 0.0
    %835 = vmatprep.subr.mxu0 0.0
    %836 = vmatpush1.msra.mxu0 0.0
    %837 = vmatprep.subr.mxu0 0.0
    %838 = vmatpush1.msra.mxu0 0.0
    %839 = vmatprep.subr.mxu0 0.0
    %840 = vmatpush1.msra.mxu0 0.0
    %841 = vmatprep.subr.mxu0 0.0
    %842 = vmatpush1.msra.mxu0 0.0
    %843 = vmatprep.subr.mxu0 0.0
    %844 = vmatpush1.msra.mxu0 0.0
    %845 = vmatprep.subr.mxu0 0.0
    %846 = vmatpush1.msra.mxu0 0.0
    %847 = vmatprep.subr.mxu0 0.0
    %848 = vmatpush1.msra.mxu0 0.0
    %849 = vmatprep.subr.mxu0 0.0
    %850 = vmatpush1.msra.mxu0 0.0
    %851 = vmatprep.subr.mxu0 0.0
    %852 = vmatpush1.msra.mxu0 0.0
    %853 = vmatprep.subr.mxu0 0.0
    %854 = vmatpush1.msra.mxu0 0.0
    %855 = vmatprep.subr.mxu0 0.0
    %856 = vmatpush1.msra.mxu0 0.0
    %857 = vmatprep.subr.mxu0 0.0
    %858 = vmatpush1.msra.mxu0 0.0
    %859 = vmatprep.subr.mxu0 0.0
    %860 = vmatpush1.msra.mxu0 0.0
    %861 = vmatprep.subr.mxu0 0.0
    %862 = vmatpush1.msra.mxu0 0.0
    %863 = vmatprep.subr.mxu0 0.0
    %864 = vmatpush1.msra.mxu0 0.0
    %865 = vmatprep.subr.mxu0 0.0
    %866 = vmatpush1.msra.mxu0 0.0
    %867 = vmatprep.subr.mxu0 0.0
    %868 = vmatpush1.msra.mxu0 0.0
    %869 = vmatprep.subr.mxu0 0.0
    %870 = vmatpush1.msra.mxu0 0.0
    %871 = vmatprep.subr.mxu0 0.0
    %872 = vmatpush1.msra.mxu0 0.0
    %873 = vmatprep.subr.mxu0 0.0
    %874 = vmatpush1.msra.mxu0 0.0
    %875 = vmatprep.subr.mxu0 0.0
    %876 = vmatpush1.msra.mxu0 0.0
    %877 = vmatprep.subr.mxu0 0.0
    %878 = vmatpush1.msra.mxu0 0.0
    %879 = vmatprep.subr.mxu0 0.0
    %880 = vmatpush1.msra.mxu0 0.0
    %881 = vmatprep.subr.mxu0 0.0
    %882 = vmatpush1.msra.mxu0 0.0
    %883 = vmatprep.mubr.f32.mxu0 0.0
    %884 = vmatmul.mubr.f32.gmra.mrb[0].mxu0 %v817
    %v885 = vpop.f32.mrb[0].mxu0
    %v886 = vadd.f32 0.0, %v885
    %v887 = vpop.f32.mrb[0].mxu0
    %888 = vdwg.mxu0
    %889 = vrot.lane.b32.xlu0 %v288, 56
    %v890 = vpop.permute.xlu0 %889
    %v893 = vsel %vm307, %v812, 0
    %895 = vmatprep.subr.mxu0 0.0
    %896 = vmatpush1.msra.mxu0 %v890
    %897 = vmatprep.subr.mxu0 0.0
    %898 = vmatpush1.msra.mxu0 0.0
    %899 = vmatprep.subr.mxu0 0.0
    %900 = vmatpush1.msra.mxu0 0.0
    %901 = vmatprep.subr.mxu0 0.0
    %902 = vmatpush1.msra.mxu0 0.0
    %903 = vmatprep.subr.mxu0 0.0
    %904 = vmatpush1.msra.mxu0 0.0
    %905 = vmatprep.subr.mxu0 0.0
    %906 = vmatpush1.msra.mxu0 0.0
    %907 = vmatprep.subr.mxu0 0.0
    %908 = vmatpush1.msra.mxu0 0.0
    %909 = vmatprep.subr.mxu0 0.0
    %910 = vmatpush1.msra.mxu0 0.0
    %911 = vmatprep.subr.mxu0 0.0
    %912 = vmatpush1.msra.mxu0 0.0
    %913 = vmatprep.subr.mxu0 0.0
    %914 = vmatpush1.msra.mxu0 0.0
    %915 = vmatprep.subr.mxu0 0.0
    %916 = vmatpush1.msra.mxu0 0.0
    %917 = vmatprep.subr.mxu0 0.0
    %918 = vmatpush1.msra.mxu0 0.0
    %919 = vmatprep.subr.mxu0 0.0
    %920 = vmatpush1.msra.mxu0 0.0
    %921 = vmatprep.subr.mxu0 0.0
    %922 = vmatpush1.msra.mxu0 0.0
    %923 = vmatprep.subr.mxu0 0.0
    %924 = vmatpush1.msra.mxu0 0.0
    %925 = vmatprep.subr.mxu0 0.0
    %926 = vmatpush1.msra.mxu0 0.0
    %927 = vmatprep.subr.mxu0 0.0
    %928 = vmatpush1.msra.mxu0 0.0
    %929 = vmatprep.subr.mxu0 0.0
    %930 = vmatpush1.msra.mxu0 0.0
    %931 = vmatprep.subr.mxu0 0.0
    %932 = vmatpush1.msra.mxu0 0.0
    %933 = vmatprep.subr.mxu0 0.0
    %934 = vmatpush1.msra.mxu0 0.0
    %935 = vmatprep.subr.mxu0 0.0
    %936 = vmatpush1.msra.mxu0 0.0
    %937 = vmatprep.subr.mxu0 0.0
    %938 = vmatpush1.msra.mxu0 0.0
    %939 = vmatprep.subr.mxu0 0.0
    %940 = vmatpush1.msra.mxu0 0.0
    %941 = vmatprep.subr.mxu0 0.0
    %942 = vmatpush1.msra.mxu0 0.0
    %943 = vmatprep.subr.mxu0 0.0
    %944 = vmatpush1.msra.mxu0 0.0
    %945 = vmatprep.subr.mxu0 0.0
    %946 = vmatpush1.msra.mxu0 0.0
    %947 = vmatprep.subr.mxu0 0.0
    %948 = vmatpush1.msra.mxu0 0.0
    %949 = vmatprep.subr.mxu0 0.0
    %950 = vmatpush1.msra.mxu0 0.0
    %951 = vmatprep.subr.mxu0 0.0
    %952 = vmatpush1.msra.mxu0 0.0
    %953 = vmatprep.subr.mxu0 0.0
    %954 = vmatpush1.msra.mxu0 0.0
    %955 = vmatprep.subr.mxu0 0.0
    %956 = vmatpush1.msra.mxu0 0.0
    %957 = vmatprep.subr.mxu0 0.0
    %958 = vmatpush1.msra.mxu0 0.0
    %959 = vmatprep.mubr.f32.mxu0 0.0
    %960 = vmatmul.mubr.f32.gmra.mrb[0].mxu0 %v893
    %v961 = vpop.f32.mrb[0].mxu0
    %v962 = vadd.f32 0.0, %v961
    %v963 = vpop.f32.mrb[0].mxu0
    %964 = vdwg.mxu0
    %v966 = vsel %vm307, %v886, 0
    %v969 = vsel %vm307, %v962, 0
    %971 = vmatprep.subr.mxu0 0.0
    %972 = vmatpush1.msra.mxu0 %v298
    %973 = vmatprep.subr.mxu0 0.0
    %974 = vmatpush1.msra.mxu0 0.0
    %975 = vmatprep.subr.mxu0 0.0
    %976 = vmatpush1.msra.mxu0 0.0
    %977 = vmatprep.subr.mxu0 0.0
    %978 = vmatpush1.msra.mxu0 0.0
    %979 = vmatprep.subr.mxu0 0.0
    %980 = vmatpush1.msra.mxu0 0.0
    %981 = vmatprep.subr.mxu0 0.0
    %982 = vmatpush1.msra.mxu0 0.0
    %983 = vmatprep.subr.mxu0 0.0
    %984 = vmatpush1.msra.mxu0 0.0
    %985 = vmatprep.subr.mxu0 0.0
    %986 = vmatpush1.msra.mxu0 0.0
    %987 = vmatprep.subr.mxu0 0.0
    %988 = vmatpush1.msra.mxu0 0.0
    %989 = vmatprep.subr.mxu0 0.0
    %990 = vmatpush1.msra.mxu0 0.0
    %991 = vmatprep.subr.mxu0 0.0
    %992 = vmatpush1.msra.mxu0 0.0
    %993 = vmatprep.subr.mxu0 0.0
    %994 = vmatpush1.msra.mxu0 0.0
    %995 = vmatprep.subr.mxu0 0.0
    %996 = vmatpush1.msra.mxu0 0.0
    %997 = vmatprep.subr.mxu0 0.0
    %998 = vmatpush1.msra.mxu0 0.0
    %999 = vmatprep.subr.mxu0 0.0
    %1000 = vmatpush1.msra.mxu0 0.0
    %1001 = vmatprep.subr.mxu0 0.0
    %1002 = vmatpush1.msra.mxu0 0.0
    %1003 = vmatprep.subr.mxu0 0.0
    %1004 = vmatpush1.msra.mxu0 0.0
    %1005 = vmatprep.subr.mxu0 0.0
    %1006 = vmatpush1.msra.mxu0 0.0
    %1007 = vmatprep.subr.mxu0 0.0
    %1008 = vmatpush1.msra.mxu0 0.0
    %1009 = vmatprep.subr.mxu0 0.0
    %1010 = vmatpush1.msra.mxu0 0.0
    %1011 = vmatprep.subr.mxu0 0.0
    %1012 = vmatpush1.msra.mxu0 0.0
    %1013 = vmatprep.subr.mxu0 0.0
    %1014 = vmatpush1.msra.mxu0 0.0
    %1015 = vmatprep.subr.mxu0 0.0
    %1016 = vmatpush1.msra.mxu0 0.0
    %1017 = vmatprep.subr.mxu0 0.0
    %1018 = vmatpush1.msra.mxu0 0.0
    %1019 = vmatprep.subr.mxu0 0.0
    %1020 = vmatpush1.msra.mxu0 0.0
    %1021 = vmatprep.subr.mxu0 0.0
    %1022 = vmatpush1.msra.mxu0 0.0
    %1023 = vmatprep.subr.mxu0 0.0
    %1024 = vmatpush1.msra.mxu0 0.0
    %1025 = vmatprep.subr.mxu0 0.0
    %1026 = vmatpush1.msra.mxu0 0.0
    %1027 = vmatprep.subr.mxu0 0.0
    %1028 = vmatpush1.msra.mxu0 0.0
    %1029 = vmatprep.subr.mxu0 0.0
    %1030 = vmatpush1.msra.mxu0 0.0
    %1031 = vmatprep.subr.mxu0 0.0
    %1032 = vmatpush1.msra.mxu0 0.0
    %1033 = vmatprep.subr.mxu0 0.0
    %1034 = vmatpush1.msra.mxu0 0.0
    %1035 = vmatprep.mubr.f32.mxu0 0.0
    %1036 = vmatmul.mubr.f32.gmra.mrb[0].mxu0 %v966
    %v1037 = vpop.f32.mrb[0].mxu0
    %v1038 = vadd.f32 0.0, %v1037
    %v1039 = vpop.f32.mrb[0].mxu0
    %1040 = vmatprep.mubr.f32.mxu0 0.0
    %1041 = vmatmul.mubr.f32.gmra.mrb[0].mxu0 %v969
    %v1042 = vpop.f32.mrb[0].mxu0
    %v1043 = vadd.f32 0.0, %v1042
    %v1044 = vpop.f32.mrb[0].mxu0
    %1045 = vdwg.mxu0
    %v1047 = vsel %vm307, %v556, 0
    %v1050 = vsel %vm307, %v632, 0
    %1052 = vmatprep.subr.mxu0 0.0
    %1053 = vmatpush1.msra.mxu0 %v297
    %1054 = vmatprep.subr.mxu0 0.0
    %1055 = vmatpush1.msra.mxu0 0.0
    %1056 = vmatprep.subr.mxu0 0.0
    %1057 = vmatpush1.msra.mxu0 0.0
    %1058 = vmatprep.subr.mxu0 0.0
    %1059 = vmatpush1.msra.mxu0 0.0
    %1060 = vmatprep.subr.mxu0 0.0
    %1061 = vmatpush1.msra.mxu0 0.0
    %1062 = vmatprep.subr.mxu0 0.0
    %1063 = vmatpush1.msra.mxu0 0.0
    %1064 = vmatprep.subr.mxu0 0.0
    %1065 = vmatpush1.msra.mxu0 0.0
    %1066 = vmatprep.subr.mxu0 0.0
    %1067 = vmatpush1.msra.mxu0 0.0
    %1068 = vmatprep.subr.mxu0 0.0
    %1069 = vmatpush1.msra.mxu0 0.0
    %1070 = vmatprep.subr.mxu0 0.0
    %1071 = vmatpush1.msra.mxu0 0.0
    %1072 = vmatprep.subr.mxu0 0.0
    %1073 = vmatpush1.msra.mxu0 0.0
    %1074 = vmatprep.subr.mxu0 0.0
    %1075 = vmatpush1.msra.mxu0 0.0
    %1076 = vmatprep.subr.mxu0 0.0
    %1077 = vmatpush1.msra.mxu0 0.0
    %1078 = vmatprep.subr.mxu0 0.0
    %1079 = vmatpush1.msra.mxu0 0.0
    %1080 = vmatprep.subr.mxu0 0.0
    %1081 = vmatpush1.msra.mxu0 0.0
    %1082 = vmatprep.subr.mxu0 0.0
    %1083 = vmatpush1.msra.mxu0 0.0
    %1084 = vmatprep.subr.mxu0 0.0
    %1085 = vmatpush1.msra.mxu0 0.0
    %1086 = vmatprep.subr.mxu0 0.0
    %1087 = vmatpush1.msra.mxu0 0.0
    %1088 = vmatprep.subr.mxu0 0.0
    %1089 = vmatpush1.msra.mxu0 0.0
    %1090 = vmatprep.subr.mxu0 0.0
    %1091 = vmatpush1.msra.mxu0 0.0
    %1092 = vmatprep.subr.mxu0 0.0
    %1093 = vmatpush1.msra.mxu0 0.0
    %1094 = vmatprep.subr.mxu0 0.0
    %1095 = vmatpush1.msra.mxu0 0.0
    %1096 = vmatprep.subr.mxu0 0.0
    %1097 = vmatpush1.msra.mxu0 0.0
    %1098 = vmatprep.subr.mxu0 0.0
    %1099 = vmatpush1.msra.mxu0 0.0
    %1100 = vmatprep.subr.mxu0 0.0
    %1101 = vmatpush1.msra.mxu0 0.0
    %1102 = vmatprep.subr.mxu0 0.0
    %1103 = vmatpush1.msra.mxu0 0.0
    %1104 = vmatprep.subr.mxu0 0.0
    %1105 = vmatpush1.msra.mxu0 0.0
    %1106 = vmatprep.subr.mxu0 0.0
    %1107 = vmatpush1.msra.mxu0 0.0
    %1108 = vmatprep.subr.mxu0 0.0
    %1109 = vmatpush1.msra.mxu0 0.0
    %1110 = vmatprep.subr.mxu0 0.0
    %1111 = vmatpush1.msra.mxu0 0.0
    %1112 = vmatprep.subr.mxu0 0.0
    %1113 = vmatpush1.msra.mxu0 0.0
    %1114 = vmatprep.subr.mxu0 0.0
    %1115 = vmatpush1.msra.mxu0 0.0
    %1116 = vmatprep.mubr.f32.mxu0 0.0
    %1117 = vmatmul.mubr.f32.gmra.mrb[0].mxu0 %v1047
    %v1118 = vpop.f32.mrb[0].mxu0
    %v1119 = vadd.f32 %v1038, %v1118
    %v1120 = vpop.f32.mrb[0].mxu0
    %1121 = vmatprep.mubr.f32.mxu0 0.0
    %1122 = vmatmul.mubr.f32.gmra.mrb[0].mxu0 %v1050
    %v1123 = vpop.f32.mrb[0].mxu0
    %v1124 = vadd.f32 %v1043, %v1123
    %v1125 = vpop.f32.mrb[0].mxu0
    %1126 = vdwg.mxu0
    %1127 = vrot.lane.b32.xlu0 %v302, 112
    %v1128 = vpop.permute.xlu0 %1127
    %1129 = vrot.lane.b32.xlu0 %v283, 80
    %v1130 = vpop.permute.xlu0 %1129
    %v1131 = vsel %vm307, %v1128, 0
    %v1133 = vsel %vm307, %v1130, 0
    %1135 = vmatprep.subr.mxu0 0.0
    %1136 = vmatpush1.xpose.msra.mxu0 %v1133
    %1137 = vmatprep.subr.mxu0 0.0
    %1138 = vmatpush1.xpose.msra.mxu0 0.0
    %1139 = vmatprep.subr.mxu0 0.0
    %1140 = vmatpush1.xpose.msra.mxu0 0.0
    %1141 = vmatprep.subr.mxu0 0.0
    %1142 = vmatpush1.xpose.msra.mxu0 0.0
    %1143 = vmatprep.subr.mxu0 0.0
    %1144 = vmatpush1.xpose.msra.mxu0 0.0
    %1145 = vmatprep.subr.mxu0 0.0
    %1146 = vmatpush1.xpose.msra.mxu0 0.0
    %1147 = vmatprep.subr.mxu0 0.0
    %1148 = vmatpush1.xpose.msra.mxu0 0.0
    %1149 = vmatprep.subr.mxu0 0.0
    %1150 = vmatpush1.xpose.msra.mxu0 0.0
    %1151 = vmatprep.subr.mxu0 0.0
    %1152 = vmatpush1.xpose.msra.mxu0 0.0
    %1153 = vmatprep.subr.mxu0 0.0
    %1154 = vmatpush1.xpose.msra.mxu0 0.0
    %1155 = vmatprep.subr.mxu0 0.0
    %1156 = vmatpush1.xpose.msra.mxu0 0.0
    %1157 = vmatprep.subr.mxu0 0.0
    %1158 = vmatpush1.xpose.msra.mxu0 0.0
    %1159 = vmatprep.subr.mxu0 0.0
    %1160 = vmatpush1.xpose.msra.mxu0 0.0
    %1161 = vmatprep.subr.mxu0 0.0
    %1162 = vmatpush1.xpose.msra.mxu0 0.0
    %1163 = vmatprep.subr.mxu0 0.0
    %1164 = vmatpush1.xpose.msra.mxu0 0.0
    %1165 = vmatprep.subr.mxu0 0.0
    %1166 = vmatpush1.xpose.msra.mxu0 0.0
    %1167 = vmatprep.subr.mxu0 0.0
    %1168 = vmatpush1.xpose.msra.mxu0 0.0
    %1169 = vmatprep.subr.mxu0 0.0
    %1170 = vmatpush1.xpose.msra.mxu0 0.0
    %1171 = vmatprep.subr.mxu0 0.0
    %1172 = vmatpush1.xpose.msra.mxu0 0.0
    %1173 = vmatprep.subr.mxu0 0.0
    %1174 = vmatpush1.xpose.msra.mxu0 0.0
    %1175 = vmatprep.subr.mxu0 0.0
    %1176 = vmatpush1.xpose.msra.mxu0 0.0
    %1177 = vmatprep.subr.mxu0 0.0
    %1178 = vmatpush1.xpose.msra.mxu0 0.0
    %1179 = vmatprep.subr.mxu0 0.0
    %1180 = vmatpush1.xpose.msra.mxu0 0.0
    %1181 = vmatprep.subr.mxu0 0.0
    %1182 = vmatpush1.xpose.msra.mxu0 0.0
    %1183 = vmatprep.subr.mxu0 0.0
    %1184 = vmatpush1.xpose.msra.mxu0 0.0
    %1185 = vmatprep.subr.mxu0 0.0
    %1186 = vmatpush1.xpose.msra.mxu0 0.0
    %1187 = vmatprep.subr.mxu0 0.0
    %1188 = vmatpush1.xpose.msra.mxu0 0.0
    %1189 = vmatprep.subr.mxu0 0.0
    %1190 = vmatpush1.xpose.msra.mxu0 0.0
    %1191 = vmatprep.subr.mxu0 0.0
    %1192 = vmatpush1.xpose.msra.mxu0 0.0
    %1193 = vmatprep.subr.mxu0 0.0
    %1194 = vmatpush1.xpose.msra.mxu0 0.0
    %1195 = vmatprep.subr.mxu0 0.0
    %1196 = vmatpush1.xpose.msra.mxu0 0.0
    %1197 = vmatprep.subr.mxu0 0.0
    %1198 = vmatpush1.xpose.msra.mxu0 0.0
    %1199 = vmatprep.mubr.f32.mxu0 0.0
    %1200 = vmatmul.mubr.f32.gmra.mrb[0].mxu0 %v1131
    %v1201 = vpop.f32.mrb[0].mxu0
    %v1202 = vadd.f32 %v151, %v1201
    %v1203 = vpop.f32.mrb[0].mxu0
    %1204 = vdwg.mxu0
    %1205 = vrot.lane.b32.xlu0 %v303, 112
    %v1206 = vpop.permute.xlu0 %1205
    %1207 = vrot.lane.b32.xlu0 %v288, 80
    %v1208 = vpop.permute.xlu0 %1207
    %v1209 = vsel %vm307, %v1206, 0
    %v1211 = vsel %vm307, %v1208, 0
    %1213 = vmatprep.subr.mxu0 0.0
    %1214 = vmatpush1.xpose.msra.mxu0 %v1211
    %1215 = vmatprep.subr.mxu0 0.0
    %1216 = vmatpush1.xpose.msra.mxu0 0.0
    %1217 = vmatprep.subr.mxu0 0.0
    %1218 = vmatpush1.xpose.msra.mxu0 0.0
    %1219 = vmatprep.subr.mxu0 0.0
    %1220 = vmatpush1.xpose.msra.mxu0 0.0
    %1221 = vmatprep.subr.mxu0 0.0
    %1222 = vmatpush1.xpose.msra.mxu0 0.0
    %1223 = vmatprep.subr.mxu0 0.0
    %1224 = vmatpush1.xpose.msra.mxu0 0.0
    %1225 = vmatprep.subr.mxu0 0.0
    %1226 = vmatpush1.xpose.msra.mxu0 0.0
    %1227 = vmatprep.subr.mxu0 0.0
    %1228 = vmatpush1.xpose.msra.mxu0 0.0
    %1229 = vmatprep.subr.mxu0 0.0
    %1230 = vmatpush1.xpose.msra.mxu0 0.0
    %1231 = vmatprep.subr.mxu0 0.0
    %1232 = vmatpush1.xpose.msra.mxu0 0.0
    %1233 = vmatprep.subr.mxu0 0.0
    %1234 = vmatpush1.xpose.msra.mxu0 0.0
    %1235 = vmatprep.subr.mxu0 0.0
    %1236 = vmatpush1.xpose.msra.mxu0 0.0
    %1237 = vmatprep.subr.mxu0 0.0
    %1238 = vmatpush1.xpose.msra.mxu0 0.0
    %1239 = vmatprep.subr.mxu0 0.0
    %1240 = vmatpush1.xpose.msra.mxu0 0.0
    %1241 = vmatprep.subr.mxu0 0.0
    %1242 = vmatpush1.xpose.msra.mxu0 0.0
    %1243 = vmatprep.subr.mxu0 0.0
    %1244 = vmatpush1.xpose.msra.mxu0 0.0
    %1245 = vmatprep.subr.mxu0 0.0
    %1246 = vmatpush1.xpose.msra.mxu0 0.0
    %1247 = vmatprep.subr.mxu0 0.0
    %1248 = vmatpush1.xpose.msra.mxu0 0.0
    %1249 = vmatprep.subr.mxu0 0.0
    %1250 = vmatpush1.xpose.msra.mxu0 0.0
    %1251 = vmatprep.subr.mxu0 0.0
    %1252 = vmatpush1.xpose.msra.mxu0 0.0
    %1253 = vmatprep.subr.mxu0 0.0
    %1254 = vmatpush1.xpose.msra.mxu0 0.0
    %1255 = vmatprep.subr.mxu0 0.0
    %1256 = vmatpush1.xpose.msra.mxu0 0.0
    %1257 = vmatprep.subr.mxu0 0.0
    %1258 = vmatpush1.xpose.msra.mxu0 0.0
    %1259 = vmatprep.subr.mxu0 0.0
    %1260 = vmatpush1.xpose.msra.mxu0 0.0
    %1261 = vmatprep.subr.mxu0 0.0
    %1262 = vmatpush1.xpose.msra.mxu0 0.0
    %1263 = vmatprep.subr.mxu0 0.0
    %1264 = vmatpush1.xpose.msra.mxu0 0.0
    %1265 = vmatprep.subr.mxu0 0.0
    %1266 = vmatpush1.xpose.msra.mxu0 0.0
    %1267 = vmatprep.subr.mxu0 0.0
    %1268 = vmatpush1.xpose.msra.mxu0 0.0
    %1269 = vmatprep.subr.mxu0 0.0
    %1270 = vmatpush1.xpose.msra.mxu0 0.0
    %1271 = vmatprep.subr.mxu0 0.0
    %1272 = vmatpush1.xpose.msra.mxu0 0.0
    %1273 = vmatprep.subr.mxu0 0.0
    %1274 = vmatpush1.xpose.msra.mxu0 0.0
    %1275 = vmatprep.subr.mxu0 0.0
    %1276 = vmatpush1.xpose.msra.mxu0 0.0
    %1277 = vmatprep.mubr.f32.mxu0 0.0
    %1278 = vmatmul.mubr.f32.gmra.mrb[0].mxu0 %v1209
    %v1279 = vpop.f32.mrb[0].mxu0
    %v1280 = vadd.f32 %v152, %v1279
    %v1281 = vpop.f32.mrb[0].mxu0
    %1282 = vdwg.mxu0
    %v1283 = vsel %vm307, %v1202, -inf
    %1284 = vmax.xlane.f32.xlu0 %v1283
    %v1285 = vpop.xlane.xlu0 %1284
    %v1286 = vsel %vm307, %v1280, -inf
    %1287 = vmax.xlane.f32.xlu0 %v1286
    %v1288 = vpop.xlane.xlu0 %1287
    %v1289 = vsub.f32 %v1202, %v1285
    %v1290 = vsub.f32 %v1280, %v1288
    %v1291 = vmul.f32 %v1289, 1.442695
    %v1292 = vpow.pop %v1291
    %v1293 = vmul.f32 %v1290, 1.442695
    %v1294 = vpow.pop %v1293
    %v1295 = vsel %vm307, %v1292, 0.0
    %1296 = vadd.xlane.f32.xlu0 %v1295
    %v1297 = vpop.xlane.xlu0 %1296
    %v1298 = vsel %vm307, %v1294, 0.0
    %1299 = vadd.xlane.f32.xlu0 %v1298
    %v1300 = vpop.xlane.xlu0 %1299
    %v1301 = vrcp.pop %v1297
    %v1302 = vrcp.pop %v1300
    %v1303 = vmul.f32 %v1292, %v1301
    %v1304 = vmul.f32 %v1294, %v1302
    %1305 = vrot.lane.b32.xlu0 %v283, 48
    %v1306 = vpop.permute.xlu0 %1305
    %v1309 = vsel %vm307, %v1303, 0
    %1311 = vmatprep.subr.mxu0 0.0
    %1312 = vmatpush1.msra.mxu0 %v1306
    %1313 = vmatprep.subr.mxu0 0.0
    %1314 = vmatpush1.msra.mxu0 0.0
    %1315 = vmatprep.subr.mxu0 0.0
    %1316 = vmatpush1.msra.mxu0 0.0
    %1317 = vmatprep.subr.mxu0 0.0
    %1318 = vmatpush1.msra.mxu0 0.0
    %1319 = vmatprep.subr.mxu0 0.0
    %1320 = vmatpush1.msra.mxu0 0.0
    %1321 = vmatprep.subr.mxu0 0.0
    %1322 = vmatpush1.msra.mxu0 0.0
    %1323 = vmatprep.subr.mxu0 0.0
    %1324 = vmatpush1.msra.mxu0 0.0
    %1325 = vmatprep.subr.mxu0 0.0
    %1326 = vmatpush1.msra.mxu0 0.0
    %1327 = vmatprep.subr.mxu0 0.0
    %1328 = vmatpush1.msra.mxu0 0.0
    %1329 = vmatprep.subr.mxu0 0.0
    %1330 = vmatpush1.msra.mxu0 0.0
    %1331 = vmatprep.subr.mxu0 0.0
    %1332 = vmatpush1.msra.mxu0 0.0
    %1333 = vmatprep.subr.mxu0 0.0
    %1334 = vmatpush1.msra.mxu0 0.0
    %1335 = vmatprep.subr.mxu0 0.0
    %1336 = vmatpush1.msra.mxu0 0.0
    %1337 = vmatprep.subr.mxu0 0.0
    %1338 = vmatpush1.msra.mxu0 0.0
    %1339 = vmatprep.subr.mxu0 0.0
    %1340 = vmatpush1.msra.mxu0 0.0
    %1341 = vmatprep.subr.mxu0 0.0
    %1342 = vmatpush1.msra.mxu0 0.0
    %1343 = vmatprep.subr.mxu0 0.0
    %1344 = vmatpush1.msra.mxu0 0.0
    %1345 = vmatprep.subr.mxu0 0.0
    %1346 = vmatpush1.msra.mxu0 0.0
    %1347 = vmatprep.subr.mxu0 0.0
    %1348 = vmatpush1.msra.mxu0 0.0
    %1349 = vmatprep.subr.mxu0 0.0
    %1350 = vmatpush1.msra.mxu0 0.0
    %1351 = vmatprep.subr.mxu0 0.0
    %1352 = vmatpush1.msra.mxu0 0.0
    %1353 = vmatprep.subr.mxu0 0.0
    %1354 = vmatpush1.msra.mxu0 0.0
    %1355 = vmatprep.subr.mxu0 0.0
    %1356 = vmatpush1.msra.mxu0 0.0
    %1357 = vmatprep.subr.mxu0 0.0
    %1358 = vmatpush1.msra.mxu0 0.0
    %1359 = vmatprep.subr.mxu0 0.0
    %1360 = vmatpush1.msra.mxu0 0.0
    %1361 = vmatprep.subr.mxu0 0.0
    %1362 = vmatpush1.msra.mxu0 0.0
    %1363 = vmatprep.subr.mxu0 0.0
    %1364 = vmatpush1.msra.mxu0 0.0
    %1365 = vmatprep.subr.mxu0 0.0
    %1366 = vmatpush1.msra.mxu0 0.0
    %1367 = vmatprep.subr.mxu0 0.0
    %1368 = vmatpush1.msra.mxu0 0.0
    %1369 = vmatprep.subr.mxu0 0.0
    %1370 = vmatpush1.msra.mxu0 0.0
    %1371 = vmatprep.subr.mxu0 0.0
    %1372 = vmatpush1.msra.mxu0 0.0
    %1373 = vmatprep.subr.mxu0 0.0
    %1374 = vmatpush1.msra.mxu0 0.0
    %1375 = vmatprep.mubr.f32.mxu0 0.0
    %1376 = vmatmul.mubr.f32.gmra.mrb[0].mxu0 %v1309
    %v1377 = vpop.f32.mrb[0].mxu0
    %v1378 = vadd.f32 0.0, %v1377
    %v1379 = vpop.f32.mrb[0].mxu0
    %1380 = vdwg.mxu0
    %1381 = vrot.lane.b32.xlu0 %v288, 48
    %v1382 = vpop.permute.xlu0 %1381
    %v1385 = vsel %vm307, %v1304, 0
    %1387 = vmatprep.subr.mxu0 0.0
    %1388 = vmatpush1.msra.mxu0 %v1382
    %1389 = vmatprep.subr.mxu0 0.0
    %1390 = vmatpush1.msra.mxu0 0.0
    %1391 = vmatprep.subr.mxu0 0.0
    %1392 = vmatpush1.msra.mxu0 0.0
    %1393 = vmatprep.subr.mxu0 0.0
    %1394 = vmatpush1.msra.mxu0 0.0
    %1395 = vmatprep.subr.mxu0 0.0
    %1396 = vmatpush1.msra.mxu0 0.0
    %1397 = vmatprep.subr.mxu0 0.0
    %1398 = vmatpush1.msra.mxu0 0.0
    %1399 = vmatprep.subr.mxu0 0.0
    %1400 = vmatpush1.msra.mxu0 0.0
    %1401 = vmatprep.subr.mxu0 0.0
    %1402 = vmatpush1.msra.mxu0 0.0
    %1403 = vmatprep.subr.mxu0 0.0
    %1404 = vmatpush1.msra.mxu0 0.0
    %1405 = vmatprep.subr.mxu0 0.0
    %1406 = vmatpush1.msra.mxu0 0.0
    %1407 = vmatprep.subr.mxu0 0.0
    %1408 = vmatpush1.msra.mxu0 0.0
    %1409 = vmatprep.subr.mxu0 0.0
    %1410 = vmatpush1.msra.mxu0 0.0
    %1411 = vmatprep.subr.mxu0 0.0
    %1412 = vmatpush1.msra.mxu0 0.0
    %1413 = vmatprep.subr.mxu0 0.0
    %1414 = vmatpush1.msra.mxu0 0.0
    %1415 = vmatprep.subr.mxu0 0.0
    %1416 = vmatpush1.msra.mxu0 0.0
    %1417 = vmatprep.subr.mxu0 0.0
    %1418 = vmatpush1.msra.mxu0 0.0
    %1419 = vmatprep.subr.mxu0 0.0
    %1420 = vmatpush1.msra.mxu0 0.0
    %1421 = vmatprep.subr.mxu0 0.0
    %1422 = vmatpush1.msra.mxu0 0.0
    %1423 = vmatprep.subr.mxu0 0.0
    %1424 = vmatpush1.msra.mxu0 0.0
    %1425 = vmatprep.subr.mxu0 0.0
    %1426 = vmatpush1.msra.mxu0 0.0
    %1427 = vmatprep.subr.mxu0 0.0
    %1428 = vmatpush1.msra.mxu0 0.0
    %1429 = vmatprep.subr.mxu0 0.0
    %1430 = vmatpush1.msra.mxu0 0.0
    %1431 = vmatprep.subr.mxu0 0.0
    %1432 = vmatpush1.msra.mxu0 0.0
    %1433 = vmatprep.subr.mxu0 0.0
    %1434 = vmatpush1.msra.mxu0 0.0
    %1435 = vmatprep.subr.mxu0 0.0
    %1436 = vmatpush1.msra.mxu0 0.0
    %1437 = vmatprep.subr.mxu0 0.0
    %1438 = vmatpush1.msra.mxu0 0.0
    %1439 = vmatprep.subr.mxu0 0.0
    %1440 = vmatpush1.msra.mxu0 0.0
    %1441 = vmatprep.subr.mxu0 0.0
    %1442 = vmatpush1.msra.mxu0 0.0
    %1443 = vmatprep.subr.mxu0 0.0
    %1444 = vmatpush1.msra.mxu0 0.0
    %1445 = vmatprep.subr.mxu0 0.0
    %1446 = vmatpush1.msra.mxu0 0.0
    %1447 = vmatprep.subr.mxu0 0.0
    %1448 = vmatpush1.msra.mxu0 0.0
    %1449 = vmatprep.subr.mxu0 0.0
    %1450 = vmatpush1.msra.mxu0 0.0
    %1451 = vmatprep.mubr.f32.mxu0 0.0
    %1452 = vmatmul.mubr.f32.gmra.mrb[0].mxu0 %v1385
    %v1453 = vpop.f32.mrb[0].mxu0
    %v1454 = vadd.f32 0.0, %v1453
    %v1455 = vpop.f32.mrb[0].mxu0
    %1456 = vdwg.mxu0
    %v1458 = vsel %vm307, %v1378, 0
    %v1461 = vsel %vm307, %v1454, 0
    %1463 = vmatprep.subr.mxu0 0.0
    %1464 = vmatpush1.msra.mxu0 %v299
    %1465 = vmatprep.subr.mxu0 0.0
    %1466 = vmatpush1.msra.mxu0 0.0
    %1467 = vmatprep.subr.mxu0 0.0
    %1468 = vmatpush1.msra.mxu0 0.0
    %1469 = vmatprep.subr.mxu0 0.0
    %1470 = vmatpush1.msra.mxu0 0.0
    %1471 = vmatprep.subr.mxu0 0.0
    %1472 = vmatpush1.msra.mxu0 0.0
    %1473 = vmatprep.subr.mxu0 0.0
    %1474 = vmatpush1.msra.mxu0 0.0
    %1475 = vmatprep.subr.mxu0 0.0
    %1476 = vmatpush1.msra.mxu0 0.0
    %1477 = vmatprep.subr.mxu0 0.0
    %1478 = vmatpush1.msra.mxu0 0.0
    %1479 = vmatprep.subr.mxu0 0.0
    %1480 = vmatpush1.msra.mxu0 0.0
    %1481 = vmatprep.subr.mxu0 0.0
    %1482 = vmatpush1.msra.mxu0 0.0
    %1483 = vmatprep.subr.mxu0 0.0
    %1484 = vmatpush1.msra.mxu0 0.0
    %1485 = vmatprep.subr.mxu0 0.0
    %1486 = vmatpush1.msra.mxu0 0.0
    %1487 = vmatprep.subr.mxu0 0.0
    %1488 = vmatpush1.msra.mxu0 0.0
    %1489 = vmatprep.subr.mxu0 0.0
    %1490 = vmatpush1.msra.mxu0 0.0
    %1491 = vmatprep.subr.mxu0 0.0
    %1492 = vmatpush1.msra.mxu0 0.0
    %1493 = vmatprep.subr.mxu0 0.0
    %1494 = vmatpush1.msra.mxu0 0.0
    %1495 = vmatprep.subr.mxu0 0.0
    %1496 = vmatpush1.msra.mxu0 0.0
    %1497 = vmatprep.subr.mxu0 0.0
    %1498 = vmatpush1.msra.mxu0 0.0
    %1499 = vmatprep.subr.mxu0 0.0
    %1500 = vmatpush1.msra.mxu0 0.0
    %1501 = vmatprep.subr.mxu0 0.0
    %1502 = vmatpush1.msra.mxu0 0.0
    %1503 = vmatprep.subr.mxu0 0.0
    %1504 = vmatpush1.msra.mxu0 0.0
    %1505 = vmatprep.subr.mxu0 0.0
    %1506 = vmatpush1.msra.mxu0 0.0
    %1507 = vmatprep.subr.mxu0 0.0
    %1508 = vmatpush1.msra.mxu0 0.0
    %1509 = vmatprep.subr.mxu0 0.0
    %1510 = vmatpush1.msra.mxu0 0.0
    %1511 = vmatprep.subr.mxu0 0.0
    %1512 = vmatpush1.msra.mxu0 0.0
    %1513 = vmatprep.subr.mxu0 0.0
    %1514 = vmatpush1.msra.mxu0 0.0
    %1515 = vmatprep.subr.mxu0 0.0
    %1516 = vmatpush1.msra.mxu0 0.0
    %1517 = vmatprep.subr.mxu0 0.0
    %1518 = vmatpush1.msra.mxu0 0.0
    %1519 = vmatprep.subr.mxu0 0.0
    %1520 = vmatpush1.msra.mxu0 0.0
    %1521 = vmatprep.subr.mxu0 0.0
    %1522 = vmatpush1.msra.mxu0 0.0
    %1523 = vmatprep.subr.mxu0 0.0
    %1524 = vmatpush1.msra.mxu0 0.0
    %1525 = vmatprep.subr.mxu0 0.0
    %1526 = vmatpush1.msra.mxu0 0.0
    %1527 = vmatprep.mubr.f32.mxu0 0.0
    %1528 = vmatmul.mubr.f32.gmra.mrb[0].mxu0 %v1458
    %v1529 = vpop.f32.mrb[0].mxu0
    %v1530 = vadd.f32 0.0, %v1529
    %v1531 = vpop.f32.mrb[0].mxu0
    %1532 = vmatprep.mubr.f32.mxu0 0.0
    %1533 = vmatmul.mubr.f32.gmra.mrb[0].mxu0 %v1461
    %v1534 = vpop.f32.mrb[0].mxu0
    %v1535 = vadd.f32 0.0, %v1534
    %v1536 = vpop.f32.mrb[0].mxu0
    %1537 = vdwg.mxu0
    %v1538 = vadd.f32 %v1119, %v1530
    %v1539 = vadd.f32 %v1124, %v1535
    %1540 = vrot.lane.b32.xlu0 %v302, 104
    %v1541 = vpop.permute.xlu0 %1540
    %1542 = vrot.lane.b32.xlu0 %v283, 72
    %v1543 = vpop.permute.xlu0 %1542
    %v1544 = vsel %vm307, %v1541, 0
    %v1546 = vsel %vm307, %v1543, 0
    %1548 = vmatprep.subr.mxu0 0.0
    %1549 = vmatpush1.xpose.msra.mxu0 %v1546
    %1550 = vmatprep.subr.mxu0 0.0
    %1551 = vmatpush1.xpose.msra.mxu0 0.0
    %1552 = vmatprep.subr.mxu0 0.0
    %1553 = vmatpush1.xpose.msra.mxu0 0.0
    %1554 = vmatprep.subr.mxu0 0.0
    %1555 = vmatpush1.xpose.msra.mxu0 0.0
    %1556 = vmatprep.subr.mxu0 0.0
    %1557 = vmatpush1.xpose.msra.mxu0 0.0
    %1558 = vmatprep.subr.mxu0 0.0
    %1559 = vmatpush1.xpose.msra.mxu0 0.0
    %1560 = vmatprep.subr.mxu0 0.0
    %1561 = vmatpush1.xpose.msra.mxu0 0.0
    %1562 = vmatprep.subr.mxu0 0.0
    %1563 = vmatpush1.xpose.msra.mxu0 0.0
    %1564 = vmatprep.subr.mxu0 0.0
    %1565 = vmatpush1.xpose.msra.mxu0 0.0
    %1566 = vmatprep.subr.mxu0 0.0
    %1567 = vmatpush1.xpose.msra.mxu0 0.0
    %1568 = vmatprep.subr.mxu0 0.0
    %1569 = vmatpush1.xpose.msra.mxu0 0.0
    %1570 = vmatprep.subr.mxu0 0.0
    %1571 = vmatpush1.xpose.msra.mxu0 0.0
    %1572 = vmatprep.subr.mxu0 0.0
    %1573 = vmatpush1.xpose.msra.mxu0 0.0
    %1574 = vmatprep.subr.mxu0 0.0
    %1575 = vmatpush1.xpose.msra.mxu0 0.0
    %1576 = vmatprep.subr.mxu0 0.0
    %1577 = vmatpush1.xpose.msra.mxu0 0.0
    %1578 = vmatprep.subr.mxu0 0.0
    %1579 = vmatpush1.xpose.msra.mxu0 0.0
    %1580 = vmatprep.subr.mxu0 0.0
    %1581 = vmatpush1.xpose.msra.mxu0 0.0
    %1582 = vmatprep.subr.mxu0 0.0
    %1583 = vmatpush1.xpose.msra.mxu0 0.0
    %1584 = vmatprep.subr.mxu0 0.0
    %1585 = vmatpush1.xpose.msra.mxu0 0.0
    %1586 = vmatprep.subr.mxu0 0.0
    %1587 = vmatpush1.xpose.msra.mxu0 0.0
    %1588 = vmatprep.subr.mxu0 0.0
    %1589 = vmatpush1.xpose.msra.mxu0 0.0
    %1590 = vmatprep.subr.mxu0 0.0
    %1591 = vmatpush1.xpose.msra.mxu0 0.0
    %1592 = vmatprep.subr.mxu0 0.0
    %1593 = vmatpush1.xpose.msra.mxu0 0.0
    %1594 = vmatprep.subr.mxu0 0.0
    %1595 = vmatpush1.xpose.msra.mxu0 0.0
    %1596 = vmatprep.subr.mxu0 0.0
    %1597 = vmatpush1.xpose.msra.mxu0 0.0
    %1598 = vmatprep.subr.mxu0 0.0
    %1599 = vmatpush1.xpose.msra.mxu0 0.0
    %1600 = vmatprep.subr.mxu0 0.0
    %1601 = vmatpush1.xpose.msra.mxu0 0.0
    %1602 = vmatprep.subr.mxu0 0.0
    %1603 = vmatpush1.xpose.msra.mxu0 0.0
    %1604 = vmatprep.subr.mxu0 0.0
    %1605 = vmatpush1.xpose.msra.mxu0 0.0
    %1606 = vmatprep.subr.mxu0 0.0
    %1607 = vmatpush1.xpose.msra.mxu0 0.0
    %1608 = vmatprep.subr.mxu0 0.0
    %1609 = vmatpush1.xpose.msra.mxu0 0.0
    %1610 = vmatprep.subr.mxu0 0.0
    %1611 = vmatpush1.xpose.msra.mxu0 0.0
    %1612 = vmatprep.mubr.f32.mxu0 0.0
    %1613 = vmatmul.mubr.f32.gmra.mrb[0].mxu0 %v1544
    %v1614 = vpop.f32.mrb[0].mxu0
    %v1615 = vadd.f32 %v151, %v1614
    %v1616 = vpop.f32.mrb[0].mxu0
    %1617 = vdwg.mxu0
    %1618 = vrot.lane.b32.xlu0 %v303, 104
    %v1619 = vpop.permute.xlu0 %1618
    %1620 = vrot.lane.b32.xlu0 %v288, 72
    %v1621 = vpop.permute.xlu0 %1620
    %v1622 = vsel %vm307, %v1619, 0
    %v1624 = vsel %vm307, %v1621, 0
    %1626 = vmatprep.subr.mxu0 0.0
    %1627 = vmatpush1.xpose.msra.mxu0 %v1624
    %1628 = vmatprep.subr.mxu0 0.0
    %1629 = vmatpush1.xpose.msra.mxu0 0.0
    %1630 = vmatprep.subr.mxu0 0.0
    %1631 = vmatpush1.xpose.msra.mxu0 0.0
    %1632 = vmatprep.subr.mxu0 0.0
    %1633 = vmatpush1.xpose.msra.mxu0 0.0
    %1634 = vmatprep.subr.mxu0 0.0
    %1635 = vmatpush1.xpose.msra.mxu0 0.0
    %1636 = vmatprep.subr.mxu0 0.0
    %1637 = vmatpush1.xpose.msra.mxu0 0.0
    %1638 = vmatprep.subr.mxu0 0.0
    %1639 = vmatpush1.xpose.msra.mxu0 0.0
    %1640 = vmatprep.subr.mxu0 0.0
    %1641 = vmatpush1.xpose.msra.mxu0 0.0
    %1642 = vmatprep.subr.mxu0 0.0
    %1643 = vmatpush1.xpose.msra.mxu0 0.0
    %1644 = vmatprep.subr.mxu0 0.0
    %1645 = vmatpush1.xpose.msra.mxu0 0.0
    %1646 = vmatprep.subr.mxu0 0.0
    %1647 = vmatpush1.xpose.msra.mxu0 0.0
    %1648 = vmatprep.subr.mxu0 0.0
    %1649 = vmatpush1.xpose.msra.mxu0 0.0
    %1650 = vmatprep.subr.mxu0 0.0
    %1651 = vmatpush1.xpose.msra.mxu0 0.0
    %1652 = vmatprep.subr.mxu0 0.0
    %1653 = vmatpush1.xpose.msra.mxu0 0.0
    %1654 = vmatprep.subr.mxu0 0.0
    %1655 = vmatpush1.xpose.msra.mxu0 0.0
    %1656 = vmatprep.subr.mxu0 0.0
    %1657 = vmatpush1.xpose.msra.mxu0 0.0
    %1658 = vmatprep.subr.mxu0 0.0
    %1659 = vmatpush1.xpose.msra.mxu0 0.0
    %1660 = vmatprep.subr.mxu0 0.0
    %1661 = vmatpush1.xpose.msra.mxu0 0.0
    %1662 = vmatprep.subr.mxu0 0.0
    %1663 = vmatpush1.xpose.msra.mxu0 0.0
    %1664 = vmatprep.subr.mxu0 0.0
    %1665 = vmatpush1.xpose.msra.mxu0 0.0
    %1666 = vmatprep.subr.mxu0 0.0
    %1667 = vmatpush1.xpose.msra.mxu0 0.0
    %1668 = vmatprep.subr.mxu0 0.0
    %1669 = vmatpush1.xpose.msra.mxu0 0.0
    %1670 = vmatprep.subr.mxu0 0.0
    %1671 = vmatpush1.xpose.msra.mxu0 0.0
    %1672 = vmatprep.subr.mxu0 0.0
    %1673 = vmatpush1.xpose.msra.mxu0 0.0
    %1674 = vmatprep.subr.mxu0 0.0
    %1675 = vmatpush1.xpose.msra.mxu0 0.0
    %1676 = vmatprep.subr.mxu0 0.0
    %1677 = vmatpush1.xpose.msra.mxu0 0.0
    %1678 = vmatprep.subr.mxu0 0.0
    %1679 = vmatpush1.xpose.msra.mxu0 0.0
    %1680 = vmatprep.subr.mxu0 0.0
    %1681 = vmatpush1.xpose.msra.mxu0 0.0
    %1682 = vmatprep.subr.mxu0 0.0
    %1683 = vmatpush1.xpose.msra.mxu0 0.0
    %1684 = vmatprep.subr.mxu0 0.0
    %1685 = vmatpush1.xpose.msra.mxu0 0.0
    %1686 = vmatprep.subr.mxu0 0.0
    %1687 = vmatpush1.xpose.msra.mxu0 0.0
    %1688 = vmatprep.subr.mxu0 0.0
    %1689 = vmatpush1.xpose.msra.mxu0 0.0
    %1690 = vmatprep.mubr.f32.mxu0 0.0
    %1691 = vmatmul.mubr.f32.gmra.mrb[0].mxu0 %v1622
    %v1692 = vpop.f32.mrb[0].mxu0
    %v1693 = vadd.f32 %v152, %v1692
    %v1694 = vpop.f32.mrb[0].mxu0
    %1695 = vdwg.mxu0
    %v1696 = vsel %vm307, %v1615, -inf
    %1697 = vmax.xlane.f32.xlu0 %v1696
    %v1698 = vpop.xlane.xlu0 %1697
    %v1699 = vsel %vm307, %v1693, -inf
    %1700 = vmax.xlane.f32.xlu0 %v1699
    %v1701 = vpop.xlane.xlu0 %1700
    %v1702 = vsub.f32 %v1615, %v1698
    %v1703 = vsub.f32 %v1693, %v1701
    %v1704 = vmul.f32 %v1702, 1.442695
    %v1705 = vpow.pop %v1704
    %v1706 = vmul.f32 %v1703, 1.442695
    %v1707 = vpow.pop %v1706
    %v1708 = vsel %vm307, %v1705, 0.0
    %1709 = vadd.xlane.f32.xlu0 %v1708
    %v1710 = vpop.xlane.xlu0 %1709
    %v1711 = vsel %vm307, %v1707, 0.0
    %1712 = vadd.xlane.f32.xlu0 %v1711
    %v1713 = vpop.xlane.xlu0 %1712
    %v1714 = vrcp.pop %v1710
    %v1715 = vrcp.pop %v1713
    %v1716 = vmul.f32 %v1705, %v1714
    %v1717 = vmul.f32 %v1707, %v1715
    %1718 = vrot.lane.b32.xlu0 %v283, 40
    %v1719 = vpop.permute.xlu0 %1718
    %v1722 = vsel %vm307, %v1716, 0
    %1724 = vmatprep.subr.mxu0 0.0
    %1725 = vmatpush1.msra.mxu0 %v1719
    %1726 = vmatprep.subr.mxu0 0.0
    %1727 = vmatpush1.msra.mxu0 0.0
    %1728 = vmatprep.subr.mxu0 0.0
    %1729 = vmatpush1.msra.mxu0 0.0
    %1730 = vmatprep.subr.mxu0 0.0
    %1731 = vmatpush1.msra.mxu0 0.0
    %1732 = vmatprep.subr.mxu0 0.0
    %1733 = vmatpush1.msra.mxu0 0.0
    %1734 = vmatprep.subr.mxu0 0.0
    %1735 = vmatpush1.msra.mxu0 0.0
    %1736 = vmatprep.subr.mxu0 0.0
    %1737 = vmatpush1.msra.mxu0 0.0
    %1738 = vmatprep.subr.mxu0 0.0
    %1739 = vmatpush1.msra.mxu0 0.0
    %1740 = vmatprep.subr.mxu0 0.0
    %1741 = vmatpush1.msra.mxu0 0.0
    %1742 = vmatprep.subr.mxu0 0.0
    %1743 = vmatpush1.msra.mxu0 0.0
    %1744 = vmatprep.subr.mxu0 0.0
    %1745 = vmatpush1.msra.mxu0 0.0
    %1746 = vmatprep.subr.mxu0 0.0
    %1747 = vmatpush1.msra.mxu0 0.0
    %1748 = vmatprep.subr.mxu0 0.0
    %1749 = vmatpush1.msra.mxu0 0.0
    %1750 = vmatprep.subr.mxu0 0.0
    %1751 = vmatpush1.msra.mxu0 0.0
    %1752 = vmatprep.subr.mxu0 0.0
    %1753 = vmatpush1.msra.mxu0 0.0
    %1754 = vmatprep.subr.mxu0 0.0
    %1755 = vmatpush1.msra.mxu0 0.0
    %1756 = vmatprep.subr.mxu0 0.0
    %1757 = vmatpush1.msra.mxu0 0.0
    %1758 = vmatprep.subr.mxu0 0.0
    %1759 = vmatpush1.msra.mxu0 0.0
    %1760 = vmatprep.subr.mxu0 0.0
    %1761 = vmatpush1.msra.mxu0 0.0
    %1762 = vmatprep.subr.mxu0 0.0
    %1763 = vmatpush1.msra.mxu0 0.0
    %1764 = vmatprep.subr.mxu0 0.0
    %1765 = vmatpush1.msra.mxu0 0.0
    %1766 = vmatprep.subr.mxu0 0.0
    %1767 = vmatpush1.msra.mxu0 0.0
    %1768 = vmatprep.subr.mxu0 0.0
    %1769 = vmatpush1.msra.mxu0 0.0
    %1770 = vmatprep.subr.mxu0 0.0
    %1771 = vmatpush1.msra.mxu0 0.0
    %1772 = vmatprep.subr.mxu0 0.0
    %1773 = vmatpush1.msra.mxu0 0.0
    %1774 = vmatprep.subr.mxu0 0.0
    %1775 = vmatpush1.msra.mxu0 0.0
    %1776 = vmatprep.subr.mxu0 0.0
    %1777 = vmatpush1.msra.mxu0 0.0
    %1778 = vmatprep.subr.mxu0 0.0
    %1779 = vmatpush1.msra.mxu0 0.0
    %1780 = vmatprep.subr.mxu0 0.0
    %1781 = vmatpush1.msra.mxu0 0.0
    %1782 = vmatprep.subr.mxu0 0.0
    %1783 = vmatpush1.msra.mxu0 0.0
    %1784 = vmatprep.subr.mxu0 0.0
    %1785 = vmatpush1.msra.mxu0 0.0
    %1786 = vmatprep.subr.mxu0 0.0
    %1787 = vmatpush1.msra.mxu0 0.0
    %1788 = vmatprep.mubr.f32.mxu0 0.0
    %1789 = vmatmul.mubr.f32.gmra.mrb[0].mxu0 %v1722
    %v1790 = vpop.f32.mrb[0].mxu0
    %v1791 = vadd.f32 0.0, %v1790
    %v1792 = vpop.f32.mrb[0].mxu0
    %1793 = vdwg.mxu0
    %1794 = vrot.lane.b32.xlu0 %v288, 40
    %v1795 = vpop.permute.xlu0 %1794
    %v1798 = vsel %vm307, %v1717, 0
    %1800 = vmatprep.subr.mxu0 0.0
    %1801 = vmatpush1.msra.mxu0 %v1795
    %1802 = vmatprep.subr.mxu0 0.0
    %1803 = vmatpush1.msra.mxu0 0.0
    %1804 = vmatprep.subr.mxu0 0.0
    %1805 = vmatpush1.msra.mxu0 0.0
    %1806 = vmatprep.subr.mxu0 0.0
    %1807 = vmatpush1.msra.mxu0 0.0
    %1808 = vmatprep.subr.mxu0 0.0
    %1809 = vmatpush1.msra.mxu0 0.0
    %1810 = vmatprep.subr.mxu0 0.0
    %1811 = vmatpush1.msra.mxu0 0.0
    %1812 = vmatprep.subr.mxu0 0.0
    %1813 = vmatpush1.msra.mxu0 0.0
    %1814 = vmatprep.subr.mxu0 0.0
    %1815 = vmatpush1.msra.mxu0 0.0
    %1816 = vmatprep.subr.mxu0 0.0
    %1817 = vmatpush1.msra.mxu0 0.0
    %1818 = vmatprep.subr.mxu0 0.0
    %1819 = vmatpush1.msra.mxu0 0.0
    %1820 = vmatprep.subr.mxu0 0.0
    %1821 = vmatpush1.msra.mxu0 0.0
    %1822 = vmatprep.subr.mxu0 0.0
    %1823 = vmatpush1.msra.mxu0 0.0
    %1824 = vmatprep.subr.mxu0 0.0
    %1825 = vmatpush1.msra.mxu0 0.0
    %1826 = vmatprep.subr.mxu0 0.0
    %1827 = vmatpush1.msra.mxu0 0.0
    %1828 = vmatprep.subr.mxu0 0.0
    %1829 = vmatpush1.msra.mxu0 0.0
    %1830 = vmatprep.subr.mxu0 0.0
    %1831 = vmatpush1.msra.mxu0 0.0
    %1832 = vmatprep.subr.mxu0 0.0
    %1833 = vmatpush1.msra.mxu0 0.0
    %1834 = vmatprep.subr.mxu0 0.0
    %1835 = vmatpush1.msra.mxu0 0.0
    %1836 = vmatprep.subr.mxu0 0.0
    %1837 = vmatpush1.msra.mxu0 0.0
    %1838 = vmatprep.subr.mxu0 0.0
    %1839 = vmatpush1.msra.mxu0 0.0
    %1840 = vmatprep.subr.mxu0 0.0
    %1841 = vmatpush1.msra.mxu0 0.0
    %1842 = vmatprep.subr.mxu0 0.0
    %1843 = vmatpush1.msra.mxu0 0.0
    %1844 = vmatprep.subr.mxu0 0.0
    %1845 = vmatpush1.msra.mxu0 0.0
    %1846 = vmatprep.subr.mxu0 0.0
    %1847 = vmatpush1.msra.mxu0 0.0
    %1848 = vmatprep.subr.mxu0 0.0
    %1849 = vmatpush1.msra.mxu0 0.0
    %1850 = vmatprep.subr.mxu0 0.0
    %1851 = vmatpush1.msra.mxu0 0.0
    %1852 = vmatprep.subr.mxu0 0.0
    %1853 = vmatpush1.msra.mxu0 0.0
    %1854 = vmatprep.subr.mxu0 0.0
    %1855 = vmatpush1.msra.mxu0 0.0
    %1856 = vmatprep.subr.mxu0 0.0
    %1857 = vmatpush1.msra.mxu0 0.0
    %1858 = vmatprep.subr.mxu0 0.0
    %1859 = vmatpush1.msra.mxu0 0.0
    %1860 = vmatprep.subr.mxu0 0.0
    %1861 = vmatpush1.msra.mxu0 0.0
    %1862 = vmatprep.subr.mxu0 0.0
    %1863 = vmatpush1.msra.mxu0 0.0
    %1864 = vmatprep.mubr.f32.mxu0 0.0
    %1865 = vmatmul.mubr.f32.gmra.mrb[0].mxu0 %v1798
    %v1866 = vpop.f32.mrb[0].mxu0
    %v1867 = vadd.f32 0.0, %v1866
    %v1868 = vpop.f32.mrb[0].mxu0
    %1869 = vdwg.mxu0
    %v1871 = vsel %vm307, %v1791, 0
    %v1874 = vsel %vm307, %v1867, 0
    %1876 = vmatprep.subr.mxu0 0.0
    %1877 = vmatpush1.msra.mxu0 %v300
    %1878 = vmatprep.subr.mxu0 0.0
    %1879 = vmatpush1.msra.mxu0 0.0
    %1880 = vmatprep.subr.mxu0 0.0
    %1881 = vmatpush1.msra.mxu0 0.0
    %1882 = vmatprep.subr.mxu0 0.0
    %1883 = vmatpush1.msra.mxu0 0.0
    %1884 = vmatprep.subr.mxu0 0.0
    %1885 = vmatpush1.msra.mxu0 0.0
    %1886 = vmatprep.subr.mxu0 0.0
    %1887 = vmatpush1.msra.mxu0 0.0
    %1888 = vmatprep.subr.mxu0 0.0
    %1889 = vmatpush1.msra.mxu0 0.0
    %1890 = vmatprep.subr.mxu0 0.0
    %1891 = vmatpush1.msra.mxu0 0.0
    %1892 = vmatprep.subr.mxu0 0.0
    %1893 = vmatpush1.msra.mxu0 0.0
    %1894 = vmatprep.subr.mxu0 0.0
    %1895 = vmatpush1.msra.mxu0 0.0
    %1896 = vmatprep.subr.mxu0 0.0
    %1897 = vmatpush1.msra.mxu0 0.0
    %1898 = vmatprep.subr.mxu0 0.0
    %1899 = vmatpush1.msra.mxu0 0.0
    %1900 = vmatprep.subr.mxu0 0.0
    %1901 = vmatpush1.msra.mxu0 0.0
    %1902 = vmatprep.subr.mxu0 0.0
    %1903 = vmatpush1.msra.mxu0 0.0
    %1904 = vmatprep.subr.mxu0 0.0
    %1905 = vmatpush1.msra.mxu0 0.0
    %1906 = vmatprep.subr.mxu0 0.0
    %1907 = vmatpush1.msra.mxu0 0.0
    %1908 = vmatprep.subr.mxu0 0.0
    %1909 = vmatpush1.msra.mxu0 0.0
    %1910 = vmatprep.subr.mxu0 0.0
    %1911 = vmatpush1.msra.mxu0 0.0
    %1912 = vmatprep.subr.mxu0 0.0
    %1913 = vmatpush1.msra.mxu0 0.0
    %1914 = vmatprep.subr.mxu0 0.0
    %1915 = vmatpush1.msra.mxu0 0.0
    %1916 = vmatprep.subr.mxu0 0.0
    %1917 = vmatpush1.msra.mxu0 0.0
    %1918 = vmatprep.subr.mxu0 0.0
    %1919 = vmatpush1.msra.mxu0 0.0
    %1920 = vmatprep.subr.mxu0 0.0
    %1921 = vmatpush1.msra.mxu0 0.0
    %1922 = vmatprep.subr.mxu0 0.0
    %1923 = vmatpush1.msra.mxu0 0.0
    %1924 = vmatprep.subr.mxu0 0.0
    %1925 = vmatpush1.msra.mxu0 0.0
    %1926 = vmatprep.subr.mxu0 0.0
    %1927 = vmatpush1.msra.mxu0 0.0
    %1928 = vmatprep.subr.mxu0 0.0
    %1929 = vmatpush1.msra.mxu0 0.0
    %1930 = vmatprep.subr.mxu0 0.0
    %1931 = vmatpush1.msra.mxu0 0.0
    %1932 = vmatprep.subr.mxu0 0.0
    %1933 = vmatpush1.msra.mxu0 0.0
    %1934 = vmatprep.subr.mxu0 0.0
    %1935 = vmatpush1.msra.mxu0 0.0
    %1936 = vmatprep.subr.mxu0 0.0
    %1937 = vmatpush1.msra.mxu0 0.0
    %1938 = vmatprep.subr.mxu0 0.0
    %1939 = vmatpush1.msra.mxu0 0.0
    %1940 = vmatprep.mubr.f32.mxu0 0.0
    %1941 = vmatmul.mubr.f32.gmra.mrb[0].mxu0 %v1871
    %v1942 = vpop.f32.mrb[0].mxu0
    %v1943 = vadd.f32 0.0, %v1942
    %v1944 = vpop.f32.mrb[0].mxu0
    %1945 = vmatprep.mubr.f32.mxu0 0.0
    %1946 = vmatmul.mubr.f32.gmra.mrb[0].mxu0 %v1874
    %v1947 = vpop.f32.mrb[0].mxu0
    %v1948 = vadd.f32 0.0, %v1947
    %v1949 = vpop.f32.mrb[0].mxu0
    %1950 = vdwg.mxu0
    %v1951 = vadd.f32 %v1538, %v1943
    %v1952 = vadd.f32 %v1539, %v1948
    %v1953 = vlaneseq
    %v1954 = vshrl.u32 %v1953, 7
    %v1955 = vsub.s32 0, %v1954
    %v1956 = vrot.slane %v301, %v1955
    %v1957 = vadd.f32 %v1951, %v1956
    %v1958 = vadd.f32 %v1952, %v1956
    %v1959 = vadd.f32 %v141, %v1957
    %v1960 = vadd.f32 %v142, %v1958
    %v1961 = vld [vmem:[%s4 + $0x2] sm:$0x1]
    %v1962 = vld [vmem:[%s4 + $0x3] sm:$0x1]
    %v1963 = vsel %vm161, %v1959, 0.0
    %1964 = vadd.xlane.f32.xlu0 %v1963
    %v1965 = vpop.xlane.xlu0 %1964
    %v1966 = vsel %vm161, %v1960, 0.0
    %1967 = vadd.xlane.f32.xlu0 %v1966
    %v1968 = vpop.xlane.xlu0 %1967
    %v1969 = vmul.f32 %v1965, %v168
    %v1970 = vmul.f32 %v1968, %v168
    %v1971 = vsub.f32 %v1959, %v1969
    %v1972 = vsub.f32 %v1960, %v1970
    %v1973 = vmul.f32 %v1971, %v1971
    %v1974 = vmul.f32 %v1972, %v1972
    %v1975 = vsel %vm161, %v1973, 0.0
    %1976 = vadd.xlane.f32.xlu0 %v1975
    %v1977 = vpop.xlane.xlu0 %1976
    %v1978 = vsel %vm161, %v1974, 0.0
    %1979 = vadd.xlane.f32.xlu0 %v1978
    %v1980 = vpop.xlane.xlu0 %1979
    %v1981 = vmul.f32 %v1977, %v168
    %v1982 = vmul.f32 %v1980, %v168
    %v1983 = vadd.f32 %v1981, 1e-05
    %v1984 = vadd.f32 %v1982, 1e-05
    %v1985 = vrsqrt.pop %v1983
    %v1986 = vrsqrt.pop %v1984
    %v1987 = vmul.f32 %v1971, %v1985
    %v1988 = vmul.f32 %v1972, %v1986
    %v1989 = vlaneseq
    %v1990 = vshrl.u32 %v1989, 7
    %v1991 = vsub.s32 0, %v1990
    %v1992 = vrot.slane %v1961, %v1991
    %v1993 = vmul.f32 %v1987, %v1992
    %v1994 = vmul.f32 %v1988, %v1992
    %v1995 = vlaneseq
    %v1996 = vshrl.u32 %v1995, 7
    %v1997 = vsub.s32 0, %v1996
    %v1998 = vrot.slane %v1962, %v1997
    %v1999 = vadd.f32 %v1993, %v1998
    %v2000 = vadd.f32 %v1994, %v1998
    %s2001 = scalar_lea.vmem %s5, 32
    %v2002 = vld [vmem:[%s2001] sm:$0xff]
    %v2003 = vld [vmem:[%s2001 + $0x8] sm:$0xff]
    %v2004 = vld [vmem:[%s2001 + $0x10] sm:$0xff]
    %v2005 = vld [vmem:[%s2001 + $0x18] sm:$0xff]
    %v2006 = vld [vmem:[#allocation7 + $0x1] sm:$0x1]
    %v2007 = vlaneseq
    %v2008 = vshrl.u32 %v2007, 7
    %v2009 = vsub.s32 0, %v2008
    %v2010 = vrot.slane %v2006, %v2009
    %v2012 = vsel %vm161, %v1999, 0
    %v2015 = vsel %vm161, %v2000, 0
    %2017 = vmatprep.subr.mxu0 0.0
    %2018 = vmatpush1.msra.mxu0 %v2002
    %2019 = vmatprep.subr.mxu0 0.0
    %2020 = vmatpush1.msra.mxu0 %v2003
    %2021 = vmatprep.subr.mxu0 0.0
    %2022 = vmatpush1.msra.mxu0 %v2004
    %2023 = vmatprep.subr.mxu0 0.0
    %2024 = vmatpush1.msra.mxu0 %v2005
    %2025 = vmatprep.subr.mxu0 0.0
    %2026 = vmatpush1.msra.mxu0 0.0
    %2027 = vmatprep.subr.mxu0 0.0
    %2028 = vmatpush1.msra.mxu0 0.0
    %2029 = vmatprep.subr.mxu0 0.0
    %2030 = vmatpush1.msra.mxu0 0.0
    %2031 = vmatprep.subr.mxu0 0.0
    %2032 = vmatpush1.msra.mxu0 0.0
    %2033 = vmatprep.subr.mxu0 0.0
    %2034 = vmatpush1.msra.mxu0 0.0
    %2035 = vmatprep.subr.mxu0 0.0
    %2036 = vmatpush1.msra.mxu0 0.0
    %2037 = vmatprep.subr.mxu0 0.0
    %2038 = vmatpush1.msra.mxu0 0.0
    %2039 = vmatprep.subr.mxu0 0.0
    %2040 = vmatpush1.msra.mxu0 0.0
    %2041 = vmatprep.subr.mxu0 0.0
    %2042 = vmatpush1.msra.mxu0 0.0
    %2043 = vmatprep.subr.mxu0 0.0
    %2044 = vmatpush1.msra.mxu0 0.0
    %2045 = vmatprep.subr.mxu0 0.0
    %2046 = vmatpush1.msra.mxu0 0.0
    %2047 = vmatprep.subr.mxu0 0.0
    %2048 = vmatpush1.msra.mxu0 0.0
    %2049 = vmatprep.subr.mxu0 0.0
    %2050 = vmatpush1.msra.mxu0 0.0
    %2051 = vmatprep.subr.mxu0 0.0
    %2052 = vmatpush1.msra.mxu0 0.0
    %2053 = vmatprep.subr.mxu0 0.0
    %2054 = vmatpush1.msra.mxu0 0.0
    %2055 = vmatprep.subr.mxu0 0.0
    %2056 = vmatpush1.msra.mxu0 0.0
    %2057 = vmatprep.subr.mxu0 0.0
    %2058 = vmatpush1.msra.mxu0 0.0
    %2059 = vmatprep.subr.mxu0 0.0
    %2060 = vmatpush1.msra.mxu0 0.0
    %2061 = vmatprep.subr.mxu0 0.0
    %2062 = vmatpush1.msra.mxu0 0.0
    %2063 = vmatprep.subr.mxu0 0.0
    %2064 = vmatpush1.msra.mxu0 0.0
    %2065 = vmatprep.subr.mxu0 0.0
    %2066 = vmatpush1.msra.mxu0 0.0
    %2067 = vmatprep.subr.mxu0 0.0
    %2068 = vmatpush1.msra.mxu0 0.0
    %2069 = vmatprep.subr.mxu0 0.0
    %2070 = vmatpush1.msra.mxu0 0.0
    %2071 = vmatprep.subr.mxu0 0.0
    %2072 = vmatpush1.msra.mxu0 0.0
    %2073 = vmatprep.subr.mxu0 0.0
    %2074 = vmatpush1.msra.mxu0 0.0
    %2075 = vmatprep.subr.mxu0 0.0
    %2076 = vmatpush1.msra.mxu0 0.0
    %2077 = vmatprep.subr.mxu0 0.0
    %2078 = vmatpush1.msra.mxu0 0.0
    %2079 = vmatprep.subr.mxu0 0.0
    %2080 = vmatpush1.msra.mxu0 0.0
    %2081 = vmatprep.mubr.f32.mxu0 0.0
    %2082 = vmatmul.mubr.f32.gmra.mrb[0].mxu0 %v2012
    %v2083 = vpop.f32.mrb[0].mxu0
    %v2084 = vadd.f32 %v2010, %v2083
    %v2085 = vpop.f32.mrb[0].mxu0
    %2086 = vmatprep.mubr.f32.mxu0 0.0
    %2087 = vmatmul.mubr.f32.gmra.mrb[0].mxu0 %v2015
    %v2088 = vpop.f32.mrb[0].mxu0
    %v2089 = vadd.f32 %v2010, %v2088
    %v2090 = vpop.f32.mrb[0].mxu0
    %2091 = vdwg.mxu0
    %2096 = vrot.lane.b32.xlu0 %v2002, 96
    %v2097 = vpop.permute.xlu0 %2096
    %2098 = vrot.lane.b32.xlu0 %v2003, 96
    %v2099 = vpop.permute.xlu0 %2098
    %2100 = vrot.lane.b32.xlu0 %v2004, 96
    %v2101 = vpop.permute.xlu0 %2100
    %2102 = vrot.lane.b32.xlu0 %v2005, 96
    %v2103 = vpop.permute.xlu0 %2102
    %2109 = vrot.lane.b32.xlu0 %v2010, 96
    %v2110 = vpop.permute.xlu0 %2109
    %v2113 = vsel %vm161, %v143, 0
    %v2116 = vsel %vm161, %v144, 0
    %v2119 = vsel %vm161, %v145, 0
    %v2122 = vsel %vm161, %v146, 0
    %2124 = vmatprep.subr.mxu0 0.0
    %2125 = vmatpush1.msra.mxu0 %v2097
    %2126 = vmatprep.subr.mxu0 0.0
    %2127 = vmatpush1.msra.mxu0 %v2099
    %2128 = vmatprep.subr.mxu0 0.0
    %2129 = vmatpush1.msra.mxu0 %v2101
    %2130 = vmatprep.subr.mxu0 0.0
    %2131 = vmatpush1.msra.mxu0 %v2103
    %2132 = vmatprep.subr.mxu0 0.0
    %2133 = vmatpush1.msra.mxu0 0.0
    %2134 = vmatprep.subr.mxu0 0.0
    %2135 = vmatpush1.msra.mxu0 0.0
    %2136 = vmatprep.subr.mxu0 0.0
    %2137 = vmatpush1.msra.mxu0 0.0
    %2138 = vmatprep.subr.mxu0 0.0
    %2139 = vmatpush1.msra.mxu0 0.0
    %2140 = vmatprep.subr.mxu0 0.0
    %2141 = vmatpush1.msra.mxu0 0.0
    %2142 = vmatprep.subr.mxu0 0.0
    %2143 = vmatpush1.msra.mxu0 0.0
    %2144 = vmatprep.subr.mxu0 0.0
    %2145 = vmatpush1.msra.mxu0 0.0
    %2146 = vmatprep.subr.mxu0 0.0
    %2147 = vmatpush1.msra.mxu0 0.0
    %2148 = vmatprep.subr.mxu0 0.0
    %2149 = vmatpush1.msra.mxu0 0.0
    %2150 = vmatprep.subr.mxu0 0.0
    %2151 = vmatpush1.msra.mxu0 0.0
    %2152 = vmatprep.subr.mxu0 0.0
    %2153 = vmatpush1.msra.mxu0 0.0
    %2154 = vmatprep.subr.mxu0 0.0
    %2155 = vmatpush1.msra.mxu0 0.0
    %2156 = vmatprep.subr.mxu0 0.0
    %2157 = vmatpush1.msra.mxu0 0.0
    %2158 = vmatprep.subr.mxu0 0.0
    %2159 = vmatpush1.msra.mxu0 0.0
    %2160 = vmatprep.subr.mxu0 0.0
    %2161 = vmatpush1.msra.mxu0 0.0
    %2162 = vmatprep.subr.mxu0 0.0
    %2163 = vmatpush1.msra.mxu0 0.0
    %2164 = vmatprep.subr.mxu0 0.0
    %2165 = vmatpush1.msra.mxu0 0.0
    %2166 = vmatprep.subr.mxu0 0.0
    %2167 = vmatpush1.msra.mxu0 0.0
    %2168 = vmatprep.subr.mxu0 0.0
    %2169 = vmatpush1.msra.mxu0 0.0
    %2170 = vmatprep.subr.mxu0 0.0
    %2171 = vmatpush1.msra.mxu0 0.0
    %2172 = vmatprep.subr.mxu0 0.0
    %2173 = vmatpush1.msra.mxu0 0.0
    %2174 = vmatprep.subr.mxu0 0.0
    %2175 = vmatpush1.msra.mxu0 0.0
    %2176 = vmatprep.subr.mxu0 0.0
    %2177 = vmatpush1.msra.mxu0 0.0
    %2178 = vmatprep.subr.mxu0 0.0
    %2179 = vmatpush1.msra.mxu0 0.0
    %2180 = vmatprep.subr.mxu0 0.0
    %2181 = vmatpush1.msra.mxu0 0.0
    %2182 = vmatprep.subr.mxu0 0.0
    %2183 = vmatpush1.msra.mxu0 0.0
    %2184 = vmatprep.subr.mxu0 0.0
    %2185 = vmatpush1.msra.mxu0 0.0
    %2186 = vmatprep.subr.mxu0 0.0
    %2187 = vmatpush1.msra.mxu0 0.0
    %2188 = vmatprep.mubr.f32.mxu0 0.0
    %2189 = vmatmul.mubr.f32.gmra.mrb[0].mxu0 %v2113
    %v2190 = vpop.f32.mrb[0].mxu0
    %v2191 = vadd.f32 %v2110, %v2190
    %v2192 = vpop.f32.mrb[0].mxu0
    %2193 = vmatprep.mubr.f32.mxu0 0.0
    %2194 = vmatmul.mubr.f32.gmra.mrb[0].mxu0 %v2116
    %v2195 = vpop.f32.mrb[0].mxu0
    %v2196 = vadd.f32 %v2110, %v2195
    %v2197 = vpop.f32.mrb[0].mxu0
    %2198 = vmatprep.mubr.f32.mxu0 0.0
    %2199 = vmatmul.mubr.f32.gmra.mrb[0].mxu0 %v2119
    %v2200 = vpop.f32.mrb[0].mxu0
    %v2201 = vadd.f32 %v2110, %v2200
    %v2202 = vpop.f32.mrb[0].mxu0
    %2203 = vmatprep.mubr.f32.mxu0 0.0
    %2204 = vmatmul.mubr.f32.gmra.mrb[0].mxu0 %v2122
    %v2205 = vpop.f32.mrb[0].mxu0
    %v2206 = vadd.f32 %v2110, %v2205
    %v2207 = vpop.f32.mrb[0].mxu0
    %2208 = vdwg.mxu0
    %2209 = vst.msk [vmem:[%s13 + $0x10] sm:$0xff] %vm161, %v2191
    %2210 = vst.msk [vmem:[%s13 + $0x18] sm:$0xff] %vm161, %v2196
    %2211 = vst.msk [vmem:[%s13 + $0x20] sm:$0xff] %vm161, %v2201
    %2212 = vst.msk [vmem:[%s13 + $0x28] sm:$0xff] %vm161, %v2206
    %2213 = vst.msk [vmem:[%s13 + $0x10] sm:$0xff] %vm291, %v2191
    %2214 = vst.msk [vmem:[%s13 + $0x18] sm:$0xff] %vm291, %v2196
    %2215 = vst.msk [vmem:[%s13 + $0x20] sm:$0xff] %vm291, %v2201
    %2216 = vst.msk [vmem:[%s13 + $0x28] sm:$0xff] %vm291, %v2206
    %s2217 = scalar_lea.vmem [#allocation9], 32
    %v2218 = vld [vmem:[%s2217] sm:$0xff]
    %v2219 = vld [vmem:[%s2217 + $0x8] sm:$0xff]
    %v2220 = vld [vmem:[%s2217 + $0x10] sm:$0xff]
    %v2221 = vld [vmem:[%s2217 + $0x18] sm:$0xff]
    %v2222 = vld [vmem:[#allocation10 + $0x1] sm:$0x1]
    %v2223 = vmul.f32 %v2084, 0.35355338
    %v2224 = vmul.f32 %v2089, 0.35355338
    %v2226 = vsel %vm307, %v2223, 0
    %v2229 = vsel %vm307, %v2191, 0
    %v2232 = vsel %vm307, %v2196, 0
    %2234 = vmatprep.subr.mxu0 0.0
    %2235 = vmatpush1.xpose.msra.mxu0 %v2229
    %2236 = vmatprep.subr.mxu0 0.0
    %2237 = vmatpush1.xpose.msra.mxu0 %v2232
    %2238 = vmatprep.subr.mxu0 0.0
    %2239 = vmatpush1.xpose.msra.mxu0 0.0
    %2240 = vmatprep.subr.mxu0 0.0
    %2241 = vmatpush1.xpose.msra.mxu0 0.0
    %2242 = vmatprep.subr.mxu0 0.0
    %2243 = vmatpush1.xpose.msra.mxu0 0.0
    %2244 = vmatprep.subr.mxu0 0.0
    %2245 = vmatpush1.xpose.msra.mxu0 0.0
    %2246 = vmatprep.subr.mxu0 0.0
    %2247 = vmatpush1.xpose.msra.mxu0 0.0
    %2248 = vmatprep.subr.mxu0 0.0
    %2249 = vmatpush1.xpose.msra.mxu0 0.0
    %2250 = vmatprep.subr.mxu0 0.0
    %2251 = vmatpush1.xpose.msra.mxu0 0.0
    %2252 = vmatprep.subr.mxu0 0.0
    %2253 = vmatpush1.xpose.msra.mxu0 0.0
    %2254 = vmatprep.subr.mxu0 0.0
    %2255 = vmatpush1.xpose.msra.mxu0 0.0
    %2256 = vmatprep.subr.mxu0 0.0
    %2257 = vmatpush1.xpose.msra.mxu0 0.0
    %2258 = vmatprep.subr.mxu0 0.0
    %2259 = vmatpush1.xpose.msra.mxu0 0.0
    %2260 = vmatprep.subr.mxu0 0.0
    %2261 = vmatpush1.xpose.msra.mxu0 0.0
    %2262 = vmatprep.subr.mxu0 0.0
    %2263 = vmatpush1.xpose.msra.mxu0 0.0
    %2264 = vmatprep.subr.mxu0 0.0
    %2265 = vmatpush1.xpose.msra.mxu0 0.0
    %2266 = vmatprep.subr.mxu0 0.0
    %2267 = vmatpush1.xpose.msra.mxu0 0.0
    %2268 = vmatprep.subr.mxu0 0.0
    %2269 = vmatpush1.xpose.msra.mxu0 0.0
    %2270 = vmatprep.subr.mxu0 0.0
    %2271 = vmatpush1.xpose.msra.mxu0 0.0
    %2272 = vmatprep.subr.mxu0 0.0
    %2273 = vmatpush1.xpose.msra.mxu0 0.0
    %2274 = vmatprep.subr.mxu0 0.0
    %2275 = vmatpush1.xpose.msra.mxu0 0.0
    %2276 = vmatprep.subr.mxu0 0.0
    %2277 = vmatpush1.xpose.msra.mxu0 0.0
    %2278 = vmatprep.subr.mxu0 0.0
    %2279 = vmatpush1.xpose.msra.mxu0 0.0
    %2280 = vmatprep.subr.mxu0 0.0
    %2281 = vmatpush1.xpose.msra.mxu0 0.0
    %2282 = vmatprep.subr.mxu0 0.0
    %2283 = vmatpush1.xpose.msra.mxu0 0.0
    %2284 = vmatprep.subr.mxu0 0.0
    %2285 = vmatpush1.xpose.msra.mxu0 0.0
    %2286 = vmatprep.subr.mxu0 0.0
    %2287 = vmatpush1.xpose.msra.mxu0 0.0
    %2288 = vmatprep.subr.mxu0 0.0
    %2289 = vmatpush1.xpose.msra.mxu0 0.0
    %2290 = vmatprep.subr.mxu0 0.0
    %2291 = vmatpush1.xpose.msra.mxu0 0.0
    %2292 = vmatprep.subr.mxu0 0.0
    %2293 = vmatpush1.xpose.msra.mxu0 0.0
    %2294 = vmatprep.subr.mxu0 0.0
    %2295 = vmatpush1.xpose.msra.mxu0 0.0
    %2296 = vmatprep.subr.mxu0 0.0
    %2297 = vmatpush1.xpose.msra.mxu0 0.0
    %2298 = vmatprep.mubr.f32.mxu0 0.0
    %2299 = vmatmul.mubr.f32.gmra.mrb[0].mxu0 %v2226
    %v2300 = vpop.f32.mrb[0].mxu0
    %v2301 = vadd.f32 %v157, %v2300
    %v2302 = vpop.f32.mrb[0].mxu0
    %2303 = vdwg.mxu0
    %v2305 = vsel %vm307, %v2224, 0
    %v2308 = vsel %vm307, %v2201, 0
    %v2311 = vsel %vm307, %v2206, 0
    %2313 = vmatprep.subr.mxu0 0.0
    %2314 = vmatpush1.xpose.msra.mxu0 %v2308
    %2315 = vmatprep.subr.mxu0 0.0
    %2316 = vmatpush1.xpose.msra.mxu0 %v2311
    %2317 = vmatprep.subr.mxu0 0.0
    %2318 = vmatpush1.xpose.msra.mxu0 0.0
    %2319 = vmatprep.subr.mxu0 0.0
    %2320 = vmatpush1.xpose.msra.mxu0 0.0
    %2321 = vmatprep.subr.mxu0 0.0
    %2322 = vmatpush1.xpose.msra.mxu0 0.0
    %2323 = vmatprep.subr.mxu0 0.0
    %2324 = vmatpush1.xpose.msra.mxu0 0.0
    %2325 = vmatprep.subr.mxu0 0.0
    %2326 = vmatpush1.xpose.msra.mxu0 0.0
    %2327 = vmatprep.subr.mxu0 0.0
    %2328 = vmatpush1.xpose.msra.mxu0 0.0
    %2329 = vmatprep.subr.mxu0 0.0
    %2330 = vmatpush1.xpose.msra.mxu0 0.0
    %2331 = vmatprep.subr.mxu0 0.0
    %2332 = vmatpush1.xpose.msra.mxu0 0.0
    %2333 = vmatprep.subr.mxu0 0.0
    %2334 = vmatpush1.xpose.msra.mxu0 0.0
    %2335 = vmatprep.subr.mxu0 0.0
    %2336 = vmatpush1.xpose.msra.mxu0 0.0
    %2337 = vmatprep.subr.mxu0 0.0
    %2338 = vmatpush1.xpose.msra.mxu0 0.0
    %2339 = vmatprep.subr.mxu0 0.0
    %2340 = vmatpush1.xpose.msra.mxu0 0.0
    %2341 = vmatprep.subr.mxu0 0.0
    %2342 = vmatpush1.xpose.msra.mxu0 0.0
    %2343 = vmatprep.subr.mxu0 0.0
    %2344 = vmatpush1.xpose.msra.mxu0 0.0
    %2345 = vmatprep.subr.mxu0 0.0
    %2346 = vmatpush1.xpose.msra.mxu0 0.0
    %2347 = vmatprep.subr.mxu0 0.0
    %2348 = vmatpush1.xpose.msra.mxu0 0.0
    %2349 = vmatprep.subr.mxu0 0.0
    %2350 = vmatpush1.xpose.msra.mxu0 0.0
    %2351 = vmatprep.subr.mxu0 0.0
    %2352 = vmatpush1.xpose.msra.mxu0 0.0
    %2353 = vmatprep.subr.mxu0 0.0
    %2354 = vmatpush1.xpose.msra.mxu0 0.0
    %2355 = vmatprep.subr.mxu0 0.0
    %2356 = vmatpush1.xpose.msra.mxu0 0.0
    %2357 = vmatprep.subr.mxu0 0.0
    %2358 = vmatpush1.xpose.msra.mxu0 0.0
    %2359 = vmatprep.subr.mxu0 0.0
    %2360 = vmatpush1.xpose.msra.mxu0 0.0
    %2361 = vmatprep.subr.mxu0 0.0
    %2362 = vmatpush1.xpose.msra.mxu0 0.0
    %2363 = vmatprep.subr.mxu0 0.0
    %2364 = vmatpush1.xpose.msra.mxu0 0.0
    %2365 = vmatprep.subr.mxu0 0.0
    %2366 = vmatpush1.xpose.msra.mxu0 0.0
    %2367 = vmatprep.subr.mxu0 0.0
    %2368 = vmatpush1.xpose.msra.mxu0 0.0
    %2369 = vmatprep.subr.mxu0 0.0
    %2370 = vmatpush1.xpose.msra.mxu0 0.0
    %2371 = vmatprep.subr.mxu0 0.0
    %2372 = vmatpush1.xpose.msra.mxu0 0.0
    %2373 = vmatprep.subr.mxu0 0.0
    %2374 = vmatpush1.xpose.msra.mxu0 0.0
    %2375 = vmatprep.subr.mxu0 0.0
    %2376 = vmatpush1.xpose.msra.mxu0 0.0
    %2377 = vmatprep.mubr.f32.mxu0 0.0
    %2378 = vmatmul.mubr.f32.gmra.mrb[0].mxu0 %v2305
    %v2379 = vpop.f32.mrb[0].mxu0
    %v2380 = vadd.f32 %v158, %v2379
    %v2381 = vpop.f32.mrb[0].mxu0
    %2382 = vdwg.mxu0
    %vm2383 = vcmask 130048
    %v2384 = vsel %vm2383, %v2301, -inf
    %2385 = vmax.xlane.f32.xlu0 %v2384
    %v2386 = vpop.xlane.xlu0 %2385
    %v2387 = vsel %vm2383, %v2380, -inf
    %2388 = vmax.xlane.f32.xlu0 %v2387
    %v2389 = vpop.xlane.xlu0 %2388
    %v2390 = vsub.f32 %v2301, %v2386
    %v2391 = vsub.f32 %v2380, %v2389
    %v2392 = vmul.f32 %v2390, 1.442695
    %v2393 = vpow.pop %v2392
    %v2394 = vmul.f32 %v2391, 1.442695
    %v2395 = vpow.pop %v2394
    %v2396 = vsel %vm2383, %v2393, 0.0
    %2397 = vadd.xlane.f32.xlu0 %v2396
    %v2398 = vpop.xlane.xlu0 %2397
    %v2399 = vsel %vm2383, %v2395, 0.0
    %2400 = vadd.xlane.f32.xlu0 %v2399
    %v2401 = vpop.xlane.xlu0 %2400
    %v2402 = vrcp.pop %v2398
    %v2403 = vrcp.pop %v2401
    %v2404 = vmul.f32 %v2393, %v2402
    %v2405 = vmul.f32 %v2395, %v2403
    %2406 = vrot.lane.b32.xlu0 %v2191, 96
    %v2407 = vpop.permute.xlu0 %2406
    %2408 = vrot.lane.b32.xlu0 %v2196, 96
    %v2409 = vpop.permute.xlu0 %2408
    %v2413 = vsel %vm2383, %v2404, 0
    %2415 = vmatprep.subr.mxu0 0.0
    %2416 = vmatpush1.msra.mxu0 %v2407
    %2417 = vmatprep.subr.mxu0 0.0
    %2418 = vmatpush1.msra.mxu0 %v2409
    %2419 = vmatprep.subr.mxu0 0.0
    %2420 = vmatpush1.msra.mxu0 0.0
    %2421 = vmatprep.subr.mxu0 0.0
    %2422 = vmatpush1.msra.mxu0 0.0
    %2423 = vmatprep.subr.mxu0 0.0
    %2424 = vmatpush1.msra.mxu0 0.0
    %2425 = vmatprep.subr.mxu0 0.0
    %2426 = vmatpush1.msra.mxu0 0.0
    %2427 = vmatprep.subr.mxu0 0.0
    %2428 = vmatpush1.msra.mxu0 0.0
    %2429 = vmatprep.subr.mxu0 0.0
    %2430 = vmatpush1.msra.mxu0 0.0
    %2431 = vmatprep.subr.mxu0 0.0
    %2432 = vmatpush1.msra.mxu0 0.0
    %2433 = vmatprep.subr.mxu0 0.0
    %2434 = vmatpush1.msra.mxu0 0.0
    %2435 = vmatprep.subr.mxu0 0.0
    %2436 = vmatpush1.msra.mxu0 0.0
    %2437 = vmatprep.subr.mxu0 0.0
    %2438 = vmatpush1.msra.mxu0 0.0
    %2439 = vmatprep.subr.mxu0 0.0
    %2440 = vmatpush1.msra.mxu0 0.0
    %2441 = vmatprep.subr.mxu0 0.0
    %2442 = vmatpush1.msra.mxu0 0.0
    %2443 = vmatprep.subr.mxu0 0.0
    %2444 = vmatpush1.msra.mxu0 0.0
    %2445 = vmatprep.subr.mxu0 0.0
    %2446 = vmatpush1.msra.mxu0 0.0
    %2447 = vmatprep.subr.mxu0 0.0
    %2448 = vmatpush1.msra.mxu0 0.0
    %2449 = vmatprep.subr.mxu0 0.0
    %2450 = vmatpush1.msra.mxu0 0.0
    %2451 = vmatprep.subr.mxu0 0.0
    %2452 = vmatpush1.msra.mxu0 0.0
    %2453 = vmatprep.subr.mxu0 0.0
    %2454 = vmatpush1.msra.mxu0 0.0
    %2455 = vmatprep.subr.mxu0 0.0
    %2456 = vmatpush1.msra.mxu0 0.0
    %2457 = vmatprep.subr.mxu0 0.0
    %2458 = vmatpush1.msra.mxu0 0.0
    %2459 = vmatprep.subr.mxu0 0.0
    %2460 = vmatpush1.msra.mxu0 0.0
    %2461 = vmatprep.subr.mxu0 0.0
    %2462 = vmatpush1.msra.mxu0 0.0
    %2463 = vmatprep.subr.mxu0 0.0
    %2464 = vmatpush1.msra.mxu0 0.0
    %2465 = vmatprep.subr.mxu0 0.0
    %2466 = vmatpush1.msra.mxu0 0.0
    %2467 = vmatprep.subr.mxu0 0.0
    %2468 = vmatpush1.msra.mxu0 0.0
    %2469 = vmatprep.subr.mxu0 0.0
    %2470 = vmatpush1.msra.mxu0 0.0
    %2471 = vmatprep.subr.mxu0 0.0
    %2472 = vmatpush1.msra.mxu0 0.0
    %2473 = vmatprep.subr.mxu0 0.0
    %2474 = vmatpush1.msra.mxu0 0.0
    %2475 = vmatprep.subr.mxu0 0.0
    %2476 = vmatpush1.msra.mxu0 0.0
    %2477 = vmatprep.subr.mxu0 0.0
    %2478 = vmatpush1.msra.mxu0 0.0
    %2479 = vmatprep.mubr.f32.mxu0 0.0
    %2480 = vmatmul.mubr.f32.gmra.mrb[0].mxu0 %v2413
    %v2481 = vpop.f32.mrb[0].mxu0
    %v2482 = vadd.f32 0.0, %v2481
    %v2483 = vpop.f32.mrb[0].mxu0
    %2484 = vdwg.mxu0
    %2485 = vrot.lane.b32.xlu0 %v2201, 96
    %v2486 = vpop.permute.xlu0 %2485
    %2487 = vrot.lane.b32.xlu0 %v2206, 96
    %v2488 = vpop.permute.xlu0 %2487
    %v2492 = vsel %vm2383, %v2405, 0
    %2494 = vmatprep.subr.mxu0 0.0
    %2495 = vmatpush1.msra.mxu0 %v2486
    %2496 = vmatprep.subr.mxu0 0.0
    %2497 = vmatpush1.msra.mxu0 %v2488
    %2498 = vmatprep.subr.mxu0 0.0
    %2499 = vmatpush1.msra.mxu0 0.0
    %2500 = vmatprep.subr.mxu0 0.0
    %2501 = vmatpush1.msra.mxu0 0.0
    %2502 = vmatprep.subr.mxu0 0.0
    %2503 = vmatpush1.msra.mxu0 0.0
    %2504 = vmatprep.subr.mxu0 0.0
    %2505 = vmatpush1.msra.mxu0 0.0
    %2506 = vmatprep.subr.mxu0 0.0
    %2507 = vmatpush1.msra.mxu0 0.0
    %2508 = vmatprep.subr.mxu0 0.0
    %2509 = vmatpush1.msra.mxu0 0.0
    %2510 = vmatprep.subr.mxu0 0.0
    %2511 = vmatpush1.msra.mxu0 0.0
    %2512 = vmatprep.subr.mxu0 0.0
    %2513 = vmatpush1.msra.mxu0 0.0
    %2514 = vmatprep.subr.mxu0 0.0
    %2515 = vmatpush1.msra.mxu0 0.0
    %2516 = vmatprep.subr.mxu0 0.0
    %2517 = vmatpush1.msra.mxu0 0.0
    %2518 = vmatprep.subr.mxu0 0.0
    %2519 = vmatpush1.msra.mxu0 0.0
    %2520 = vmatprep.subr.mxu0 0.0
    %2521 = vmatpush1.msra.mxu0 0.0
    %2522 = vmatprep.subr.mxu0 0.0
    %2523 = vmatpush1.msra.mxu0 0.0
    %2524 = vmatprep.subr.mxu0 0.0
    %2525 = vmatpush1.msra.mxu0 0.0
    %2526 = vmatprep.subr.mxu0 0.0
    %2527 = vmatpush1.msra.mxu0 0.0
    %2528 = vmatprep.subr.mxu0 0.0
    %2529 = vmatpush1.msra.mxu0 0.0
    %2530 = vmatprep.subr.mxu0 0.0
    %2531 = vmatpush1.msra.mxu0 0.0
    %2532 = vmatprep.subr.mxu0 0.0
    %2533 = vmatpush1.msra.mxu0 0.0
    %2534 = vmatprep.subr.mxu0 0.0
    %2535 = vmatpush1.msra.mxu0 0.0
    %2536 = vmatprep.subr.mxu0 0.0
    %2537 = vmatpush1.msra.mxu0 0.0
    %2538 = vmatprep.subr.mxu0 0.0
    %2539 = vmatpush1.msra.mxu0 0.0
    %2540 = vmatprep.subr.mxu0 0.0
    %2541 = vmatpush1.msra.mxu0 0.0
    %2542 = vmatprep.subr.mxu0 0.0
    %2543 = vmatpush1.msra.mxu0 0.0
    %2544 = vmatprep.subr.mxu0 0.0
    %2545 = vmatpush1.msra.mxu0 0.0
    %2546 = vmatprep.subr.mxu0 0.0
    %2547 = vmatpush1.msra.mxu0 0.0
    %2548 = vmatprep.subr.mxu0 0.0
    %2549 = vmatpush1.msra.mxu0 0.0
    %2550 = vmatprep.subr.mxu0 0.0
    %2551 = vmatpush1.msra.mxu0 0.0
    %2552 = vmatprep.subr.mxu0 0.0
    %2553 = vmatpush1.msra.mxu0 0.0
    %2554 = vmatprep.subr.mxu0 0.0
    %2555 = vmatpush1.msra.mxu0 0.0
    %2556 = vmatprep.subr.mxu0 0.0
    %2557 = vmatpush1.msra.mxu0 0.0
    %2558 = vmatprep.mubr.f32.mxu0 0.0
    %2559 = vmatmul.mubr.f32.gmra.mrb[0].mxu0 %v2492
    %v2560 = vpop.f32.mrb[0].mxu0
    %v2561 = vadd.f32 0.0, %v2560
    %v2562 = vpop.f32.mrb[0].mxu0
    %2563 = vdwg.mxu0
    %2564 = vrot.lane.b32.xlu0 %v2223, 120
    %v2565 = vpop.permute.xlu0 %2564
    %2566 = vrot.lane.b32.xlu0 %v2191, 120
    %v2567 = vpop.permute.xlu0 %2566
    %2568 = vrot.lane.b32.xlu0 %v2196, 120
    %v2569 = vpop.permute.xlu0 %2568
    %v2570 = vsel %vm307, %v2565, 0
    %v2572 = vsel %vm307, %v2567, 0
    %v2574 = vsel %vm307, %v2569, 0
    %2576 = vmatprep.subr.mxu0 0.0
    %2577 = vmatpush1.xpose.msra.mxu0 %v2572
    %2578 = vmatprep.subr.mxu0 0.0
    %2579 = vmatpush1.xpose.msra.mxu0 %v2574
    %2580 = vmatprep.subr.mxu0 0.0
    %2581 = vmatpush1.xpose.msra.mxu0 0.0
    %2582 = vmatprep.subr.mxu0 0.0
    %2583 = vmatpush1.xpose.msra.mxu0 0.0
    %2584 = vmatprep.subr.mxu0 0.0
    %2585 = vmatpush1.xpose.msra.mxu0 0.0
    %2586 = vmatprep.subr.mxu0 0.0
    %2587 = vmatpush1.xpose.msra.mxu0 0.0
    %2588 = vmatprep.subr.mxu0 0.0
    %2589 = vmatpush1.xpose.msra.mxu0 0.0
    %2590 = vmatprep.subr.mxu0 0.0
    %2591 = vmatpush1.xpose.msra.mxu0 0.0
    %2592 = vmatprep.subr.mxu0 0.0
    %2593 = vmatpush1.xpose.msra.mxu0 0.0
    %2594 = vmatprep.subr.mxu0 0.0
    %2595 = vmatpush1.xpose.msra.mxu0 0.0
    %2596 = vmatprep.subr.mxu0 0.0
    %2597 = vmatpush1.xpose.msra.mxu0 0.0
    %2598 = vmatprep.subr.mxu0 0.0
    %2599 = vmatpush1.xpose.msra.mxu0 0.0
    %2600 = vmatprep.subr.mxu0 0.0
    %2601 = vmatpush1.xpose.msra.mxu0 0.0
    %2602 = vmatprep.subr.mxu0 0.0
    %2603 = vmatpush1.xpose.msra.mxu0 0.0
    %2604 = vmatprep.subr.mxu0 0.0
    %2605 = vmatpush1.xpose.msra.mxu0 0.0
    %2606 = vmatprep.subr.mxu0 0.0
    %2607 = vmatpush1.xpose.msra.mxu0 0.0
    %2608 = vmatprep.subr.mxu0 0.0
    %2609 = vmatpush1.xpose.msra.mxu0 0.0
    %2610 = vmatprep.subr.mxu0 0.0
    %2611 = vmatpush1.xpose.msra.mxu0 0.0
    %2612 = vmatprep.subr.mxu0 0.0
    %2613 = vmatpush1.xpose.msra.mxu0 0.0
    %2614 = vmatprep.subr.mxu0 0.0
    %2615 = vmatpush1.xpose.msra.mxu0 0.0
    %2616 = vmatprep.subr.mxu0 0.0
    %2617 = vmatpush1.xpose.msra.mxu0 0.0
    %2618 = vmatprep.subr.mxu0 0.0
    %2619 = vmatpush1.xpose.msra.mxu0 0.0
    %2620 = vmatprep.subr.mxu0 0.0
    %2621 = vmatpush1.xpose.msra.mxu0 0.0
    %2622 = vmatprep.subr.mxu0 0.0
    %2623 = vmatpush1.xpose.msra.mxu0 0.0
    %2624 = vmatprep.subr.mxu0 0.0
    %2625 = vmatpush1.xpose.msra.mxu0 0.0
    %2626 = vmatprep.subr.mxu0 0.0
    %2627 = vmatpush1.xpose.msra.mxu0 0.0
    %2628 = vmatprep.subr.mxu0 0.0
    %2629 = vmatpush1.xpose.msra.mxu0 0.0
    %2630 = vmatprep.subr.mxu0 0.0
    %2631 = vmatpush1.xpose.msra.mxu0 0.0
    %2632 = vmatprep.subr.mxu0 0.0
    %2633 = vmatpush1.xpose.msra.mxu0 0.0
    %2634 = vmatprep.subr.mxu0 0.0
    %2635 = vmatpush1.xpose.msra.mxu0 0.0
    %2636 = vmatprep.subr.mxu0 0.0
    %2637 = vmatpush1.xpose.msra.mxu0 0.0
    %2638 = vmatprep.subr.mxu0 0.0
    %2639 = vmatpush1.xpose.msra.mxu0 0.0
    %2640 = vmatprep.mubr.f32.mxu0 0.0
    %2641 = vmatmul.mubr.f32.gmra.mrb[0].mxu0 %v2570
    %v2642 = vpop.f32.mrb[0].mxu0
    %v2643 = vadd.f32 %v157, %v2642
    %v2644 = vpop.f32.mrb[0].mxu0
    %2645 = vdwg.mxu0
    %2646 = vrot.lane.b32.xlu0 %v2224, 120
    %v2647 = vpop.permute.xlu0 %2646
    %2648 = vrot.lane.b32.xlu0 %v2201, 120
    %v2649 = vpop.permute.xlu0 %2648
    %2650 = vrot.lane.b32.xlu0 %v2206, 120
    %v2651 = vpop.permute.xlu0 %2650
    %v2652 = vsel %vm307, %v2647, 0
    %v2654 = vsel %vm307, %v2649, 0
    %v2656 = vsel %vm307, %v2651, 0
    %2658 = vmatprep.subr.mxu0 0.0
    %2659 = vmatpush1.xpose.msra.mxu0 %v2654
    %2660 = vmatprep.subr.mxu0 0.0
    %2661 = vmatpush1.xpose.msra.mxu0 %v2656
    %2662 = vmatprep.subr.mxu0 0.0
    %2663 = vmatpush1.xpose.msra.mxu0 0.0
    %2664 = vmatprep.subr.mxu0 0.0
    %2665 = vmatpush1.xpose.msra.mxu0 0.0
    %2666 = vmatprep.subr.mxu0 0.0
    %2667 = vmatpush1.xpose.msra.mxu0 0.0
    %2668 = vmatprep.subr.mxu0 0.0
    %2669 = vmatpush1.xpose.msra.mxu0 0.0
    %2670 = vmatprep.subr.mxu0 0.0
    %2671 = vmatpush1.xpose.msra.mxu0 0.0
    %2672 = vmatprep.subr.mxu0 0.0
    %2673 = vmatpush1.xpose.msra.mxu0 0.0
    %2674 = vmatprep.subr.mxu0 0.0
    %2675 = vmatpush1.xpose.msra.mxu0 0.0
    %2676 = vmatprep.subr.mxu0 0.0
    %2677 = vmatpush1.xpose.msra.mxu0 0.0
    %2678 = vmatprep.subr.mxu0 0.0
    %2679 = vmatpush1.xpose.msra.mxu0 0.0
    %2680 = vmatprep.subr.mxu0 0.0
    %2681 = vmatpush1.xpose.msra.mxu0 0.0
    %2682 = vmatprep.subr.mxu0 0.0
    %2683 = vmatpush1.xpose.msra.mxu0 0.0
    %2684 = vmatprep.subr.mxu0 0.0
    %2685 = vmatpush1.xpose.msra.mxu0 0.0
    %2686 = vmatprep.subr.mxu0 0.0
    %2687 = vmatpush1.xpose.msra.mxu0 0.0
    %2688 = vmatprep.subr.mxu0 0.0
    %2689 = vmatpush1.xpose.msra.mxu0 0.0
    %2690 = vmatprep.subr.mxu0 0.0
    %2691 = vmatpush1.xpose.msra.mxu0 0.0
    %2692 = vmatprep.subr.mxu0 0.0
    %2693 = vmatpush1.xpose.msra.mxu0 0.0
    %2694 = vmatprep.subr.mxu0 0.0
    %2695 = vmatpush1.xpose.msra.mxu0 0.0
    %2696 = vmatprep.subr.mxu0 0.0
    %2697 = vmatpush1.xpose.msra.mxu0 0.0
    %2698 = vmatprep.subr.mxu0 0.0
    %2699 = vmatpush1.xpose.msra.mxu0 0.0
    %2700 = vmatprep.subr.mxu0 0.0
    %2701 = vmatpush1.xpose.msra.mxu0 0.0
    %2702 = vmatprep.subr.mxu0 0.0
    %2703 = vmatpush1.xpose.msra.mxu0 0.0
    %2704 = vmatprep.subr.mxu0 0.0
    %2705 = vmatpush1.xpose.msra.mxu0 0.0
    %2706 = vmatprep.subr.mxu0 0.0
    %2707 = vmatpush1.xpose.msra.mxu0 0.0
    %2708 = vmatprep.subr.mxu0 0.0
    %2709 = vmatpush1.xpose.msra.mxu0 0.0
    %2710 = vmatprep.subr.mxu0 0.0
    %2711 = vmatpush1.xpose.msra.mxu0 0.0
    %2712 = vmatprep.subr.mxu0 0.0
    %2713 = vmatpush1.xpose.msra.mxu0 0.0
    %2714 = vmatprep.subr.mxu0 0.0
    %2715 = vmatpush1.xpose.msra.mxu0 0.0
    %2716 = vmatprep.subr.mxu0 0.0
    %2717 = vmatpush1.xpose.msra.mxu0 0.0
    %2718 = vmatprep.subr.mxu0 0.0
    %2719 = vmatpush1.xpose.msra.mxu0 0.0
    %2720 = vmatprep.subr.mxu0 0.0
    %2721 = vmatpush1.xpose.msra.mxu0 0.0
    %2722 = vmatprep.mubr.f32.mxu0 0.0
    %2723 = vmatmul.mubr.f32.gmra.mrb[0].mxu0 %v2652
    %v2724 = vpop.f32.mrb[0].mxu0
    %v2725 = vadd.f32 %v158, %v2724
    %v2726 = vpop.f32.mrb[0].mxu0
    %2727 = vdwg.mxu0
    %v2728 = vsel %vm2383, %v2643, -inf
    %2729 = vmax.xlane.f32.xlu0 %v2728
    %v2730 = vpop.xlane.xlu0 %2729
    %v2731 = vsel %vm2383, %v2725, -inf
    %2732 = vmax.xlane.f32.xlu0 %v2731
    %v2733 = vpop.xlane.xlu0 %2732
    %v2734 = vsub.f32 %v2643, %v2730
    %v2735 = vsub.f32 %v2725, %v2733
    %v2736 = vmul.f32 %v2734, 1.442695
    %v2737 = vpow.pop %v2736
    %v2738 = vmul.f32 %v2735, 1.442695
    %v2739 = vpow.pop %v2738
    %v2740 = vsel %vm2383, %v2737, 0.0
    %2741 = vadd.xlane.f32.xlu0 %v2740
    %v2742 = vpop.xlane.xlu0 %2741
    %v2743 = vsel %vm2383, %v2739, 0.0
    %2744 = vadd.xlane.f32.xlu0 %v2743
    %v2745 = vpop.xlane.xlu0 %2744
    %v2746 = vrcp.pop %v2742
    %v2747 = vrcp.pop %v2745
    %v2748 = vmul.f32 %v2737, %v2746
    %v2749 = vmul.f32 %v2739, %v2747
    %2750 = vrot.lane.b32.xlu0 %v2191, 88
    %v2751 = vpop.permute.xlu0 %2750
    %2752 = vrot.lane.b32.xlu0 %v2196, 88
    %v2753 = vpop.permute.xlu0 %2752
    %v2757 = vsel %vm2383, %v2748, 0
    %2759 = vmatprep.subr.mxu0 0.0
    %2760 = vmatpush1.msra.mxu0 %v2751
    %2761 = vmatprep.subr.mxu0 0.0
    %2762 = vmatpush1.msra.mxu0 %v2753
    %2763 = vmatprep.subr.mxu0 0.0
    %2764 = vmatpush1.msra.mxu0 0.0
    %2765 = vmatprep.subr.mxu0 0.0
    %2766 = vmatpush1.msra.mxu0 0.0
    %2767 = vmatprep.subr.mxu0 0.0
    %2768 = vmatpush1.msra.mxu0 0.0
    %2769 = vmatprep.subr.mxu0 0.0
    %2770 = vmatpush1.msra.mxu0 0.0
    %2771 = vmatprep.subr.mxu0 0.0
    %2772 = vmatpush1.msra.mxu0 0.0
    %2773 = vmatprep.subr.mxu0 0.0
    %2774 = vmatpush1.msra.mxu0 0.0
    %2775 = vmatprep.subr.mxu0 0.0
    %2776 = vmatpush1.msra.mxu0 0.0
    %2777 = vmatprep.subr.mxu0 0.0
    %2778 = vmatpush1.msra.mxu0 0.0
    %2779 = vmatprep.subr.mxu0 0.0
    %2780 = vmatpush1.msra.mxu0 0.0
    %2781 = vmatprep.subr.mxu0 0.0
    %2782 = vmatpush1.msra.mxu0 0.0
    %2783 = vmatprep.subr.mxu0 0.0
    %2784 = vmatpush1.msra.mxu0 0.0
    %2785 = vmatprep.subr.mxu0 0.0
    %2786 = vmatpush1.msra.mxu0 0.0
    %2787 = vmatprep.subr.mxu0 0.0
    %2788 = vmatpush1.msra.mxu0 0.0
    %2789 = vmatprep.subr.mxu0 0.0
    %2790 = vmatpush1.msra.mxu0 0.0
    %2791 = vmatprep.subr.mxu0 0.0
    %2792 = vmatpush1.msra.mxu0 0.0
    %2793 = vmatprep.subr.mxu0 0.0
    %2794 = vmatpush1.msra.mxu0 0.0
    %2795 = vmatprep.subr.mxu0 0.0
    %2796 = vmatpush1.msra.mxu0 0.0
    %2797 = vmatprep.subr.mxu0 0.0
    %2798 = vmatpush1.msra.mxu0 0.0
    %2799 = vmatprep.subr.mxu0 0.0
    %2800 = vmatpush1.msra.mxu0 0.0
    %2801 = vmatprep.subr.mxu0 0.0
    %2802 = vmatpush1.msra.mxu0 0.0
    %2803 = vmatprep.subr.mxu0 0.0
    %2804 = vmatpush1.msra.mxu0 0.0
    %2805 = vmatprep.subr.mxu0 0.0
    %2806 = vmatpush1.msra.mxu0 0.0
    %2807 = vmatprep.subr.mxu0 0.0
    %2808 = vmatpush1.msra.mxu0 0.0
    %2809 = vmatprep.subr.mxu0 0.0
    %2810 = vmatpush1.msra.mxu0 0.0
    %2811 = vmatprep.subr.mxu0 0.0
    %2812 = vmatpush1.msra.mxu0 0.0
    %2813 = vmatprep.subr.mxu0 0.0
    %2814 = vmatpush1.msra.mxu0 0.0
    %2815 = vmatprep.subr.mxu0 0.0
    %2816 = vmatpush1.msra.mxu0 0.0
    %2817 = vmatprep.subr.mxu0 0.0
    %2818 = vmatpush1.msra.mxu0 0.0
    %2819 = vmatprep.subr.mxu0 0.0
    %2820 = vmatpush1.msra.mxu0 0.0
    %2821 = vmatprep.subr.mxu0 0.0
    %2822 = vmatpush1.msra.mxu0 0.0
    %2823 = vmatprep.mubr.f32.mxu0 0.0
    %2824 = vmatmul.mubr.f32.gmra.mrb[0].mxu0 %v2757
    %v2825 = vpop.f32.mrb[0].mxu0
    %v2826 = vadd.f32 0.0, %v2825
    %v2827 = vpop.f32.mrb[0].mxu0
    %2828 = vdwg.mxu0
    %2829 = vrot.lane.b32.xlu0 %v2201, 88
    %v2830 = vpop.permute.xlu0 %2829
    %2831 = vrot.lane.b32.xlu0 %v2206, 88
    %v2832 = vpop.permute.xlu0 %2831
    %v2836 = vsel %vm2383, %v2749, 0
    %2838 = vmatprep.subr.mxu0 0.0
    %2839 = vmatpush1.msra.mxu0 %v2830
    %2840 = vmatprep.subr.mxu0 0.0
    %2841 = vmatpush1.msra.mxu0 %v2832
    %2842 = vmatprep.subr.mxu0 0.0
    %2843 = vmatpush1.msra.mxu0 0.0
    %2844 = vmatprep.subr.mxu0 0.0
    %2845 = vmatpush1.msra.mxu0 0.0
    %2846 = vmatprep.subr.mxu0 0.0
    %2847 = vmatpush1.msra.mxu0 0.0
    %2848 = vmatprep.subr.mxu0 0.0
    %2849 = vmatpush1.msra.mxu0 0.0
    %2850 = vmatprep.subr.mxu0 0.0
    %2851 = vmatpush1.msra.mxu0 0.0
    %2852 = vmatprep.subr.mxu0 0.0
    %2853 = vmatpush1.msra.mxu0 0.0
    %2854 = vmatprep.subr.mxu0 0.0
    %2855 = vmatpush1.msra.mxu0 0.0
    %2856 = vmatprep.subr.mxu0 0.0
    %2857 = vmatpush1.msra.mxu0 0.0
    %2858 = vmatprep.subr.mxu0 0.0
    %2859 = vmatpush1.msra.mxu0 0.0
    %2860 = vmatprep.subr.mxu0 0.0
    %2861 = vmatpush1.msra.mxu0 0.0
    %2862 = vmatprep.subr.mxu0 0.0
    %2863 = vmatpush1.msra.mxu0 0.0
    %2864 = vmatprep.subr.mxu0 0.0
    %2865 = vmatpush1.msra.mxu0 0.0
    %2866 = vmatprep.subr.mxu0 0.0
    %2867 = vmatpush1.msra.mxu0 0.0
    %2868 = vmatprep.subr.mxu0 0.0
    %2869 = vmatpush1.msra.mxu0 0.0
    %2870 = vmatprep.subr.mxu0 0.0
    %2871 = vmatpush1.msra.mxu0 0.0
    %2872 = vmatprep.subr.mxu0 0.0
    %2873 = vmatpush1.msra.mxu0 0.0
    %2874 = vmatprep.subr.mxu0 0.0
    %2875 = vmatpush1.msra.mxu0 0.0
    %2876 = vmatprep.subr.mxu0 0.0
    %2877 = vmatpush1.msra.mxu0 0.0
    %2878 = vmatprep.subr.mxu0 0.0
    %2879 = vmatpush1.msra.mxu0 0.0
    %2880 = vmatprep.subr.mxu0 0.0
    %2881 = vmatpush1.msra.mxu0 0.0
    %2882 = vmatprep.subr.mxu0 0.0
    %2883 = vmatpush1.msra.mxu0 0.0
    %2884 = vmatprep.subr.mxu0 0.0
    %2885 = vmatpush1.msra.mxu0 0.0
    %2886 = vmatprep.subr.mxu0 0.0
    %2887 = vmatpush1.msra.mxu0 0.0
    %2888 = vmatprep.subr.mxu0 0.0
    %2889 = vmatpush1.msra.mxu0 0.0
    %2890 = vmatprep.subr.mxu0 0.0
    %2891 = vmatpush1.msra.mxu0 0.0
    %2892 = vmatprep.subr.mxu0 0.0
    %2893 = vmatpush1.msra.mxu0 0.0
    %2894 = vmatprep.subr.mxu0 0.0
    %2895 = vmatpush1.msra.mxu0 0.0
    %2896 = vmatprep.subr.mxu0 0.0
    %2897 = vmatpush1.msra.mxu0 0.0
    %2898 = vmatprep.subr.mxu0 0.0
    %2899 = vmatpush1.msra.mxu0 0.0
    %2900 = vmatprep.subr.mxu0 0.0
    %2901 = vmatpush1.msra.mxu0 0.0
    %2902 = vmatprep.mubr.f32.mxu0 0.0
    %2903 = vmatmul.mubr.f32.gmra.mrb[0].mxu0 %v2836
    %v2904 = vpop.f32.mrb[0].mxu0
    %v2905 = vadd.f32 0.0, %v2904
    %v2906 = vpop.f32.mrb[0].mxu0
    %2907 = vdwg.mxu0
    %v2909 = vsel %vm307, %v2826, 0
    %v2912 = vsel %vm307, %v2905, 0
    %2914 = vmatprep.subr.mxu0 0.0
    %2915 = vmatpush1.msra.mxu0 %v2219
    %2916 = vmatprep.subr.mxu0 0.0
    %2917 = vmatpush1.msra.mxu0 0.0
    %2918 = vmatprep.subr.mxu0 0.0
    %2919 = vmatpush1.msra.mxu0 0.0
    %2920 = vmatprep.subr.mxu0 0.0
    %2921 = vmatpush1.msra.mxu0 0.0
    %2922 = vmatprep.subr.mxu0 0.0
    %2923 = vmatpush1.msra.mxu0 0.0
    %2924 = vmatprep.subr.mxu0 0.0
    %2925 = vmatpush1.msra.mxu0 0.0
    %2926 = vmatprep.subr.mxu0 0.0
    %2927 = vmatpush1.msra.mxu0 0.0
    %2928 = vmatprep.subr.mxu0 0.0
    %2929 = vmatpush1.msra.mxu0 0.0
    %2930 = vmatprep.subr.mxu0 0.0
    %2931 = vmatpush1.msra.mxu0 0.0
    %2932 = vmatprep.subr.mxu0 0.0
    %2933 = vmatpush1.msra.mxu0 0.0
    %2934 = vmatprep.subr.mxu0 0.0
    %2935 = vmatpush1.msra.mxu0 0.0
    %2936 = vmatprep.subr.mxu0 0.0
    %2937 = vmatpush1.msra.mxu0 0.0
    %2938 = vmatprep.subr.mxu0 0.0
    %2939 = vmatpush1.msra.mxu0 0.0
    %2940 = vmatprep.subr.mxu0 0.0
    %2941 = vmatpush1.msra.mxu0 0.0
    %2942 = vmatprep.subr.mxu0 0.0
    %2943 = vmatpush1.msra.mxu0 0.0
    %2944 = vmatprep.subr.mxu0 0.0
    %2945 = vmatpush1.msra.mxu0 0.0
    %2946 = vmatprep.subr.mxu0 0.0
    %2947 = vmatpush1.msra.mxu0 0.0
    %2948 = vmatprep.subr.mxu0 0.0
    %2949 = vmatpush1.msra.mxu0 0.0
    %2950 = vmatprep.subr.mxu0 0.0
    %2951 = vmatpush1.msra.mxu0 0.0
    %2952 = vmatprep.subr.mxu0 0.0
    %2953 = vmatpush1.msra.mxu0 0.0
    %2954 = vmatprep.subr.mxu0 0.0
    %2955 = vmatpush1.msra.mxu0 0.0
    %2956 = vmatprep.subr.mxu0 0.0
    %2957 = vmatpush1.msra.mxu0 0.0
    %2958 = vmatprep.subr.mxu0 0.0
    %2959 = vmatpush1.msra.mxu0 0.0
    %2960 = vmatprep.subr.mxu0 0.0
    %2961 = vmatpush1.msra.mxu0 0.0
    %2962 = vmatprep.subr.mxu0 0.0
    %2963 = vmatpush1.msra.mxu0 0.0
    %2964 = vmatprep.subr.mxu0 0.0
    %2965 = vmatpush1.msra.mxu0 0.0
    %2966 = vmatprep.subr.mxu0 0.0
    %2967 = vmatpush1.msra.mxu0 0.0
    %2968 = vmatprep.subr.mxu0 0.0
    %2969 = vmatpush1.msra.mxu0 0.0
    %2970 = vmatprep.subr.mxu0 0.0
    %2971 = vmatpush1.msra.mxu0 0.0
    %2972 = vmatprep.subr.mxu0 0.0
    %2973 = vmatpush1.msra.mxu0 0.0
    %2974 = vmatprep.subr.mxu0 0.0
    %2975 = vmatpush1.msra.mxu0 0.0
    %2976 = vmatprep.subr.mxu0 0.0
    %2977 = vmatpush1.msra.mxu0 0.0
    %2978 = vmatprep.mubr.f32.mxu0 0.0
    %2979 = vmatmul.mubr.f32.gmra.mrb[0].mxu0 %v2909
    %v2980 = vpop.f32.mrb[0].mxu0
    %v2981 = vadd.f32 0.0, %v2980
    %v2982 = vpop.f32.mrb[0].mxu0
    %2983 = vmatprep.mubr.f32.mxu0 0.0
    %2984 = vmatmul.mubr.f32.gmra.mrb[0].mxu0 %v2912
    %v2985 = vpop.f32.mrb[0].mxu0
    %v2986 = vadd.f32 0.0, %v2985
    %v2987 = vpop.f32.mrb[0].mxu0
    %2988 = vdwg.mxu0
    %v2990 = vsel %vm307, %v2482, 0
    %v2993 = vsel %vm307, %v2561, 0
    %2995 = vmatprep.subr.mxu0 0.0
    %2996 = vmatpush1.msra.mxu0 %v2218
    %2997 = vmatprep.subr.mxu0 0.0
    %2998 = vmatpush1.msra.mxu0 0.0
    %2999 = vmatprep.subr.mxu0 0.0
    %3000 = vmatpush1.msra.mxu0 0.0
    %3001 = vmatprep.subr.mxu0 0.0
    %3002 = vmatpush1.msra.mxu0 0.0
    %3003 = vmatprep.subr.mxu0 0.0
    %3004 = vmatpush1.msra.mxu0 0.0
    %3005 = vmatprep.subr.mxu0 0.0
    %3006 = vmatpush1.msra.mxu0 0.0
    %3007 = vmatprep.subr.mxu0 0.0
    %3008 = vmatpush1.msra.mxu0 0.0
    %3009 = vmatprep.subr.mxu0 0.0
    %3010 = vmatpush1.msra.mxu0 0.0
    %3011 = vmatprep.subr.mxu0 0.0
    %3012 = vmatpush1.msra.mxu0 0.0
    %3013 = vmatprep.subr.mxu0 0.0
    %3014 = vmatpush1.msra.mxu0 0.0
    %3015 = vmatprep.subr.mxu0 0.0
    %3016 = vmatpush1.msra.mxu0 0.0
    %3017 = vmatprep.subr.mxu0 0.0
    %3018 = vmatpush1.msra.mxu0 0.0
    %3019 = vmatprep.subr.mxu0 0.0
    %3020 = vmatpush1.msra.mxu0 0.0
    %3021 = vmatprep.subr.mxu0 0.0
    %3022 = vmatpush1.msra.mxu0 0.0
    %3023 = vmatprep.subr.mxu0 0.0
    %3024 = vmatpush1.msra.mxu0 0.0
    %3025 = vmatprep.subr.mxu0 0.0
    %3026 = vmatpush1.msra.mxu0 0.0
    %3027 = vmatprep.subr.mxu0 0.0
    %3028 = vmatpush1.msra.mxu0 0.0
    %3029 = vmatprep.subr.mxu0 0.0
    %3030 = vmatpush1.msra.mxu0 0.0
    %3031 = vmatprep.subr.mxu0 0.0
    %3032 = vmatpush1.msra.mxu0 0.0
    %3033 = vmatprep.subr.mxu0 0.0
    %3034 = vmatpush1.msra.mxu0 0.0
    %3035 = vmatprep.subr.mxu0 0.0
    %3036 = vmatpush1.msra.mxu0 0.0
    %3037 = vmatprep.subr.mxu0 0.0
    %3038 = vmatpush1.msra.mxu0 0.0
    %3039 = vmatprep.subr.mxu0 0.0
    %3040 = vmatpush1.msra.mxu0 0.0
    %3041 = vmatprep.subr.mxu0 0.0
    %3042 = vmatpush1.msra.mxu0 0.0
    %3043 = vmatprep.subr.mxu0 0.0
    %3044 = vmatpush1.msra.mxu0 0.0
    %3045 = vmatprep.subr.mxu0 0.0
    %3046 = vmatpush1.msra.mxu0 0.0
    %3047 = vmatprep.subr.mxu0 0.0
    %3048 = vmatpush1.msra.mxu0 0.0
    %3049 = vmatprep.subr.mxu0 0.0
    %3050 = vmatpush1.msra.mxu0 0.0
    %3051 = vmatprep.subr.mxu0 0.0
    %3052 = vmatpush1.msra.mxu0 0.0
    %3053 = vmatprep.subr.mxu0 0.0
    %3054 = vmatpush1.msra.mxu0 0.0
    %3055 = vmatprep.subr.mxu0 0.0
    %3056 = vmatpush1.msra.mxu0 0.0
    %3057 = vmatprep.subr.mxu0 0.0
    %3058 = vmatpush1.msra.mxu0 0.0
    %3059 = vmatprep.mubr.f32.mxu0 0.0
    %3060 = vmatmul.mubr.f32.gmra.mrb[0].mxu0 %v2990
    %v3061 = vpop.f32.mrb[0].mxu0
    %v3062 = vadd.f32 %v2981, %v3061
    %v3063 = vpop.f32.mrb[0].mxu0
    %3064 = vmatprep.mubr.f32.mxu0 0.0
    %3065 = vmatmul.mubr.f32.gmra.mrb[0].mxu0 %v2993
    %v3066 = vpop.f32.mrb[0].mxu0
    %v3067 = vadd.f32 %v2986, %v3066
    %v3068 = vpop.f32.mrb[0].mxu0
    %3069 = vdwg.mxu0
    %3070 = vrot.lane.b32.xlu0 %v2223, 112
    %v3071 = vpop.permute.xlu0 %3070
    %3072 = vrot.lane.b32.xlu0 %v2191, 112
    %v3073 = vpop.permute.xlu0 %3072
    %3074 = vrot.lane.b32.xlu0 %v2196, 112
    %v3075 = vpop.permute.xlu0 %3074
    %v3076 = vsel %vm307, %v3071, 0
    %v3078 = vsel %vm307, %v3073, 0
    %v3080 = vsel %vm307, %v3075, 0
    %3082 = vmatprep.subr.mxu0 0.0
    %3083 = vmatpush1.xpose.msra.mxu0 %v3078
    %3084 = vmatprep.subr.mxu0 0.0
    %3085 = vmatpush1.xpose.msra.mxu0 %v3080
    %3086 = vmatprep.subr.mxu0 0.0
    %3087 = vmatpush1.xpose.msra.mxu0 0.0
    %3088 = vmatprep.subr.mxu0 0.0
    %3089 = vmatpush1.xpose.msra.mxu0 0.0
    %3090 = vmatprep.subr.mxu0 0.0
    %3091 = vmatpush1.xpose.msra.mxu0 0.0
    %3092 = vmatprep.subr.mxu0 0.0
    %3093 = vmatpush1.xpose.msra.mxu0 0.0
    %3094 = vmatprep.subr.mxu0 0.0
    %3095 = vmatpush1.xpose.msra.mxu0 0.0
    %3096 = vmatprep.subr.mxu0 0.0
    %3097 = vmatpush1.xpose.msra.mxu0 0.0
    %3098 = vmatprep.subr.mxu0 0.0
    %3099 = vmatpush1.xpose.msra.mxu0 0.0
    %3100 = vmatprep.subr.mxu0 0.0
    %3101 = vmatpush1.xpose.msra.mxu0 0.0
    %3102 = vmatprep.subr.mxu0 0.0
    %3103 = vmatpush1.xpose.msra.mxu0 0.0
    %3104 = vmatprep.subr.mxu0 0.0
    %3105 = vmatpush1.xpose.msra.mxu0 0.0
    %3106 = vmatprep.subr.mxu0 0.0
    %3107 = vmatpush1.xpose.msra.mxu0 0.0
    %3108 = vmatprep.subr.mxu0 0.0
    %3109 = vmatpush1.xpose.msra.mxu0 0.0
    %3110 = vmatprep.subr.mxu0 0.0
    %3111 = vmatpush1.xpose.msra.mxu0 0.0
    %3112 = vmatprep.subr.mxu0 0.0
    %3113 = vmatpush1.xpose.msra.mxu0 0.0
    %3114 = vmatprep.subr.mxu0 0.0
    %3115 = vmatpush1.xpose.msra.mxu0 0.0
    %3116 = vmatprep.subr.mxu0 0.0
    %3117 = vmatpush1.xpose.msra.mxu0 0.0
    %3118 = vmatprep.subr.mxu0 0.0
    %3119 = vmatpush1.xpose.msra.mxu0 0.0
    %3120 = vmatprep.subr.mxu0 0.0
    %3121 = vmatpush1.xpose.msra.mxu0 0.0
    %3122 = vmatprep.subr.mxu0 0.0
    %3123 = vmatpush1.xpose.msra.mxu0 0.0
    %3124 = vmatprep.subr.mxu0 0.0
    %3125 = vmatpush1.xpose.msra.mxu0 0.0
    %3126 = vmatprep.subr.mxu0 0.0
    %3127 = vmatpush1.xpose.msra.mxu0 0.0
    %3128 = vmatprep.subr.mxu0 0.0
    %3129 = vmatpush1.xpose.msra.mxu0 0.0
    %3130 = vmatprep.subr.mxu0 0.0
    %3131 = vmatpush1.xpose.msra.mxu0 0.0
    %3132 = vmatprep.subr.mxu0 0.0
    %3133 = vmatpush1.xpose.msra.mxu0 0.0
    %3134 = vmatprep.subr.mxu0 0.0
    %3135 = vmatpush1.xpose.msra.mxu0 0.0
    %3136 = vmatprep.subr.mxu0 0.0
    %3137 = vmatpush1.xpose.msra.mxu0 0.0
    %3138 = vmatprep.subr.mxu0 0.0
    %3139 = vmatpush1.xpose.msra.mxu0 0.0
    %3140 = vmatprep.subr.mxu0 0.0
    %3141 = vmatpush1.xpose.msra.mxu0 0.0
    %3142 = vmatprep.subr.mxu0 0.0
    %3143 = vmatpush1.xpose.msra.mxu0 0.0
    %3144 = vmatprep.subr.mxu0 0.0
    %3145 = vmatpush1.xpose.msra.mxu0 0.0
    %3146 = vmatprep.mubr.f32.mxu0 0.0
    %3147 = vmatmul.mubr.f32.gmra.mrb[0].mxu0 %v3076
    %v3148 = vpop.f32.mrb[0].mxu0
    %v3149 = vadd.f32 %v157, %v3148
    %v3150 = vpop.f32.mrb[0].mxu0
    %3151 = vdwg.mxu0
    %3152 = vrot.lane.b32.xlu0 %v2224, 112
    %v3153 = vpop.permute.xlu0 %3152
    %3154 = vrot.lane.b32.xlu0 %v2201, 112
    %v3155 = vpop.permute.xlu0 %3154
    %3156 = vrot.lane.b32.xlu0 %v2206, 112
    %v3157 = vpop.permute.xlu0 %3156
    %v3158 = vsel %vm307, %v3153, 0
    %v3160 = vsel %vm307, %v3155, 0
    %v3162 = vsel %vm307, %v3157, 0
    %3164 = vmatprep.subr.mxu0 0.0
    %3165 = vmatpush1.xpose.msra.mxu0 %v3160
    %3166 = vmatprep.subr.mxu0 0.0
    %3167 = vmatpush1.xpose.msra.mxu0 %v3162
    %3168 = vmatprep.subr.mxu0 0.0
    %3169 = vmatpush1.xpose.msra.mxu0 0.0
    %3170 = vmatprep.subr.mxu0 0.0
    %3171 = vmatpush1.xpose.msra.mxu0 0.0
    %3172 = vmatprep.subr.mxu0 0.0
    %3173 = vmatpush1.xpose.msra.mxu0 0.0
    %3174 = vmatprep.subr.mxu0 0.0
    %3175 = vmatpush1.xpose.msra.mxu0 0.0
    %3176 = vmatprep.subr.mxu0 0.0
    %3177 = vmatpush1.xpose.msra.mxu0 0.0
    %3178 = vmatprep.subr.mxu0 0.0
    %3179 = vmatpush1.xpose.msra.mxu0 0.0
    %3180 = vmatprep.subr.mxu0 0.0
    %3181 = vmatpush1.xpose.msra.mxu0 0.0
    %3182 = vmatprep.subr.mxu0 0.0
    %3183 = vmatpush1.xpose.msra.mxu0 0.0
    %3184 = vmatprep.subr.mxu0 0.0
    %3185 = vmatpush1.xpose.msra.mxu0 0.0
    %3186 = vmatprep.subr.mxu0 0.0
    %3187 = vmatpush1.xpose.msra.mxu0 0.0
    %3188 = vmatprep.subr.mxu0 0.0
    %3189 = vmatpush1.xpose.msra.mxu0 0.0
    %3190 = vmatprep.subr.mxu0 0.0
    %3191 = vmatpush1.xpose.msra.mxu0 0.0
    %3192 = vmatprep.subr.mxu0 0.0
    %3193 = vmatpush1.xpose.msra.mxu0 0.0
    %3194 = vmatprep.subr.mxu0 0.0
    %3195 = vmatpush1.xpose.msra.mxu0 0.0
    %3196 = vmatprep.subr.mxu0 0.0
    %3197 = vmatpush1.xpose.msra.mxu0 0.0
    %3198 = vmatprep.subr.mxu0 0.0
    %3199 = vmatpush1.xpose.msra.mxu0 0.0
    %3200 = vmatprep.subr.mxu0 0.0
    %3201 = vmatpush1.xpose.msra.mxu0 0.0
    %3202 = vmatprep.subr.mxu0 0.0
    %3203 = vmatpush1.xpose.msra.mxu0 0.0
    %3204 = vmatprep.subr.mxu0 0.0
    %3205 = vmatpush1.xpose.msra.mxu0 0.0
    %3206 = vmatprep.subr.mxu0 0.0
    %3207 = vmatpush1.xpose.msra.mxu0 0.0
    %3208 = vmatprep.subr.mxu0 0.0
    %3209 = vmatpush1.xpose.msra.mxu0 0.0
    %3210 = vmatprep.subr.mxu0 0.0
    %3211 = vmatpush1.xpose.msra.mxu0 0.0
    %3212 = vmatprep.subr.mxu0 0.0
    %3213 = vmatpush1.xpose.msra.mxu0 0.0
    %3214 = vmatprep.subr.mxu0 0.0
    %3215 = vmatpush1.xpose.msra.mxu0 0.0
    %3216 = vmatprep.subr.mxu0 0.0
    %3217 = vmatpush1.xpose.msra.mxu0 0.0
    %3218 = vmatprep.subr.mxu0 0.0
    %3219 = vmatpush1.xpose.msra.mxu0 0.0
    %3220 = vmatprep.subr.mxu0 0.0
    %3221 = vmatpush1.xpose.msra.mxu0 0.0
    %3222 = vmatprep.subr.mxu0 0.0
    %3223 = vmatpush1.xpose.msra.mxu0 0.0
    %3224 = vmatprep.subr.mxu0 0.0
    %3225 = vmatpush1.xpose.msra.mxu0 0.0
    %3226 = vmatprep.subr.mxu0 0.0
    %3227 = vmatpush1.xpose.msra.mxu0 0.0
    %3228 = vmatprep.mubr.f32.mxu0 0.0
    %3229 = vmatmul.mubr.f32.gmra.mrb[0].mxu0 %v3158
    %v3230 = vpop.f32.mrb[0].mxu0
    %v3231 = vadd.f32 %v158, %v3230
    %v3232 = vpop.f32.mrb[0].mxu0
    %3233 = vdwg.mxu0
    %v3234 = vsel %vm2383, %v3149, -inf
    %3235 = vmax.xlane.f32.xlu0 %v3234
    %v3236 = vpop.xlane.xlu0 %3235
    %v3237 = vsel %vm2383, %v3231, -inf
    %3238 = vmax.xlane.f32.xlu0 %v3237
    %v3239 = vpop.xlane.xlu0 %3238
    %v3240 = vsub.f32 %v3149, %v3236
    %v3241 = vsub.f32 %v3231, %v3239
    %v3242 = vmul.f32 %v3240, 1.442695
    %v3243 = vpow.pop %v3242
    %v3244 = vmul.f32 %v3241, 1.442695
    %v3245 = vpow.pop %v3244
    %v3246 = vsel %vm2383, %v3243, 0.0
    %3247 = vadd.xlane.f32.xlu0 %v3246
    %v3248 = vpop.xlane.xlu0 %3247
    %v3249 = vsel %vm2383, %v3245, 0.0
    %3250 = vadd.xlane.f32.xlu0 %v3249
    %v3251 = vpop.xlane.xlu0 %3250
    %v3252 = vrcp.pop %v3248
    %v3253 = vrcp.pop %v3251
    %v3254 = vmul.f32 %v3243, %v3252
    %v3255 = vmul.f32 %v3245, %v3253
    %3256 = vrot.lane.b32.xlu0 %v2191, 80
    %v3257 = vpop.permute.xlu0 %3256
    %3258 = vrot.lane.b32.xlu0 %v2196, 80
    %v3259 = vpop.permute.xlu0 %3258
    %v3263 = vsel %vm2383, %v3254, 0
    %3265 = vmatprep.subr.mxu0 0.0
    %3266 = vmatpush1.msra.mxu0 %v3257
    %3267 = vmatprep.subr.mxu0 0.0
    %3268 = vmatpush1.msra.mxu0 %v3259
    %3269 = vmatprep.subr.mxu0 0.0
    %3270 = vmatpush1.msra.mxu0 0.0
    %3271 = vmatprep.subr.mxu0 0.0
    %3272 = vmatpush1.msra.mxu0 0.0
    %3273 = vmatprep.subr.mxu0 0.0
    %3274 = vmatpush1.msra.mxu0 0.0
    %3275 = vmatprep.subr.mxu0 0.0
    %3276 = vmatpush1.msra.mxu0 0.0
    %3277 = vmatprep.subr.mxu0 0.0
    %3278 = vmatpush1.msra.mxu0 0.0
    %3279 = vmatprep.subr.mxu0 0.0
    %3280 = vmatpush1.msra.mxu0 0.0
    %3281 = vmatprep.subr.mxu0 0.0
    %3282 = vmatpush1.msra.mxu0 0.0
    %3283 = vmatprep.subr.mxu0 0.0
    %3284 = vmatpush1.msra.mxu0 0.0
    %3285 = vmatprep.subr.mxu0 0.0
    %3286 = vmatpush1.msra.mxu0 0.0
    %3287 = vmatprep.subr.mxu0 0.0
    %3288 = vmatpush1.msra.mxu0 0.0
    %3289 = vmatprep.subr.mxu0 0.0
    %3290 = vmatpush1.msra.mxu0 0.0
    %3291 = vmatprep.subr.mxu0 0.0
    %3292 = vmatpush1.msra.mxu0 0.0
    %3293 = vmatprep.subr.mxu0 0.0
    %3294 = vmatpush1.msra.mxu0 0.0
    %3295 = vmatprep.subr.mxu0 0.0
    %3296 = vmatpush1.msra.mxu0 0.0
    %3297 = vmatprep.subr.mxu0 0.0
    %3298 = vmatpush1.msra.mxu0 0.0
    %3299 = vmatprep.subr.mxu0 0.0
    %3300 = vmatpush1.msra.mxu0 0.0
    %3301 = vmatprep.subr.mxu0 0.0
    %3302 = vmatpush1.msra.mxu0 0.0
    %3303 = vmatprep.subr.mxu0 0.0
    %3304 = vmatpush1.msra.mxu0 0.0
    %3305 = vmatprep.subr.mxu0 0.0
    %3306 = vmatpush1.msra.mxu0 0.0
    %3307 = vmatprep.subr.mxu0 0.0
    %3308 = vmatpush1.msra.mxu0 0.0
    %3309 = vmatprep.subr.mxu0 0.0
    %3310 = vmatpush1.msra.mxu0 0.0
    %3311 = vmatprep.subr.mxu0 0.0
    %3312 = vmatpush1.msra.mxu0 0.0
    %3313 = vmatprep.subr.mxu0 0.0
    %3314 = vmatpush1.msra.mxu0 0.0
    %3315 = vmatprep.subr.mxu0 0.0
    %3316 = vmatpush1.msra.mxu0 0.0
    %3317 = vmatprep.subr.mxu0 0.0
    %3318 = vmatpush1.msra.mxu0 0.0
    %3319 = vmatprep.subr.mxu0 0.0
    %3320 = vmatpush1.msra.mxu0 0.0
    %3321 = vmatprep.subr.mxu0 0.0
    %3322 = vmatpush1.msra.mxu0 0.0
    %3323 = vmatprep.subr.mxu0 0.0
    %3324 = vmatpush1.msra.mxu0 0.0
    %3325 = vmatprep.subr.mxu0 0.0
    %3326 = vmatpush1.msra.mxu0 0.0
    %3327 = vmatprep.subr.mxu0 0.0
    %3328 = vmatpush1.msra.mxu0 0.0
    %3329 = vmatprep.mubr.f32.mxu0 0.0
    %3330 = vmatmul.mubr.f32.gmra.mrb[0].mxu0 %v3263
    %v3331 = vpop.f32.mrb[0].mxu0
    %v3332 = vadd.f32 0.0, %v3331
    %v3333 = vpop.f32.mrb[0].mxu0
    %3334 = vdwg.mxu0
    %3335 = vrot.lane.b32.xlu0 %v2201, 80
    %v3336 = vpop.permute.xlu0 %3335
    %3337 = vrot.lane.b32.xlu0 %v2206, 80
    %v3338 = vpop.permute.xlu0 %3337
    %v3342 = vsel %vm2383, %v3255, 0
    %3344 = vmatprep.subr.mxu0 0.0
    %3345 = vmatpush1.msra.mxu0 %v3336
    %3346 = vmatprep.subr.mxu0 0.0
    %3347 = vmatpush1.msra.mxu0 %v3338
    %3348 = vmatprep.subr.mxu0 0.0
    %3349 = vmatpush1.msra.mxu0 0.0
    %3350 = vmatprep.subr.mxu0 0.0
    %3351 = vmatpush1.msra.mxu0 0.0
    %3352 = vmatprep.subr.mxu0 0.0
    %3353 = vmatpush1.msra.mxu0 0.0
    %3354 = vmatprep.subr.mxu0 0.0
    %3355 = vmatpush1.msra.mxu0 0.0
    %3356 = vmatprep.subr.mxu0 0.0
    %3357 = vmatpush1.msra.mxu0 0.0
    %3358 = vmatprep.subr.mxu0 0.0
    %3359 = vmatpush1.msra.mxu0 0.0
    %3360 = vmatprep.subr.mxu0 0.0
    %3361 = vmatpush1.msra.mxu0 0.0
    %3362 = vmatprep.subr.mxu0 0.0
    %3363 = vmatpush1.msra.mxu0 0.0
    %3364 = vmatprep.subr.mxu0 0.0
    %3365 = vmatpush1.msra.mxu0 0.0
    %3366 = vmatprep.subr.mxu0 0.0
    %3367 = vmatpush1.msra.mxu0 0.0
    %3368 = vmatprep.subr.mxu0 0.0
    %3369 = vmatpush1.msra.mxu0 0.0
    %3370 = vmatprep.subr.mxu0 0.0
    %3371 = vmatpush1.msra.mxu0 0.0
    %3372 = vmatprep.subr.mxu0 0.0
    %3373 = vmatpush1.msra.mxu0 0.0
    %3374 = vmatprep.subr.mxu0 0.0
    %3375 = vmatpush1.msra.mxu0 0.0
    %3376 = vmatprep.subr.mxu0 0.0
    %3377 = vmatpush1.msra.mxu0 0.0
    %3378 = vmatprep.subr.mxu0 0.0
    %3379 = vmatpush1.msra.mxu0 0.0
    %3380 = vmatprep.subr.mxu0 0.0
    %3381 = vmatpush1.msra.mxu0 0.0
    %3382 = vmatprep.subr.mxu0 0.0
    %3383 = vmatpush1.msra.mxu0 0.0
    %3384 = vmatprep.subr.mxu0 0.0
    %3385 = vmatpush1.msra.mxu0 0.0
    %3386 = vmatprep.subr.mxu0 0.0
    %3387 = vmatpush1.msra.mxu0 0.0
    %3388 = vmatprep.subr.mxu0 0.0
    %3389 = vmatpush1.msra.mxu0 0.0
    %3390 = vmatprep.subr.mxu0 0.0
    %3391 = vmatpush1.msra.mxu0 0.0
    %3392 = vmatprep.subr.mxu0 0.0
    %3393 = vmatpush1.msra.mxu0 0.0
    %3394 = vmatprep.subr.mxu0 0.0
    %3395 = vmatpush1.msra.mxu0 0.0
    %3396 = vmatprep.subr.mxu0 0.0
    %3397 = vmatpush1.msra.mxu0 0.0
    %3398 = vmatprep.subr.mxu0 0.0
    %3399 = vmatpush1.msra.mxu0 0.0
    %3400 = vmatprep.subr.mxu0 0.0
    %3401 = vmatpush1.msra.mxu0 0.0
    %3402 = vmatprep.subr.mxu0 0.0
    %3403 = vmatpush1.msra.mxu0 0.0
    %3404 = vmatprep.subr.mxu0 0.0
    %3405 = vmatpush1.msra.mxu0 0.0
    %3406 = vmatprep.subr.mxu0 0.0
    %3407 = vmatpush1.msra.mxu0 0.0
    %3408 = vmatprep.mubr.f32.mxu0 0.0
    %3409 = vmatmul.mubr.f32.gmra.mrb[0].mxu0 %v3342
    %v3410 = vpop.f32.mrb[0].mxu0
    %v3411 = vadd.f32 0.0, %v3410
    %v3412 = vpop.f32.mrb[0].mxu0
    %3413 = vdwg.mxu0
    %v3415 = vsel %vm307, %v3332, 0
    %v3418 = vsel %vm307, %v3411, 0
    %3420 = vmatprep.subr.mxu0 0.0
    %3421 = vmatpush1.msra.mxu0 %v2220
    %3422 = vmatprep.subr.mxu0 0.0
    %3423 = vmatpush1.msra.mxu0 0.0
    %3424 = vmatprep.subr.mxu0 0.0
    %3425 = vmatpush1.msra.mxu0 0.0
    %3426 = vmatprep.subr.mxu0 0.0
    %3427 = vmatpush1.msra.mxu0 0.0
    %3428 = vmatprep.subr.mxu0 0.0
    %3429 = vmatpush1.msra.mxu0 0.0
    %3430 = vmatprep.subr.mxu0 0.0
    %3431 = vmatpush1.msra.mxu0 0.0
    %3432 = vmatprep.subr.mxu0 0.0
    %3433 = vmatpush1.msra.mxu0 0.0
    %3434 = vmatprep.subr.mxu0 0.0
    %3435 = vmatpush1.msra.mxu0 0.0
    %3436 = vmatprep.subr.mxu0 0.0
    %3437 = vmatpush1.msra.mxu0 0.0
    %3438 = vmatprep.subr.mxu0 0.0
    %3439 = vmatpush1.msra.mxu0 0.0
    %3440 = vmatprep.subr.mxu0 0.0
    %3441 = vmatpush1.msra.mxu0 0.0
    %3442 = vmatprep.subr.mxu0 0.0
    %3443 = vmatpush1.msra.mxu0 0.0
    %3444 = vmatprep.subr.mxu0 0.0
    %3445 = vmatpush1.msra.mxu0 0.0
    %3446 = vmatprep.subr.mxu0 0.0
    %3447 = vmatpush1.msra.mxu0 0.0
    %3448 = vmatprep.subr.mxu0 0.0
    %3449 = vmatpush1.msra.mxu0 0.0
    %3450 = vmatprep.subr.mxu0 0.0
    %3451 = vmatpush1.msra.mxu0 0.0
    %3452 = vmatprep.subr.mxu0 0.0
    %3453 = vmatpush1.msra.mxu0 0.0
    %3454 = vmatprep.subr.mxu0 0.0
    %3455 = vmatpush1.msra.mxu0 0.0
    %3456 = vmatprep.subr.mxu0 0.0
    %3457 = vmatpush1.msra.mxu0 0.0
    %3458 = vmatprep.subr.mxu0 0.0
    %3459 = vmatpush1.msra.mxu0 0.0
    %3460 = vmatprep.subr.mxu0 0.0
    %3461 = vmatpush1.msra.mxu0 0.0
    %3462 = vmatprep.subr.mxu0 0.0
    %3463 = vmatpush1.msra.mxu0 0.0
    %3464 = vmatprep.subr.mxu0 0.0
    %3465 = vmatpush1.msra.mxu0 0.0
    %3466 = vmatprep.subr.mxu0 0.0
    %3467 = vmatpush1.msra.mxu0 0.0
    %3468 = vmatprep.subr.mxu0 0.0
    %3469 = vmatpush1.msra.mxu0 0.0
    %3470 = vmatprep.subr.mxu0 0.0
    %3471 = vmatpush1.msra.mxu0 0.0
    %3472 = vmatprep.subr.mxu0 0.0
    %3473 = vmatpush1.msra.mxu0 0.0
    %3474 = vmatprep.subr.mxu0 0.0
    %3475 = vmatpush1.msra.mxu0 0.0
    %3476 = vmatprep.subr.mxu0 0.0
    %3477 = vmatpush1.msra.mxu0 0.0
    %3478 = vmatprep.subr.mxu0 0.0
    %3479 = vmatpush1.msra.mxu0 0.0
    %3480 = vmatprep.subr.mxu0 0.0
    %3481 = vmatpush1.msra.mxu0 0.0
    %3482 = vmatprep.subr.mxu0 0.0
    %3483 = vmatpush1.msra.mxu0 0.0
    %3484 = vmatprep.mubr.f32.mxu0 0.0
    %3485 = vmatmul.mubr.f32.gmra.mrb[0].mxu0 %v3415
    %v3486 = vpop.f32.mrb[0].mxu0
    %v3487 = vadd.f32 0.0, %v3486
    %v3488 = vpop.f32.mrb[0].mxu0
    %3489 = vmatprep.mubr.f32.mxu0 0.0
    %3490 = vmatmul.mubr.f32.gmra.mrb[0].mxu0 %v3418
    %v3491 = vpop.f32.mrb[0].mxu0
    %v3492 = vadd.f32 0.0, %v3491
    %v3493 = vpop.f32.mrb[0].mxu0
    %3494 = vdwg.mxu0
    %v3495 = vadd.f32 %v3062, %v3487
    %v3496 = vadd.f32 %v3067, %v3492
    %3497 = vrot.lane.b32.xlu0 %v2223, 104
    %v3498 = vpop.permute.xlu0 %3497
    %3499 = vrot.lane.b32.xlu0 %v2191, 104
    %v3500 = vpop.permute.xlu0 %3499
    %3501 = vrot.lane.b32.xlu0 %v2196, 104
    %v3502 = vpop.permute.xlu0 %3501
    %v3503 = vsel %vm307, %v3498, 0
    %v3505 = vsel %vm307, %v3500, 0
    %v3507 = vsel %vm307, %v3502, 0
    %3509 = vmatprep.subr.mxu0 0.0
    %3510 = vmatpush1.xpose.msra.mxu0 %v3505
    %3511 = vmatprep.subr.mxu0 0.0
    %3512 = vmatpush1.xpose.msra.mxu0 %v3507
    %3513 = vmatprep.subr.mxu0 0.0
    %3514 = vmatpush1.xpose.msra.mxu0 0.0
    %3515 = vmatprep.subr.mxu0 0.0
    %3516 = vmatpush1.xpose.msra.mxu0 0.0
    %3517 = vmatprep.subr.mxu0 0.0
    %3518 = vmatpush1.xpose.msra.mxu0 0.0
    %3519 = vmatprep.subr.mxu0 0.0
    %3520 = vmatpush1.xpose.msra.mxu0 0.0
    %3521 = vmatprep.subr.mxu0 0.0
    %3522 = vmatpush1.xpose.msra.mxu0 0.0
    %3523 = vmatprep.subr.mxu0 0.0
    %3524 = vmatpush1.xpose.msra.mxu0 0.0
    %3525 = vmatprep.subr.mxu0 0.0
    %3526 = vmatpush1.xpose.msra.mxu0 0.0
    %3527 = vmatprep.subr.mxu0 0.0
    %3528 = vmatpush1.xpose.msra.mxu0 0.0
    %3529 = vmatprep.subr.mxu0 0.0
    %3530 = vmatpush1.xpose.msra.mxu0 0.0
    %3531 = vmatprep.subr.mxu0 0.0
    %3532 = vmatpush1.xpose.msra.mxu0 0.0
    %3533 = vmatprep.subr.mxu0 0.0
    %3534 = vmatpush1.xpose.msra.mxu0 0.0
    %3535 = vmatprep.subr.mxu0 0.0
    %3536 = vmatpush1.xpose.msra.mxu0 0.0
    %3537 = vmatprep.subr.mxu0 0.0
    %3538 = vmatpush1.xpose.msra.mxu0 0.0
    %3539 = vmatprep.subr.mxu0 0.0
    %3540 = vmatpush1.xpose.msra.mxu0 0.0
    %3541 = vmatprep.subr.mxu0 0.0
    %3542 = vmatpush1.xpose.msra.mxu0 0.0
    %3543 = vmatprep.subr.mxu0 0.0
    %3544 = vmatpush1.xpose.msra.mxu0 0.0
    %3545 = vmatprep.subr.mxu0 0.0
    %3546 = vmatpush1.xpose.msra.mxu0 0.0
    %3547 = vmatprep.subr.mxu0 0.0
    %3548 = vmatpush1.xpose.msra.mxu0 0.0
    %3549 = vmatprep.subr.mxu0 0.0
    %3550 = vmatpush1.xpose.msra.mxu0 0.0
    %3551 = vmatprep.subr.mxu0 0.0
    %3552 = vmatpush1.xpose.msra.mxu0 0.0
    %3553 = vmatprep.subr.mxu0 0.0
    %3554 = vmatpush1.xpose.msra.mxu0 0.0
    %3555 = vmatprep.subr.mxu0 0.0
    %3556 = vmatpush1.xpose.msra.mxu0 0.0
    %3557 = vmatprep.subr.mxu0 0.0
    %3558 = vmatpush1.xpose.msra.mxu0 0.0
    %3559 = vmatprep.subr.mxu0 0.0
    %3560 = vmatpush1.xpose.msra.mxu0 0.0
    %3561 = vmatprep.subr.mxu0 0.0
    %3562 = vmatpush1.xpose.msra.mxu0 0.0
    %3563 = vmatprep.subr.mxu0 0.0
    %3564 = vmatpush1.xpose.msra.mxu0 0.0
    %3565 = vmatprep.subr.mxu0 0.0
    %3566 = vmatpush1.xpose.msra.mxu0 0.0
    %3567 = vmatprep.subr.mxu0 0.0
    %3568 = vmatpush1.xpose.msra.mxu0 0.0
    %3569 = vmatprep.subr.mxu0 0.0
    %3570 = vmatpush1.xpose.msra.mxu0 0.0
    %3571 = vmatprep.subr.mxu0 0.0
    %3572 = vmatpush1.xpose.msra.mxu0 0.0
    %3573 = vmatprep.mubr.f32.mxu0 0.0
    %3574 = vmatmul.mubr.f32.gmra.mrb[0].mxu0 %v3503
    %v3575 = vpop.f32.mrb[0].mxu0
    %v3576 = vadd.f32 %v157, %v3575
    %v3577 = vpop.f32.mrb[0].mxu0
    %3578 = vdwg.mxu0
    %3579 = vrot.lane.b32.xlu0 %v2224, 104
    %v3580 = vpop.permute.xlu0 %3579
    %3581 = vrot.lane.b32.xlu0 %v2201, 104
    %v3582 = vpop.permute.xlu0 %3581
    %3583 = vrot.lane.b32.xlu0 %v2206, 104
    %v3584 = vpop.permute.xlu0 %3583
    %v3585 = vsel %vm307, %v3580, 0
    %v3587 = vsel %vm307, %v3582, 0
    %v3589 = vsel %vm307, %v3584, 0
    %3591 = vmatprep.subr.mxu0 0.0
    %3592 = vmatpush1.xpose.msra.mxu0 %v3587
    %3593 = vmatprep.subr.mxu0 0.0
    %3594 = vmatpush1.xpose.msra.mxu0 %v3589
    %3595 = vmatprep.subr.mxu0 0.0
    %3596 = vmatpush1.xpose.msra.mxu0 0.0
    %3597 = vmatprep.subr.mxu0 0.0
    %3598 = vmatpush1.xpose.msra.mxu0 0.0
    %3599 = vmatprep.subr.mxu0 0.0
    %3600 = vmatpush1.xpose.msra.mxu0 0.0
    %3601 = vmatprep.subr.mxu0 0.0
    %3602 = vmatpush1.xpose.msra.mxu0 0.0
    %3603 = vmatprep.subr.mxu0 0.0
    %3604 = vmatpush1.xpose.msra.mxu0 0.0
    %3605 = vmatprep.subr.mxu0 0.0
    %3606 = vmatpush1.xpose.msra.mxu0 0.0
    %3607 = vmatprep.subr.mxu0 0.0
    %3608 = vmatpush1.xpose.msra.mxu0 0.0
    %3609 = vmatprep.subr.mxu0 0.0
    %3610 = vmatpush1.xpose.msra.mxu0 0.0
    %3611 = vmatprep.subr.mxu0 0.0
    %3612 = vmatpush1.xpose.msra.mxu0 0.0
    %3613 = vmatprep.subr.mxu0 0.0
    %3614 = vmatpush1.xpose.msra.mxu0 0.0
    %3615 = vmatprep.subr.mxu0 0.0
    %3616 = vmatpush1.xpose.msra.mxu0 0.0
    %3617 = vmatprep.subr.mxu0 0.0
    %3618 = vmatpush1.xpose.msra.mxu0 0.0
    %3619 = vmatprep.subr.mxu0 0.0
    %3620 = vmatpush1.xpose.msra.mxu0 0.0
    %3621 = vmatprep.subr.mxu0 0.0
    %3622 = vmatpush1.xpose.msra.mxu0 0.0
    %3623 = vmatprep.subr.mxu0 0.0
    %3624 = vmatpush1.xpose.msra.mxu0 0.0
    %3625 = vmatprep.subr.mxu0 0.0
    %3626 = vmatpush1.xpose.msra.mxu0 0.0
    %3627 = vmatprep.subr.mxu0 0.0
    %3628 = vmatpush1.xpose.msra.mxu0 0.0
    %3629 = vmatprep.subr.mxu0 0.0
    %3630 = vmatpush1.xpose.msra.mxu0 0.0
    %3631 = vmatprep.subr.mxu0 0.0
    %3632 = vmatpush1.xpose.msra.mxu0 0.0
    %3633 = vmatprep.subr.mxu0 0.0
    %3634 = vmatpush1.xpose.msra.mxu0 0.0
    %3635 = vmatprep.subr.mxu0 0.0
    %3636 = vmatpush1.xpose.msra.mxu0 0.0
    %3637 = vmatprep.subr.mxu0 0.0
    %3638 = vmatpush1.xpose.msra.mxu0 0.0
    %3639 = vmatprep.subr.mxu0 0.0
    %3640 = vmatpush1.xpose.msra.mxu0 0.0
    %3641 = vmatprep.subr.mxu0 0.0
    %3642 = vmatpush1.xpose.msra.mxu0 0.0
    %3643 = vmatprep.subr.mxu0 0.0
    %3644 = vmatpush1.xpose.msra.mxu0 0.0
    %3645 = vmatprep.subr.mxu0 0.0
    %3646 = vmatpush1.xpose.msra.mxu0 0.0
    %3647 = vmatprep.subr.mxu0 0.0
    %3648 = vmatpush1.xpose.msra.mxu0 0.0
    %3649 = vmatprep.subr.mxu0 0.0
    %3650 = vmatpush1.xpose.msra.mxu0 0.0
    %3651 = vmatprep.subr.mxu0 0.0
    %3652 = vmatpush1.xpose.msra.mxu0 0.0
    %3653 = vmatprep.subr.mxu0 0.0
    %3654 = vmatpush1.xpose.msra.mxu0 0.0
    %3655 = vmatprep.mubr.f32.mxu0 0.0
    %3656 = vmatmul.mubr.f32.gmra.mrb[0].mxu0 %v3585
    %v3657 = vpop.f32.mrb[0].mxu0
    %v3658 = vadd.f32 %v158, %v3657
    %v3659 = vpop.f32.mrb[0].mxu0
    %3660 = vdwg.mxu0
    %v3661 = vsel %vm2383, %v3576, -inf
    %3662 = vmax.xlane.f32.xlu0 %v3661
    %v3663 = vpop.xlane.xlu0 %3662
    %v3664 = vsel %vm2383, %v3658, -inf
    %3665 = vmax.xlane.f32.xlu0 %v3664
    %v3666 = vpop.xlane.xlu0 %3665
    %v3667 = vsub.f32 %v3576, %v3663
    %v3668 = vsub.f32 %v3658, %v3666
    %v3669 = vmul.f32 %v3667, 1.442695
    %v3670 = vpow.pop %v3669
    %v3671 = vmul.f32 %v3668, 1.442695
    %v3672 = vpow.pop %v3671
    %v3673 = vsel %vm2383, %v3670, 0.0
    %3674 = vadd.xlane.f32.xlu0 %v3673
    %v3675 = vpop.xlane.xlu0 %3674
    %v3676 = vsel %vm2383, %v3672, 0.0
    %3677 = vadd.xlane.f32.xlu0 %v3676
    %v3678 = vpop.xlane.xlu0 %3677
    %v3679 = vrcp.pop %v3675
    %v3680 = vrcp.pop %v3678
    %v3681 = vmul.f32 %v3670, %v3679
    %v3682 = vmul.f32 %v3672, %v3680
    %3683 = vrot.lane.b32.xlu0 %v2191, 72
    %v3684 = vpop.permute.xlu0 %3683
    %3685 = vrot.lane.b32.xlu0 %v2196, 72
    %v3686 = vpop.permute.xlu0 %3685
    %v3690 = vsel %vm2383, %v3681, 0
    %3692 = vmatprep.subr.mxu0 0.0
    %3693 = vmatpush1.msra.mxu0 %v3684
    %3694 = vmatprep.subr.mxu0 0.0
    %3695 = vmatpush1.msra.mxu0 %v3686
    %3696 = vmatprep.subr.mxu0 0.0
    %3697 = vmatpush1.msra.mxu0 0.0
    %3698 = vmatprep.subr.mxu0 0.0
    %3699 = vmatpush1.msra.mxu0 0.0
    %3700 = vmatprep.subr.mxu0 0.0
    %3701 = vmatpush1.msra.mxu0 0.0
    %3702 = vmatprep.subr.mxu0 0.0
    %3703 = vmatpush1.msra.mxu0 0.0
    %3704 = vmatprep.subr.mxu0 0.0
    %3705 = vmatpush1.msra.mxu0 0.0
    %3706 = vmatprep.subr.mxu0 0.0
    %3707 = vmatpush1.msra.mxu0 0.0
    %3708 = vmatprep.subr.mxu0 0.0
    %3709 = vmatpush1.msra.mxu0 0.0
    %3710 = vmatprep.subr.mxu0 0.0
    %3711 = vmatpush1.msra.mxu0 0.0
    %3712 = vmatprep.subr.mxu0 0.0
    %3713 = vmatpush1.msra.mxu0 0.0
    %3714 = vmatprep.subr.mxu0 0.0
    %3715 = vmatpush1.msra.mxu0 0.0
    %3716 = vmatprep.subr.mxu0 0.0
    %3717 = vmatpush1.msra.mxu0 0.0
    %3718 = vmatprep.subr.mxu0 0.0
    %3719 = vmatpush1.msra.mxu0 0.0
    %3720 = vmatprep.subr.mxu0 0.0
    %3721 = vmatpush1.msra.mxu0 0.0
    %3722 = vmatprep.subr.mxu0 0.0
    %3723 = vmatpush1.msra.mxu0 0.0
    %3724 = vmatprep.subr.mxu0 0.0
    %3725 = vmatpush1.msra.mxu0 0.0
    %3726 = vmatprep.subr.mxu0 0.0
    %3727 = vmatpush1.msra.mxu0 0.0
    %3728 = vmatprep.subr.mxu0 0.0
    %3729 = vmatpush1.msra.mxu0 0.0
    %3730 = vmatprep.subr.mxu0 0.0
    %3731 = vmatpush1.msra.mxu0 0.0
    %3732 = vmatprep.subr.mxu0 0.0
    %3733 = vmatpush1.msra.mxu0 0.0
    %3734 = vmatprep.subr.mxu0 0.0
    %3735 = vmatpush1.msra.mxu0 0.0
    %3736 = vmatprep.subr.mxu0 0.0
    %3737 = vmatpush1.msra.mxu0 0.0
    %3738 = vmatprep.subr.mxu0 0.0
    %3739 = vmatpush1.msra.mxu0 0.0
    %3740 = vmatprep.subr.mxu0 0.0
    %3741 = vmatpush1.msra.mxu0 0.0
    %3742 = vmatprep.subr.mxu0 0.0
    %3743 = vmatpush1.msra.mxu0 0.0
    %3744 = vmatprep.subr.mxu0 0.0
    %3745 = vmatpush1.msra.mxu0 0.0
    %3746 = vmatprep.subr.mxu0 0.0
    %3747 = vmatpush1.msra.mxu0 0.0
    %3748 = vmatprep.subr.mxu0 0.0
    %3749 = vmatpush1.msra.mxu0 0.0
    %3750 = vmatprep.subr.mxu0 0.0
    %3751 = vmatpush1.msra.mxu0 0.0
    %3752 = vmatprep.subr.mxu0 0.0
    %3753 = vmatpush1.msra.mxu0 0.0
    %3754 = vmatprep.subr.mxu0 0.0
    %3755 = vmatpush1.msra.mxu0 0.0
    %3756 = vmatprep.mubr.f32.mxu0 0.0
    %3757 = vmatmul.mubr.f32.gmra.mrb[0].mxu0 %v3690
    %v3758 = vpop.f32.mrb[0].mxu0
    %v3759 = vadd.f32 0.0, %v3758
    %v3760 = vpop.f32.mrb[0].mxu0
    %3761 = vdwg.mxu0
    %3762 = vrot.lane.b32.xlu0 %v2201, 72
    %v3763 = vpop.permute.xlu0 %3762
    %3764 = vrot.lane.b32.xlu0 %v2206, 72
    %v3765 = vpop.permute.xlu0 %3764
    %v3769 = vsel %vm2383, %v3682, 0
    %3771 = vmatprep.subr.mxu0 0.0
    %3772 = vmatpush1.msra.mxu0 %v3763
    %3773 = vmatprep.subr.mxu0 0.0
    %3774 = vmatpush1.msra.mxu0 %v3765
    %3775 = vmatprep.subr.mxu0 0.0
    %3776 = vmatpush1.msra.mxu0 0.0
    %3777 = vmatprep.subr.mxu0 0.0
    %3778 = vmatpush1.msra.mxu0 0.0
    %3779 = vmatprep.subr.mxu0 0.0
    %3780 = vmatpush1.msra.mxu0 0.0
    %3781 = vmatprep.subr.mxu0 0.0
    %3782 = vmatpush1.msra.mxu0 0.0
    %3783 = vmatprep.subr.mxu0 0.0
    %3784 = vmatpush1.msra.mxu0 0.0
    %3785 = vmatprep.subr.mxu0 0.0
    %3786 = vmatpush1.msra.mxu0 0.0
    %3787 = vmatprep.subr.mxu0 0.0
    %3788 = vmatpush1.msra.mxu0 0.0
    %3789 = vmatprep.subr.mxu0 0.0
    %3790 = vmatpush1.msra.mxu0 0.0
    %3791 = vmatprep.subr.mxu0 0.0
    %3792 = vmatpush1.msra.mxu0 0.0
    %3793 = vmatprep.subr.mxu0 0.0
    %3794 = vmatpush1.msra.mxu0 0.0
    %3795 = vmatprep.subr.mxu0 0.0
    %3796 = vmatpush1.msra.mxu0 0.0
    %3797 = vmatprep.subr.mxu0 0.0
    %3798 = vmatpush1.msra.mxu0 0.0
    %3799 = vmatprep.subr.mxu0 0.0
    %3800 = vmatpush1.msra.mxu0 0.0
    %3801 = vmatprep.subr.mxu0 0.0
    %3802 = vmatpush1.msra.mxu0 0.0
    %3803 = vmatprep.subr.mxu0 0.0
    %3804 = vmatpush1.msra.mxu0 0.0
    %3805 = vmatprep.subr.mxu0 0.0
    %3806 = vmatpush1.msra.mxu0 0.0
    %3807 = vmatprep.subr.mxu0 0.0
    %3808 = vmatpush1.msra.mxu0 0.0
    %3809 = vmatprep.subr.mxu0 0.0
    %3810 = vmatpush1.msra.mxu0 0.0
    %3811 = vmatprep.subr.mxu0 0.0
    %3812 = vmatpush1.msra.mxu0 0.0
    %3813 = vmatprep.subr.mxu0 0.0
    %3814 = vmatpush1.msra.mxu0 0.0
    %3815 = vmatprep.subr.mxu0 0.0
    %3816 = vmatpush1.msra.mxu0 0.0
    %3817 = vmatprep.subr.mxu0 0.0
    %3818 = vmatpush1.msra.mxu0 0.0
    %3819 = vmatprep.subr.mxu0 0.0
    %3820 = vmatpush1.msra.mxu0 0.0
    %3821 = vmatprep.subr.mxu0 0.0
    %3822 = vmatpush1.msra.mxu0 0.0
    %3823 = vmatprep.subr.mxu0 0.0
    %3824 = vmatpush1.msra.mxu0 0.0
    %3825 = vmatprep.subr.mxu0 0.0
    %3826 = vmatpush1.msra.mxu0 0.0
    %3827 = vmatprep.subr.mxu0 0.0
    %3828 = vmatpush1.msra.mxu0 0.0
    %3829 = vmatprep.subr.mxu0 0.0
    %3830 = vmatpush1.msra.mxu0 0.0
    %3831 = vmatprep.subr.mxu0 0.0
    %3832 = vmatpush1.msra.mxu0 0.0
    %3833 = vmatprep.subr.mxu0 0.0
    %3834 = vmatpush1.msra.mxu0 0.0
    %3835 = vmatprep.mubr.f32.mxu0 0.0
    %3836 = vmatmul.mubr.f32.gmra.mrb[0].mxu0 %v3769
    %v3837 = vpop.f32.mrb[0].mxu0
    %v3838 = vadd.f32 0.0, %v3837
    %v3839 = vpop.f32.mrb[0].mxu0
    %3840 = vdwg.mxu0
    %v3842 = vsel %vm307, %v3759, 0
    %v3845 = vsel %vm307, %v3838, 0
    %3847 = vmatprep.subr.mxu0 0.0
    %3848 = vmatpush1.msra.mxu0 %v2221
    %3849 = vmatprep.subr.mxu0 0.0
    %3850 = vmatpush1.msra.mxu0 0.0
    %3851 = vmatprep.subr.mxu0 0.0
    %3852 = vmatpush1.msra.mxu0 0.0
    %3853 = vmatprep.subr.mxu0 0.0
    %3854 = vmatpush1.msra.mxu0 0.0
    %3855 = vmatprep.subr.mxu0 0.0
    %3856 = vmatpush1.msra.mxu0 0.0
    %3857 = vmatprep.subr.mxu0 0.0
    %3858 = vmatpush1.msra.mxu0 0.0
    %3859 = vmatprep.subr.mxu0 0.0
    %3860 = vmatpush1.msra.mxu0 0.0
    %3861 = vmatprep.subr.mxu0 0.0
    %3862 = vmatpush1.msra.mxu0 0.0
    %3863 = vmatprep.subr.mxu0 0.0
    %3864 = vmatpush1.msra.mxu0 0.0
    %3865 = vmatprep.subr.mxu0 0.0
    %3866 = vmatpush1.msra.mxu0 0.0
    %3867 = vmatprep.subr.mxu0 0.0
    %3868 = vmatpush1.msra.mxu0 0.0
    %3869 = vmatprep.subr.mxu0 0.0
    %3870 = vmatpush1.msra.mxu0 0.0
    %3871 = vmatprep.subr.mxu0 0.0
    %3872 = vmatpush1.msra.mxu0 0.0
    %3873 = vmatprep.subr.mxu0 0.0
    %3874 = vmatpush1.msra.mxu0 0.0
    %3875 = vmatprep.subr.mxu0 0.0
    %3876 = vmatpush1.msra.mxu0 0.0
    %3877 = vmatprep.subr.mxu0 0.0
    %3878 = vmatpush1.msra.mxu0 0.0
    %3879 = vmatprep.subr.mxu0 0.0
    %3880 = vmatpush1.msra.mxu0 0.0
    %3881 = vmatprep.subr.mxu0 0.0
    %3882 = vmatpush1.msra.mxu0 0.0
    %3883 = vmatprep.subr.mxu0 0.0
    %3884 = vmatpush1.msra.mxu0 0.0
    %3885 = vmatprep.subr.mxu0 0.0
    %3886 = vmatpush1.msra.mxu0 0.0
    %3887 = vmatprep.subr.mxu0 0.0
    %3888 = vmatpush1.msra.mxu0 0.0
    %3889 = vmatprep.subr.mxu0 0.0
    %3890 = vmatpush1.msra.mxu0 0.0
    %3891 = vmatprep.subr.mxu0 0.0
    %3892 = vmatpush1.msra.mxu0 0.0
    %3893 = vmatprep.subr.mxu0 0.0
    %3894 = vmatpush1.msra.mxu0 0.0
    %3895 = vmatprep.subr.mxu0 0.0
    %3896 = vmatpush1.msra.mxu0 0.0
    %3897 = vmatprep.subr.mxu0 0.0
    %3898 = vmatpush1.msra.mxu0 0.0
    %3899 = vmatprep.subr.mxu0 0.0
    %3900 = vmatpush1.msra.mxu0 0.0
    %3901 = vmatprep.subr.mxu0 0.0
    %3902 = vmatpush1.msra.mxu0 0.0
    %3903 = vmatprep.subr.mxu0 0.0
    %3904 = vmatpush1.msra.mxu0 0.0
    %3905 = vmatprep.subr.mxu0 0.0
    %3906 = vmatpush1.msra.mxu0 0.0
    %3907 = vmatprep.subr.mxu0 0.0
    %3908 = vmatpush1.msra.mxu0 0.0
    %3909 = vmatprep.subr.mxu0 0.0
    %3910 = vmatpush1.msra.mxu0 0.0
    %3911 = vmatprep.mubr.f32.mxu0 0.0
    %3912 = vmatmul.mubr.f32.gmra.mrb[0].mxu0 %v3842
    %v3913 = vpop.f32.mrb[0].mxu0
    %v3914 = vadd.f32 0.0, %v3913
    %v3915 = vpop.f32.mrb[0].mxu0
    %3916 = vmatprep.mubr.f32.mxu0 0.0
    %3917 = vmatmul.mubr.f32.gmra.mrb[0].mxu0 %v3845
    %v3918 = vpop.f32.mrb[0].mxu0
    %v3919 = vadd.f32 0.0, %v3918
    %v3920 = vpop.f32.mrb[0].mxu0
    %3921 = vdwg.mxu0
    %v3922 = vadd.f32 %v3495, %v3914
    %v3923 = vadd.f32 %v3496, %v3919
    %v3924 = vlaneseq
    %v3925 = vshrl.u32 %v3924, 7
    %v3926 = vsub.s32 0, %v3925
    %v3927 = vrot.slane %v2222, %v3926
    %v3928 = vadd.f32 %v3922, %v3927
    %v3929 = vadd.f32 %v3923, %v3927
    %v3930 = vadd.f32 %v1959, %v3928
    %v3931 = vadd.f32 %v1960, %v3929
    %3932 = vrot.lane.b32.xlu0 %v2404, 96
    %v3933 = vpop.permute.xlu0 %3932
    %3934 = vrot.lane.b32.xlu0 %v2405, 96
    %v3935 = vpop.permute.xlu0 %3934
    %vm3938 = vcmask 917248
    %3939 = vst.msk [vmem:[%s13] sm:$0xff] %vm3938, %v3933
    %3940 = vst.msk [vmem:[%s13 + $0x8] sm:$0xff] %vm3938, %v3935
    %v3941 = vld [vmem:[%s4 + $0x4] sm:$0x1]
    %v3942 = vld [vmem:[%s4 + $0x5] sm:$0x1]
    %v3943 = vsel %vm161, %v3930, 0.0
    %3944 = vadd.xlane.f32.xlu0 %v3943
    %v3945 = vpop.xlane.xlu0 %3944
    %v3946 = vsel %vm161, %v3931, 0.0
    %3947 = vadd.xlane.f32.xlu0 %v3946
    %v3948 = vpop.xlane.xlu0 %3947
    %v3949 = vmul.f32 %v3945, %v168
    %v3950 = vmul.f32 %v3948, %v168
    %v3951 = vsub.f32 %v3930, %v3949
    %v3952 = vsub.f32 %v3931, %v3950
    %v3953 = vmul.f32 %v3951, %v3951
    %v3954 = vmul.f32 %v3952, %v3952
    %v3955 = vsel %vm161, %v3953, 0.0
    %3956 = vadd.xlane.f32.xlu0 %v3955
    %v3957 = vpop.xlane.xlu0 %3956
    %v3958 = vsel %vm161, %v3954, 0.0
    %3959 = vadd.xlane.f32.xlu0 %v3958
    %v3960 = vpop.xlane.xlu0 %3959
    %v3961 = vmul.f32 %v3957, %v168
    %v3962 = vmul.f32 %v3960, %v168
    %v3963 = vadd.f32 %v3961, 1e-05
    %v3964 = vadd.f32 %v3962, 1e-05
    %v3965 = vrsqrt.pop %v3963
    %v3966 = vrsqrt.pop %v3964
    %v3967 = vmul.f32 %v3951, %v3965
    %v3968 = vmul.f32 %v3952, %v3966
    %v3969 = vlaneseq
    %v3970 = vshrl.u32 %v3969, 7
    %v3971 = vsub.s32 0, %v3970
    %v3972 = vrot.slane %v3941, %v3971
    %v3973 = vmul.f32 %v3967, %v3972
    %v3974 = vmul.f32 %v3968, %v3972
    %v3975 = vlaneseq
    %v3976 = vshrl.u32 %v3975, 7
    %v3977 = vsub.s32 0, %v3976
    %v3978 = vrot.slane %v3942, %v3977
    %v3979 = vadd.f32 %v3973, %v3978
    %v3980 = vadd.f32 %v3974, %v3978
    %v3981 = vld [vmem:[#allocation12] sm:$0xff]
    %v3982 = vld [vmem:[#allocation12 + $0x8] sm:$0xff]
    %v3983 = vld [vmem:[#allocation12 + $0x10] sm:$0xff]
    %v3984 = vld [vmem:[#allocation12 + $0x18] sm:$0xff]
    %v3985 = vld [vmem:[%s10] sm:$0x1]
    %v3987 = vlaneseq
    %v3988 = vshrl.u32 %v3987, 7
    %v3989 = vsub.s32 0, %v3988
    %v3990 = vrot.slane %v3985, %v3989
    %v3993 = vsel %vm161, %v3979, 0
    %v3996 = vsel %vm161, %v3980, 0
    %3998 = vmatprep.subr.mxu0 0.0
    %3999 = vmatpush1.msra.mxu0 %v3981
    %4000 = vmatprep.subr.mxu0 0.0
    %4001 = vmatpush1.msra.mxu0 %v3982
    %4002 = vmatprep.subr.mxu0 0.0
    %4003 = vmatpush1.msra.mxu0 %v3983
    %4004 = vmatprep.subr.mxu0 0.0
    %4005 = vmatpush1.msra.mxu0 %v3984
    %4006 = vmatprep.subr.mxu0 0.0
    %4007 = vmatpush1.msra.mxu0 0.0
    %4008 = vmatprep.subr.mxu0 0.0
    %4009 = vmatpush1.msra.mxu0 0.0
    %4010 = vmatprep.subr.mxu0 0.0
    %4011 = vmatpush1.msra.mxu0 0.0
    %4012 = vmatprep.subr.mxu0 0.0
    %4013 = vmatpush1.msra.mxu0 0.0
    %4014 = vmatprep.subr.mxu0 0.0
    %4015 = vmatpush1.msra.mxu0 0.0
    %4016 = vmatprep.subr.mxu0 0.0
    %4017 = vmatpush1.msra.mxu0 0.0
    %4018 = vmatprep.subr.mxu0 0.0
    %4019 = vmatpush1.msra.mxu0 0.0
    %4020 = vmatprep.subr.mxu0 0.0
    %4021 = vmatpush1.msra.mxu0 0.0
    %4022 = vmatprep.subr.mxu0 0.0
    %4023 = vmatpush1.msra.mxu0 0.0
    %4024 = vmatprep.subr.mxu0 0.0
    %4025 = vmatpush1.msra.mxu0 0.0
    %4026 = vmatprep.subr.mxu0 0.0
    %4027 = vmatpush1.msra.mxu0 0.0
    %4028 = vmatprep.subr.mxu0 0.0
    %4029 = vmatpush1.msra.mxu0 0.0
    %4030 = vmatprep.subr.mxu0 0.0
    %4031 = vmatpush1.msra.mxu0 0.0
    %4032 = vmatprep.subr.mxu0 0.0
    %4033 = vmatpush1.msra.mxu0 0.0
    %4034 = vmatprep.subr.mxu0 0.0
    %4035 = vmatpush1.msra.mxu0 0.0
    %4036 = vmatprep.subr.mxu0 0.0
    %4037 = vmatpush1.msra.mxu0 0.0
    %4038 = vmatprep.subr.mxu0 0.0
    %4039 = vmatpush1.msra.mxu0 0.0
    %4040 = vmatprep.subr.mxu0 0.0
    %4041 = vmatpush1.msra.mxu0 0.0
    %4042 = vmatprep.subr.mxu0 0.0
    %4043 = vmatpush1.msra.mxu0 0.0
    %4044 = vmatprep.subr.mxu0 0.0
    %4045 = vmatpush1.msra.mxu0 0.0
    %4046 = vmatprep.subr.mxu0 0.0
    %4047 = vmatpush1.msra.mxu0 0.0
    %4048 = vmatprep.subr.mxu0 0.0
    %4049 = vmatpush1.msra.mxu0 0.0
    %4050 = vmatprep.subr.mxu0 0.0
    %4051 = vmatpush1.msra.mxu0 0.0
    %4052 = vmatprep.subr.mxu0 0.0
    %4053 = vmatpush1.msra.mxu0 0.0
    %4054 = vmatprep.subr.mxu0 0.0
    %4055 = vmatpush1.msra.mxu0 0.0
    %4056 = vmatprep.subr.mxu0 0.0
    %4057 = vmatpush1.msra.mxu0 0.0
    %4058 = vmatprep.subr.mxu0 0.0
    %4059 = vmatpush1.msra.mxu0 0.0
    %4060 = vmatprep.subr.mxu0 0.0
    %4061 = vmatpush1.msra.mxu0 0.0
    %4062 = vmatprep.mubr.f32.mxu0 0.0
    %4063 = vmatmul.mubr.f32.gmra.mrb[0].mxu0 %v3993
    %v4064 = vpop.f32.mrb[0].mxu0
    %v4065 = vadd.f32 %v3990, %v4064
    %v4066 = vpop.f32.mrb[0].mxu0
    %4067 = vmatprep.mubr.f32.mxu0 0.0
    %4068 = vmatmul.mubr.f32.gmra.mrb[0].mxu0 %v3996
    %v4069 = vpop.f32.mrb[0].mxu0
    %v4070 = vadd.f32 %v3990, %v4069
    %v4071 = vpop.f32.mrb[0].mxu0
    %4072 = vdwg.mxu0
    %v4073 = vmax.f32 %v4065, 0.0
    %v4074 = vmax.f32 %v4070, 0.0
    %v4075 = vld [vmem:[%s11] sm:$0xff]
    %v4076 = vld [vmem:[%s11 + $0x8] sm:$0xff]
    %v4077 = vld [vmem:[%s11 + $0x10] sm:$0xff]
    %v4078 = vld [vmem:[%s11 + $0x18] sm:$0xff]
    %v4079 = vld [vmem:[%s11 + $0x20] sm:$0xff]
    %v4080 = vld [vmem:[%s11 + $0x28] sm:$0xff]
    %v4081 = vld [vmem:[%s11 + $0x30] sm:$0xff]
    %v4082 = vld [vmem:[%s11 + $0x38] sm:$0xff]
    %v4083 = vld [vmem:[%s12] sm:$0x1]
    %v4085 = vlaneseq
    %v4086 = vshrl.u32 %v4085, 7
    %v4087 = vsub.s32 0, %v4086
    %v4088 = vrot.slane %v4083, %v4087
    %vm4090 = vcmask 523264
    %v4092 = vsel %vm4090, %v4073, 0
    %v4095 = vsel %vm4090, %v4074, 0
    %4097 = vmatprep.subr.mxu0 0.0
    %4098 = vmatpush1.msra.mxu0 %v4075
    %4099 = vmatprep.subr.mxu0 0.0
    %4100 = vmatpush1.msra.mxu0 %v4076
    %4101 = vmatprep.subr.mxu0 0.0
    %4102 = vmatpush1.msra.mxu0 %v4077
    %4103 = vmatprep.subr.mxu0 0.0
    %4104 = vmatpush1.msra.mxu0 %v4078
    %4105 = vmatprep.subr.mxu0 0.0
    %4106 = vmatpush1.msra.mxu0 %v4079
    %4107 = vmatprep.subr.mxu0 0.0
    %4108 = vmatpush1.msra.mxu0 %v4080
    %4109 = vmatprep.subr.mxu0 0.0
    %4110 = vmatpush1.msra.mxu0 %v4081
    %4111 = vmatprep.subr.mxu0 0.0
    %4112 = vmatpush1.msra.mxu0 %v4082
    %4113 = vmatprep.subr.mxu0 0.0
    %4114 = vmatpush1.msra.mxu0 0.0
    %4115 = vmatprep.subr.mxu0 0.0
    %4116 = vmatpush1.msra.mxu0 0.0
    %4117 = vmatprep.subr.mxu0 0.0
    %4118 = vmatpush1.msra.mxu0 0.0
    %4119 = vmatprep.subr.mxu0 0.0
    %4120 = vmatpush1.msra.mxu0 0.0
    %4121 = vmatprep.subr.mxu0 0.0
    %4122 = vmatpush1.msra.mxu0 0.0
    %4123 = vmatprep.subr.mxu0 0.0
    %4124 = vmatpush1.msra.mxu0 0.0
    %4125 = vmatprep.subr.mxu0 0.0
    %4126 = vmatpush1.msra.mxu0 0.0
    %4127 = vmatprep.subr.mxu0 0.0
    %4128 = vmatpush1.msra.mxu0 0.0
    %4129 = vmatprep.subr.mxu0 0.0
    %4130 = vmatpush1.msra.mxu0 0.0
    %4131 = vmatprep.subr.mxu0 0.0
    %4132 = vmatpush1.msra.mxu0 0.0
    %4133 = vmatprep.subr.mxu0 0.0
    %4134 = vmatpush1.msra.mxu0 0.0
    %4135 = vmatprep.subr.mxu0 0.0
    %4136 = vmatpush1.msra.mxu0 0.0
    %4137 = vmatprep.subr.mxu0 0.0
    %4138 = vmatpush1.msra.mxu0 0.0
    %4139 = vmatprep.subr.mxu0 0.0
    %4140 = vmatpush1.msra.mxu0 0.0
    %4141 = vmatprep.subr.mxu0 0.0
    %4142 = vmatpush1.msra.mxu0 0.0
    %4143 = vmatprep.subr.mxu0 0.0
    %4144 = vmatpush1.msra.mxu0 0.0
    %4145 = vmatprep.subr.mxu0 0.0
    %4146 = vmatpush1.msra.mxu0 0.0
    %4147 = vmatprep.subr.mxu0 0.0
    %4148 = vmatpush1.msra.mxu0 0.0
    %4149 = vmatprep.subr.mxu0 0.0
    %4150 = vmatpush1.msra.mxu0 0.0
    %4151 = vmatprep.subr.mxu0 0.0
    %4152 = vmatpush1.msra.mxu0 0.0
    %4153 = vmatprep.subr.mxu0 0.0
    %4154 = vmatpush1.msra.mxu0 0.0
    %4155 = vmatprep.subr.mxu0 0.0
    %4156 = vmatpush1.msra.mxu0 0.0
    %4157 = vmatprep.subr.mxu0 0.0
    %4158 = vmatpush1.msra.mxu0 0.0
    %4159 = vmatprep.subr.mxu0 0.0
    %4160 = vmatpush1.msra.mxu0 0.0
    %4161 = vmatprep.mubr.f32.mxu0 0.0
    %4162 = vmatmul.mubr.f32.gmra.mrb[0].mxu0 %v4092
    %v4163 = vpop.f32.mrb[0].mxu0
    %v4164 = vadd.f32 %v4088, %v4163
    %v4165 = vpop.f32.mrb[0].mxu0
    %4166 = vmatprep.mubr.f32.mxu0 0.0
    %4167 = vmatmul.mubr.f32.gmra.mrb[0].mxu0 %v4095
    %v4168 = vpop.f32.mrb[0].mxu0
    %v4169 = vadd.f32 %v4088, %v4168
    %v4170 = vpop.f32.mrb[0].mxu0
    %4171 = vdwg.mxu0
    %v4172 = vadd.f32 %v3930, %v4164
    %v4173 = vadd.f32 %v3931, %v4169
    %4174 = vst.msk [vmem:[%s13] sm:$0xff] %vm161, %v4172
    %4175 = vst.msk [vmem:[%s13 + $0x8] sm:$0xff] %vm161, %v4173
    // Predicated region
    $region82: #{decoder_layer.1} parent=1 // pred_check
      _
    $region83: #{decoder_layer.1} parent=1 // pred_check_branch
      %4177 = sbr.rel (0) target = $region85
    $region84: #{decoder_layer.1} parent=1 // pred_region
      _
    $region85: #{decoder_layer.1} parent=1 // pred_fallthru
      _
    // Predicated region
    $region86: #{decoder_layer.1} parent=1 // pred_check
      _
    $region87: #{decoder_layer.1} parent=1 // pred_check_branch
      %4179 = sbr.rel (0) target = $region89
    $region88: #{decoder_layer.1} parent=1 // pred_region
      _
    $region89: #{decoder_layer.1} parent=1 // pred_fallthru
      _
    %4180 = vsyncpa [#allocation3], 1
    %4181 = vsyncpa [#allocation5], 1
    %4182 = vsyncpa [#allocation8], 1
    %4183 = vsyncpa [#allocation11], 1

</llo_original>
